<compile_context>
chip_gen: v6e
topology: v6e:2x2x1
jax: 0.10.0
libtpu: 0.0.40
codegen_flags: <defaults>
</compile_context>

<pallas_src>
import jax
import jax.numpy as jnp
from jax.experimental import pallas as pl
from jax.experimental.pallas import tpu as pltpu

EPS = 1e-5
NEG_SLOPE = 0.2

LATENT = 100
LATENT_PAD = 128            # 100 -> 128: clean MXU K-tile, no masked loads
OUT = 28 * 28 * 1           # 784
OUT_PAD = 896               # 784 -> 7*128: lane-dense output stores
DIMS = [(LATENT, 256), (256, 512), (512, 1024), (1024, OUT)]


def _bn_leaky(x, gamma, beta):
    """Training-mode BatchNorm1d (biased var, eps=1e-5) + LeakyReLU(0.2).

    Fused scale/shift form: 2 VPU ops per element instead of 4.
    """
    mean = jnp.mean(x, axis=0, keepdims=True)
    var = jnp.mean((x - mean) * (x - mean), axis=0, keepdims=True)
    scale = gamma * jax.lax.rsqrt(var + EPS)        # (1, N) per-feature
    shift = beta - mean * scale                     # (1, N) per-feature
    y = x * scale + shift
    return jnp.where(y > 0, y, NEG_SLOPE * y)


def generator_kernel(
    x_ref,
    w1_ref, g1_ref, be1_ref,
    w2_ref, g2_ref, be2_ref,
    w3_ref, g3_ref, be3_ref,
    w4_ref, b4_ref,
    out_ref,
):
    # x and all weights arrive as bfloat16; everything else is float32.
    x = x_ref[...]

    # fc1 (bias folded away by train-mode BN) -> bn1 -> LeakyReLU
    h = jnp.dot(x, w1_ref[...], preferred_element_type=jnp.float32)
    h = _bn_leaky(h, g1_ref[...], be1_ref[...])

    # fc2 -> bn2 -> LeakyReLU
    h = jnp.dot(h.astype(jnp.bfloat16), w2_ref[...],
                preferred_element_type=jnp.float32)
    h = _bn_leaky(h, g2_ref[...], be2_ref[...])

    # fc3 -> bn3 -> LeakyReLU
    h = jnp.dot(h.astype(jnp.bfloat16), w3_ref[...],
                preferred_element_type=jnp.float32)
    h = _bn_leaky(h, g3_ref[...], be3_ref[...])

    # fc4 -> tanh (EUP)
    h = jnp.dot(h.astype(jnp.bfloat16), w4_ref[...],
                preferred_element_type=jnp.float32) + b4_ref[...]
    out_ref[...] = jnp.tanh(h)


def prepare_kernel_params(params):
    """One-time pad + bf16 cast of the f32 module parameters for the kernel."""
    kp = {}
    # w1: zero-pad latent rows 100 -> 128 (zero rows contribute nothing).
    w1 = jnp.zeros((LATENT_PAD, DIMS[0][1]), jnp.float32).at[:LATENT].set(params["w1"])
    kp["w1"] = w1.astype(jnp.bfloat16)
    kp["w2"] = params["w2"].astype(jnp.bfloat16)
    kp["w3"] = params["w3"].astype(jnp.bfloat16)
    # w4/b4: zero-pad output columns 784 -> 896 (padded cols -> tanh(0)=0, sliced off).
    w4 = jnp.zeros((DIMS[3][0], OUT_PAD), jnp.float32).at[:, :OUT].set(params["w4"])
    kp["w4"] = w4.astype(jnp.bfloat16)
    kp["b4"] = jnp.zeros((1, OUT_PAD), jnp.float32).at[:, :OUT].set(params["b4"])
    # b1/b2/b3 are intentionally NOT shipped: they cancel under train-mode BN.
    for i in (1, 2, 3):
        kp[f"g{i}"] = params[f"g{i}"]
        kp[f"be{i}"] = params[f"be{i}"]
    return kp


def generator_forward(x, kernel_params):
    """x: (B, 100) float32 -> (B, 784) float32."""
    B = x.shape[0]
    kp = kernel_params

    # Pad latent 100 -> 128 and cast to the MXU-native bf16 input dtype.
    xp = jnp.zeros((B, LATENT_PAD), jnp.float32).at[:, :LATENT].set(x)
    xp = xp.astype(jnp.bfloat16)

    args = (
        xp,
        kp["w1"], kp["g1"], kp["be1"],
        kp["w2"], kp["g2"], kp["be2"],
        kp["w3"], kp["g3"], kp["be3"],
        kp["w4"], kp["b4"],
    )
    vmem_spec = pl.BlockSpec(memory_space=pltpu.MemorySpace.VMEM)

    # Advisory cost hint for XLA's scheduler around the custom call.
    mxu_elems = (LATENT_PAD * 256 + 256 * 512 + 512 * 1024 + 1024 * OUT_PAD)
    weight_bytes = mxu_elems * 2                       # bf16 weights
    smallvec_bytes = (OUT_PAD + 2 * (256 + 512 + 1024)) * 4  # b4 + gamma + beta (f32)
    io_bytes = B * LATENT_PAD * 2 + B * OUT_PAD * 4
    cost = pl.CostEstimate(
        flops=2 * B * mxu_elems,
        transcendentals=B * OUT_PAD + (256 + 512 + 1024),
        bytes_accessed=weight_bytes + smallvec_bytes + io_bytes,
    )

    out = pl.pallas_call(
        generator_kernel,
        out_shape=jax.ShapeDtypeStruct((B, OUT_PAD), jnp.float32),
        in_specs=[vmem_spec] * len(args),
        out_specs=vmem_spec,
        compiler_params=pltpu.CompilerParams(vmem_limit_bytes=24 << 20),
        cost_estimate=cost,
    )(*args)
    return out[:, :OUT]


def init_params(key):
    """Deterministic f32 init matching the PyTorch module's shapes.

    Linear: uniform(-1/sqrt(fan_in), 1/sqrt(fan_in)) like torch defaults.
    BatchNorm: gamma=1, beta=0.
    Weights stored as (in_features, out_features); bias/gamma/beta as (1, N).
    """
    params = {}
    for i, (fan_in, fan_out) in enumerate(DIMS, start=1):
        key, kw, kb = jax.random.split(key, 3)
        bound = 1.0 / (fan_in ** 0.5)
        params[f"w{i}"] = jax.random.uniform(
            kw, (fan_in, fan_out), jnp.float32, minval=-bound, maxval=bound)
        params[f"b{i}"] = jax.random.uniform(
            kb, (1, fan_out), jnp.float32, minval=-bound, maxval=bound)
        if i <= 3:  # bn1, bn2, bn3
            params[f"g{i}"] = jnp.ones((1, fan_out), jnp.float32)
            params[f"be{i}"] = jnp.zeros((1, fan_out), jnp.float32)
    return params


def reference_forward_f32(x, params):
    """Pure-f32 reference matching the original PyTorch module semantics
    (including the fc biases, which train-mode BN cancels mathematically)."""
    h = x
    for i in range(1, 4):
        h = h @ params[f"w{i}"] + params[f"b{i}"]
        mean = jnp.mean(h, axis=0, keepdims=True)
        var = jnp.mean((h - mean) ** 2, axis=0, keepdims=True)
        h = (h - mean) * jax.lax.rsqrt(var + EPS) * params[f"g{i}"] + params[f"be{i}"]
        h = jnp.where(h > 0, h, NEG_SLOPE * h)
    h = h @ params["w4"] + params["b4"]
    return jnp.tanh(h)


def reference_forward_mixed(x, kp):
    """Pure-JAX mirror of the kernel's bf16-input / f32-accumulate math."""
    B = x.shape[0]
    h = jnp.zeros((B, LATENT_PAD), jnp.float32).at[:, :LATENT].set(x)
    h = h.astype(jnp.bfloat16)
    for i in range(1, 4):
        h = jnp.dot(h, kp[f"w{i}"], preferred_element_type=jnp.float32)
        mean = jnp.mean(h, axis=0, keepdims=True)
        var = jnp.mean((h - mean) ** 2, axis=0, keepdims=True)
        scale = kp[f"g{i}"] * jax.lax.rsqrt(var + EPS)
        shift = kp[f"be{i}"] - mean * scale
        h = h * scale + shift
        h = jnp.where(h > 0, h, NEG_SLOPE * h)
        h = h.astype(jnp.bfloat16)
    h = jnp.dot(h, kp["w4"], preferred_element_type=jnp.float32) + kp["b4"]
    return jnp.tanh(h)[:, :OUT]


if __name__ == "__main__":
    key = jax.random.PRNGKey(0)
    key, kx = jax.random.split(key)

    B = 8  # batch (BatchNorm1d training mode needs B >= 2; 8 = sublane-aligned)
    x = jax.random.normal(kx, (B, LATENT), jnp.float32)
    params = init_params(key)
    kparams = prepare_kernel_params(params)

    y = generator_forward(x, kparams)
    y = jax.block_until_ready(y)
    assert y.shape == (B, OUT), y.shape

    # Tight check against a pure-JAX mirror of the kernel's mixed-precision math.
    y_mixed = reference_forward_mixed(x, kparams)
    err_mixed = float(jnp.max(jnp.abs(y - y_mixed)))
    assert jnp.allclose(y, y_mixed, atol=1e-3, rtol=1e-3), err_mixed

    # Loose check against the full-f32 module semantics (bf16 weights/activations
    # loosen agreement; outputs are tanh-bounded in [-1, 1]).
    y_f32 = reference_forward_f32(x, params)
    err_f32 = float(jnp.max(jnp.abs(y - y_f32)))
    assert jnp.allclose(y, y_f32, atol=7.5e-2, rtol=7.5e-2), err_f32

    print("KERNEL_OK")
</pallas_src>

<mosaic_0001>
module attributes {stable_mosaic.version = 11 : i64} {
  func.func @generator_kernel(%arg0: memref<8x128xbf16, #tpu.memory_space<vmem>>, %arg1: memref<128x256xbf16, #tpu.memory_space<vmem>>, %arg2: memref<1x256xf32, #tpu.memory_space<vmem>>, %arg3: memref<1x256xf32, #tpu.memory_space<vmem>>, %arg4: memref<256x512xbf16, #tpu.memory_space<vmem>>, %arg5: memref<1x512xf32, #tpu.memory_space<vmem>>, %arg6: memref<1x512xf32, #tpu.memory_space<vmem>>, %arg7: memref<512x1024xbf16, #tpu.memory_space<vmem>>, %arg8: memref<1x1024xf32, #tpu.memory_space<vmem>>, %arg9: memref<1x1024xf32, #tpu.memory_space<vmem>>, %arg10: memref<1024x896xbf16, #tpu.memory_space<vmem>>, %arg11: memref<1x896xf32, #tpu.memory_space<vmem>>, %arg12: memref<8x896xf32, #tpu.memory_space<vmem>>) attributes {dimension_semantics = [], scalar_prefetch = 0 : i64, scratch_operands = 0 : i64, tpu.core_type = #tpu.core_type<tc>} {
    %c0 = arith.constant 0 : index
    %c0_0 = arith.constant 0 : index
    %0 = vector.load %arg0[%c0, %c0_0] : memref<8x128xbf16, #tpu.memory_space<vmem>>, vector<8x128xbf16>
    %c0_1 = arith.constant 0 : index
    %c0_2 = arith.constant 0 : index
    %1 = vector.load %arg1[%c0_1, %c0_2] : memref<128x256xbf16, #tpu.memory_space<vmem>>, vector<128x256xbf16>
    %cst = arith.constant dense<0.000000e+00> : vector<8x256xf32>
    %2 = tpu.matmul %0, %1, %cst {dimension_numbers = #tpu.dot_dimension_numbers<[1], [0], [0], [1], [0, 0, 1, 1], [], []>} : vector<8x128xbf16>, vector<128x256xbf16>, vector<8x256xf32> -> vector<8x256xf32>
    %c0_3 = arith.constant 0 : index
    %c0_4 = arith.constant 0 : index
    %3 = vector.load %arg2[%c0_3, %c0_4] : memref<1x256xf32, #tpu.memory_space<vmem>>, vector<1x256xf32>
    %c0_5 = arith.constant 0 : index
    %c0_6 = arith.constant 0 : index
    %4 = vector.load %arg3[%c0_5, %c0_6] : memref<1x256xf32, #tpu.memory_space<vmem>>, vector<1x256xf32>
    %cst_7 = arith.constant dense<0.000000e+00> : vector<256xf32>
    %5 = vector.multi_reduction <add>, %2, %cst_7 [0] : vector<8x256xf32> to vector<256xf32>
    %6 = vector.shape_cast %5 : vector<256xf32> to vector<1x256xf32>
    %cst_8 = arith.constant 8.000000e+00 : f32
    %7 = vector.broadcast %cst_8 : f32 to vector<1x256xf32>
    %8 = arith.divf %6, %7 : vector<1x256xf32>
    %9 = vector.broadcast %8 : vector<1x256xf32> to vector<8x256xf32>
    %10 = arith.subf %2, %9 : vector<8x256xf32>
    %11 = vector.broadcast %8 : vector<1x256xf32> to vector<8x256xf32>
    %12 = arith.subf %2, %11 : vector<8x256xf32>
    %13 = arith.mulf %10, %12 : vector<8x256xf32>
    %cst_9 = arith.constant dense<0.000000e+00> : vector<256xf32>
    %14 = vector.multi_reduction <add>, %13, %cst_9 [0] : vector<8x256xf32> to vector<256xf32>
    %15 = vector.shape_cast %14 : vector<256xf32> to vector<1x256xf32>
    %cst_10 = arith.constant 8.000000e+00 : f32
    %16 = vector.broadcast %cst_10 : f32 to vector<1x256xf32>
    %17 = arith.divf %15, %16 : vector<1x256xf32>
    %cst_11 = arith.constant 9.99999974E-6 : f32
    %18 = vector.broadcast %cst_11 : f32 to vector<1x256xf32>
    %19 = arith.addf %17, %18 : vector<1x256xf32>
    %20 = math.rsqrt %19 : vector<1x256xf32>
    %21 = arith.mulf %3, %20 : vector<1x256xf32>
    %22 = arith.mulf %8, %21 : vector<1x256xf32>
    %23 = arith.subf %4, %22 : vector<1x256xf32>
    %24 = vector.broadcast %21 : vector<1x256xf32> to vector<8x256xf32>
    %25 = arith.mulf %2, %24 : vector<8x256xf32>
    %26 = vector.broadcast %23 : vector<1x256xf32> to vector<8x256xf32>
    %27 = arith.addf %25, %26 : vector<8x256xf32>
    %cst_12 = arith.constant 0.000000e+00 : f32
    %28 = vector.broadcast %cst_12 : f32 to vector<8x256xf32>
    %29 = arith.cmpf ogt, %27, %28 : vector<8x256xf32>
    %cst_13 = arith.constant 2.000000e-01 : f32
    %30 = vector.broadcast %cst_13 : f32 to vector<8x256xf32>
    %31 = arith.mulf %30, %27 : vector<8x256xf32>
    %32 = arith.select %29, %27, %31 : vector<8x256xi1>, vector<8x256xf32>
    %33 = arith.truncf %32 : vector<8x256xf32> to vector<8x256xbf16>
    %c0_14 = arith.constant 0 : index
    %c0_15 = arith.constant 0 : index
    %34 = vector.load %arg4[%c0_14, %c0_15] : memref<256x512xbf16, #tpu.memory_space<vmem>>, vector<256x512xbf16>
    %cst_16 = arith.constant dense<0.000000e+00> : vector<8x512xf32>
    %35 = tpu.matmul %33, %34, %cst_16 {dimension_numbers = #tpu.dot_dimension_numbers<[1], [0], [0], [1], [0, 0, 1, 1], [], []>} : vector<8x256xbf16>, vector<256x512xbf16>, vector<8x512xf32> -> vector<8x512xf32>
    %c0_17 = arith.constant 0 : index
    %c0_18 = arith.constant 0 : index
    %36 = vector.load %arg5[%c0_17, %c0_18] : memref<1x512xf32, #tpu.memory_space<vmem>>, vector<1x512xf32>
    %c0_19 = arith.constant 0 : index
    %c0_20 = arith.constant 0 : index
    %37 = vector.load %arg6[%c0_19, %c0_20] : memref<1x512xf32, #tpu.memory_space<vmem>>, vector<1x512xf32>
    %cst_21 = arith.constant dense<0.000000e+00> : vector<512xf32>
    %38 = vector.multi_reduction <add>, %35, %cst_21 [0] : vector<8x512xf32> to vector<512xf32>
    %39 = vector.shape_cast %38 : vector<512xf32> to vector<1x512xf32>
    %cst_22 = arith.constant 8.000000e+00 : f32
    %40 = vector.broadcast %cst_22 : f32 to vector<1x512xf32>
    %41 = arith.divf %39, %40 : vector<1x512xf32>
    %42 = vector.broadcast %41 : vector<1x512xf32> to vector<8x512xf32>
    %43 = arith.subf %35, %42 : vector<8x512xf32>
    %44 = vector.broadcast %41 : vector<1x512xf32> to vector<8x512xf32>
    %45 = arith.subf %35, %44 : vector<8x512xf32>
    %46 = arith.mulf %43, %45 : vector<8x512xf32>
    %cst_23 = arith.constant dense<0.000000e+00> : vector<512xf32>
    %47 = vector.multi_reduction <add>, %46, %cst_23 [0] : vector<8x512xf32> to vector<512xf32>
    %48 = vector.shape_cast %47 : vector<512xf32> to vector<1x512xf32>
    %cst_24 = arith.constant 8.000000e+00 : f32
    %49 = vector.broadcast %cst_24 : f32 to vector<1x512xf32>
    %50 = arith.divf %48, %49 : vector<1x512xf32>
    %cst_25 = arith.constant 9.99999974E-6 : f32
    %51 = vector.broadcast %cst_25 : f32 to vector<1x512xf32>
    %52 = arith.addf %50, %51 : vector<1x512xf32>
    %53 = math.rsqrt %52 : vector<1x512xf32>
    %54 = arith.mulf %36, %53 : vector<1x512xf32>
    %55 = arith.mulf %41, %54 : vector<1x512xf32>
    %56 = arith.subf %37, %55 : vector<1x512xf32>
    %57 = vector.broadcast %54 : vector<1x512xf32> to vector<8x512xf32>
    %58 = arith.mulf %35, %57 : vector<8x512xf32>
    %59 = vector.broadcast %56 : vector<1x512xf32> to vector<8x512xf32>
    %60 = arith.addf %58, %59 : vector<8x512xf32>
    %cst_26 = arith.constant 0.000000e+00 : f32
    %61 = vector.broadcast %cst_26 : f32 to vector<8x512xf32>
    %62 = arith.cmpf ogt, %60, %61 : vector<8x512xf32>
    %cst_27 = arith.constant 2.000000e-01 : f32
    %63 = vector.broadcast %cst_27 : f32 to vector<8x512xf32>
    %64 = arith.mulf %63, %60 : vector<8x512xf32>
    %65 = arith.select %62, %60, %64 : vector<8x512xi1>, vector<8x512xf32>
    %66 = arith.truncf %65 : vector<8x512xf32> to vector<8x512xbf16>
    %c0_28 = arith.constant 0 : index
    %c0_29 = arith.constant 0 : index
    %67 = vector.load %arg7[%c0_28, %c0_29] : memref<512x1024xbf16, #tpu.memory_space<vmem>>, vector<512x1024xbf16>
    %cst_30 = arith.constant dense<0.000000e+00> : vector<8x1024xf32>
    %68 = tpu.matmul %66, %67, %cst_30 {dimension_numbers = #tpu.dot_dimension_numbers<[1], [0], [0], [1], [0, 0, 1, 1], [], []>} : vector<8x512xbf16>, vector<512x1024xbf16>, vector<8x1024xf32> -> vector<8x1024xf32>
    %c0_31 = arith.constant 0 : index
    %c0_32 = arith.constant 0 : index
    %69 = vector.load %arg8[%c0_31, %c0_32] : memref<1x1024xf32, #tpu.memory_space<vmem>>, vector<1x1024xf32>
    %c0_33 = arith.constant 0 : index
    %c0_34 = arith.constant 0 : index
    %70 = vector.load %arg9[%c0_33, %c0_34] : memref<1x1024xf32, #tpu.memory_space<vmem>>, vector<1x1024xf32>
    %cst_35 = arith.constant dense<0.000000e+00> : vector<1024xf32>
    %71 = vector.multi_reduction <add>, %68, %cst_35 [0] : vector<8x1024xf32> to vector<1024xf32>
    %72 = vector.shape_cast %71 : vector<1024xf32> to vector<1x1024xf32>
    %cst_36 = arith.constant 8.000000e+00 : f32
    %73 = vector.broadcast %cst_36 : f32 to vector<1x1024xf32>
    %74 = arith.divf %72, %73 : vector<1x1024xf32>
    %75 = vector.broadcast %74 : vector<1x1024xf32> to vector<8x1024xf32>
    %76 = arith.subf %68, %75 : vector<8x1024xf32>
    %77 = vector.broadcast %74 : vector<1x1024xf32> to vector<8x1024xf32>
    %78 = arith.subf %68, %77 : vector<8x1024xf32>
    %79 = arith.mulf %76, %78 : vector<8x1024xf32>
    %cst_37 = arith.constant dense<0.000000e+00> : vector<1024xf32>
    %80 = vector.multi_reduction <add>, %79, %cst_37 [0] : vector<8x1024xf32> to vector<1024xf32>
    %81 = vector.shape_cast %80 : vector<1024xf32> to vector<1x1024xf32>
    %cst_38 = arith.constant 8.000000e+00 : f32
    %82 = vector.broadcast %cst_38 : f32 to vector<1x1024xf32>
    %83 = arith.divf %81, %82 : vector<1x1024xf32>
    %cst_39 = arith.constant 9.99999974E-6 : f32
    %84 = vector.broadcast %cst_39 : f32 to vector<1x1024xf32>
    %85 = arith.addf %83, %84 : vector<1x1024xf32>
    %86 = math.rsqrt %85 : vector<1x1024xf32>
    %87 = arith.mulf %69, %86 : vector<1x1024xf32>
    %88 = arith.mulf %74, %87 : vector<1x1024xf32>
    %89 = arith.subf %70, %88 : vector<1x1024xf32>
    %90 = vector.broadcast %87 : vector<1x1024xf32> to vector<8x1024xf32>
    %91 = arith.mulf %68, %90 : vector<8x1024xf32>
    %92 = vector.broadcast %89 : vector<1x1024xf32> to vector<8x1024xf32>
    %93 = arith.addf %91, %92 : vector<8x1024xf32>
    %cst_40 = arith.constant 0.000000e+00 : f32
    %94 = vector.broadcast %cst_40 : f32 to vector<8x1024xf32>
    %95 = arith.cmpf ogt, %93, %94 : vector<8x1024xf32>
    %cst_41 = arith.constant 2.000000e-01 : f32
    %96 = vector.broadcast %cst_41 : f32 to vector<8x1024xf32>
    %97 = arith.mulf %96, %93 : vector<8x1024xf32>
    %98 = arith.select %95, %93, %97 : vector<8x1024xi1>, vector<8x1024xf32>
    %99 = arith.truncf %98 : vector<8x1024xf32> to vector<8x1024xbf16>
    %c0_42 = arith.constant 0 : index
    %c0_43 = arith.constant 0 : index
    %100 = vector.load %arg10[%c0_42, %c0_43] : memref<1024x896xbf16, #tpu.memory_space<vmem>>, vector<1024x896xbf16>
    %cst_44 = arith.constant dense<0.000000e+00> : vector<8x896xf32>
    %101 = tpu.matmul %99, %100, %cst_44 {dimension_numbers = #tpu.dot_dimension_numbers<[1], [0], [0], [1], [0, 0, 1, 1], [], []>} : vector<8x1024xbf16>, vector<1024x896xbf16>, vector<8x896xf32> -> vector<8x896xf32>
    %c0_45 = arith.constant 0 : index
    %c0_46 = arith.constant 0 : index
    %102 = vector.load %arg11[%c0_45, %c0_46] : memref<1x896xf32, #tpu.memory_space<vmem>>, vector<1x896xf32>
    %103 = vector.broadcast %102 : vector<1x896xf32> to vector<8x896xf32>
    %104 = arith.addf %101, %103 : vector<8x896xf32>
    %105 = math.tanh %104 : vector<8x896xf32>
    %c0_47 = arith.constant 0 : index
    %c0_48 = arith.constant 0 : index
    %106 = vector.load %arg12[%c0_47, %c0_48] : memref<8x896xf32, #tpu.memory_space<vmem>>, vector<8x896xf32>
    tpu.vector_store %arg12[%c0_47, %c0_48], %105 {strides = array<i32>} : memref<8x896xf32, #tpu.memory_space<vmem>>, vector<8x896xf32>,
    return
  }
}

</mosaic_0001>

<llo_original>
// kernel: tpu_custom_call.1
$region0: #{tpu_custom_call.1}
  #allocation0 [shape = 'u32[]', space=smem, size = 0x4, offset = 0x4, fixed_abs, tag = 'smem constant byte address 0x4 - core index']
  #allocation1 [shape = 'u32[144,128]{1,0:T(1,128)}', space=vmem, size = 0x12000, scoped, tag = 'internal scratch']
  %s0 = inlined_call_operand.hbm [shape: bf16[8,128], index: 0, kind: input, shape index: {}]
  %s1 = inlined_call_operand.hbm [shape: bf16[128,256], index: 1, kind: input, shape index: {}]
  %s2 = inlined_call_operand.hbm [shape: f32[1,256], index: 2, kind: input, shape index: {}]
  %s3 = inlined_call_operand.hbm [shape: f32[1,256], index: 3, kind: input, shape index: {}]
  %s4 = inlined_call_operand.hbm [shape: bf16[256,512], index: 4, kind: input, shape index: {}]
  %s5 = inlined_call_operand.hbm [shape: f32[1,512], index: 5, kind: input, shape index: {}]
  %s6 = inlined_call_operand.hbm [shape: f32[1,512], index: 6, kind: input, shape index: {}]
  %s7 = inlined_call_operand.hbm [shape: bf16[512,1024], index: 7, kind: input, shape index: {}]
  %s8 = inlined_call_operand.hbm [shape: f32[1,1024], index: 8, kind: input, shape index: {}]
  %s9 = inlined_call_operand.hbm [shape: f32[1,1024], index: 9, kind: input, shape index: {}]
  %s10 = inlined_call_operand.hbm [shape: bf16[1024,896], index: 10, kind: input, shape index: {}]
  %s11 = inlined_call_operand.hbm [shape: f32[1,896], index: 11, kind: input, shape index: {}]
  %s12 = inlined_call_operand.hbm [shape: f32[8,896], index: 12, kind: output, shape index: {}]
  %s13 = sld [smem:[#allocation0]]
  $region106: #{tpu_custom_call.1} parent=0
    _
  %s15 = ssub.s32 1, %s13
  %s16 = scalar_select 0, %s15, %s13
  $region1: #{tpu_custom_call.1} parent=0
    #allocation2 [shape = 'u8[2048]{0}', space=vmem, size = 0x800, scoped, tag = 'input window, operand 0, single buffered']
    #allocation3 [shape = 's32[1]{0}', space=sflag, size = 0x4, scoped, tag = 'scoped memory for tpu_custom_call.1']
    #allocation4 [shape = 's32[1]{0}', space=sflag, size = 0x4, scoped, tag = 'scoped memory for tpu_custom_call.1']
    #allocation5 [shape = 'u8[65536]{0}', space=vmem, size = 0x10000, scoped, tag = 'input window, operand 1, single buffered']
    #allocation6 [shape = 's32[1]{0}', space=sflag, size = 0x4, scoped, tag = 'scoped memory for tpu_custom_call.1']
    #allocation7 [shape = 'u8[1024]{0}', space=vmem, size = 0x400, scoped, tag = 'input window, operand 2, single buffered']
    #allocation8 [shape = 'u8[1024]{0}', space=vmem, size = 0x400, scoped, tag = 'input window, operand 3, single buffered']
    #allocation9 [shape = 's32[1]{0}', space=sflag, size = 0x4, scoped, tag = 'scoped memory for tpu_custom_call.1']
    #allocation10 [shape = 'u8[262144]{0}', space=vmem, size = 0x40000, scoped, tag = 'input window, operand 4, single buffered']
    #allocation11 [shape = 'u8[2048]{0}', space=vmem, size = 0x800, scoped, tag = 'input window, operand 5, single buffered']
    #allocation12 [shape = 's32[1]{0}', space=sflag, size = 0x4, scoped, tag = 'scoped memory for tpu_custom_call.1']
    #allocation13 [shape = 'u8[2048]{0}', space=vmem, size = 0x800, scoped, tag = 'input window, operand 6, single buffered']
    #allocation14 [shape = 'u8[1048576]{0}', space=vmem, size = 0x100000, scoped, tag = 'input window, operand 7, single buffered']
    #allocation15 [shape = 's32[1]{0}', space=sflag, size = 0x4, scoped, tag = 'scoped memory for tpu_custom_call.1']
    #allocation16 [shape = 'u8[4096]{0}', space=vmem, size = 0x1000, scoped, tag = 'input window, operand 8, single buffered']
    #allocation17 [shape = 'u8[4096]{0}', space=vmem, size = 0x1000, scoped, tag = 'input window, operand 9, single buffered']
    #allocation18 [shape = 's32[1]{0}', space=sflag, size = 0x4, scoped, tag = 'scoped memory for tpu_custom_call.1']
    #allocation19 [shape = 'u8[1835008]{0}', space=vmem, size = 0x1c0000, scoped, tag = 'input window, operand 10, single buffered']
    #allocation20 [shape = 'u8[3584]{0}', space=vmem, size = 0x1000, scoped, tag = 'input window, operand 11, single buffered']
    #allocation21 [shape = 's32[1]{0}', space=sflag, size = 0x4, scoped, tag = 'scoped memory for tpu_custom_call.1']
    #allocation22 [shape = 'u8[28672]{0}', space=vmem, size = 0x7000, scoped, tag = 'output window, operand 0, single buffered']
    %17 = vsyncpa [#allocation3], 0
    %18 = vsyncpa [#allocation6], 0
    %19 = vsyncpa [#allocation9], 0
    %20 = vsyncpa [#allocation12], 0
    %21 = vsyncpa [#allocation15], 0
    %22 = vsyncpa [#allocation18], 0
    %23 = vsyncpa [#allocation21], 0
    %24 = vsyncpa [#allocation4], 0
    // Predicated region
    $region2: #{tpu_custom_call.1} parent=1 // pred_check
      _
    $region3: #{tpu_custom_call.1} parent=1 // pred_check_branch
      %26 = sbr.rel (0) target = $region5
    $region4: #{tpu_custom_call.1} parent=1 // pred_region
      %s28 = ssub.s32 64, 64
      %29 = vsyncadd [#allocation3], %s28
      %s31 = sshll.u32 [#allocation2], 4
      %s32 = int_to_ptr.vmem [resolvable:$true] %s31
      %34 = dma.hbm_to_vmem [thread:$0]  %s0, 64, %s32, [#allocation3]
    $region5: #{tpu_custom_call.1} parent=1 // pred_fallthru
      _
    // Predicated region
    $region6: #{tpu_custom_call.1} parent=1 // pred_check
      _
    $region7: #{tpu_custom_call.1} parent=1 // pred_check_branch
      %36 = sbr.rel (0) target = $region9
    $region8: #{tpu_custom_call.1} parent=1 // pred_region
      %s38 = ssub.s32 2048, 2048
      %39 = vsyncadd [#allocation6], %s38
      %s40 = sshll.u32 [#allocation5], 4
      %s41 = int_to_ptr.vmem [resolvable:$true] %s40
      %46 = dma.hbm_to_vmem [thread:$0]  %s1, 2048, %s41, [#allocation6], 128, 128, 8
    $region9: #{tpu_custom_call.1} parent=1 // pred_fallthru
      _
    // Predicated region
    $region10: #{tpu_custom_call.1} parent=1 // pred_check
      _
    $region11: #{tpu_custom_call.1} parent=1 // pred_check_branch
      %48 = sbr.rel (0) target = $region13
    $region12: #{tpu_custom_call.1} parent=1 // pred_region
      %s50 = ssub.s32 32, 32
      %51 = vsyncadd [#allocation6], %s50
      %s53 = sshll.u32 [#allocation7], 4
      %s54 = int_to_ptr.vmem [resolvable:$true] %s53
      %56 = dma.hbm_to_vmem [thread:$0]  %s2, 32, %s54, [#allocation6]
    $region13: #{tpu_custom_call.1} parent=1 // pred_fallthru
      _
    // Predicated region
    $region14: #{tpu_custom_call.1} parent=1 // pred_check
      _
    $region15: #{tpu_custom_call.1} parent=1 // pred_check_branch
      %58 = sbr.rel (0) target = $region17
    $region16: #{tpu_custom_call.1} parent=1 // pred_region
      %s60 = ssub.s32 32, 32
      %61 = vsyncadd [#allocation9], %s60
      %s63 = sshll.u32 [#allocation8], 4
      %s64 = int_to_ptr.vmem [resolvable:$true] %s63
      %66 = dma.hbm_to_vmem [thread:$0]  %s3, 32, %s64, [#allocation9]
    $region17: #{tpu_custom_call.1} parent=1 // pred_fallthru
      _
    // Predicated region
    $region18: #{tpu_custom_call.1} parent=1 // pred_check
      _
    $region19: #{tpu_custom_call.1} parent=1 // pred_check_branch
      %68 = sbr.rel (0) target = $region21
    $region20: #{tpu_custom_call.1} parent=1 // pred_region
      %s70 = ssub.s32 8192, 8192
      %71 = vsyncadd [#allocation9], %s70
      %s72 = sshll.u32 [#allocation10], 4
      %s73 = int_to_ptr.vmem [resolvable:$true] %s72
      %78 = dma.hbm_to_vmem [thread:$0]  %s4, 8192, %s73, [#allocation9], 256, 256, 16
    $region21: #{tpu_custom_call.1} parent=1 // pred_fallthru
      _
    // Predicated region
    $region22: #{tpu_custom_call.1} parent=1 // pred_check
      _
    $region23: #{tpu_custom_call.1} parent=1 // pred_check_branch
      %80 = sbr.rel (0) target = $region25
    $region24: #{tpu_custom_call.1} parent=1 // pred_region
      %s82 = ssub.s32 64, 64
      %83 = vsyncadd [#allocation12], %s82
      %s85 = sshll.u32 [#allocation11], 4
      %s86 = int_to_ptr.vmem [resolvable:$true] %s85
      %88 = dma.hbm_to_vmem [thread:$0]  %s5, 64, %s86, [#allocation12]
    $region25: #{tpu_custom_call.1} parent=1 // pred_fallthru
      _
    // Predicated region
    $region26: #{tpu_custom_call.1} parent=1 // pred_check
      _
    $region27: #{tpu_custom_call.1} parent=1 // pred_check_branch
      %90 = sbr.rel (0) target = $region29
    $region28: #{tpu_custom_call.1} parent=1 // pred_region
      %s92 = ssub.s32 64, 64
      %93 = vsyncadd [#allocation12], %s92
      %s95 = sshll.u32 [#allocation13], 4
      %s96 = int_to_ptr.vmem [resolvable:$true] %s95
      %98 = dma.hbm_to_vmem [thread:$0]  %s6, 64, %s96, [#allocation12]
    $region29: #{tpu_custom_call.1} parent=1 // pred_fallthru
      _
    // Predicated region
    $region30: #{tpu_custom_call.1} parent=1 // pred_check
      _
    $region31: #{tpu_custom_call.1} parent=1 // pred_check_branch
      %100 = sbr.rel (0) target = $region33
    $region32: #{tpu_custom_call.1} parent=1 // pred_region
      %s102 = ssub.s32 32768, 32768
      %103 = vsyncadd [#allocation15], %s102
      %s104 = sshll.u32 [#allocation14], 4
      %s105 = int_to_ptr.vmem [resolvable:$true] %s104
      %110 = dma.hbm_to_vmem [thread:$0]  %s7, 32768, %s105, [#allocation15], 512, 512, 32
    $region33: #{tpu_custom_call.1} parent=1 // pred_fallthru
      _
    // Predicated region
    $region34: #{tpu_custom_call.1} parent=1 // pred_check
      _
    $region35: #{tpu_custom_call.1} parent=1 // pred_check_branch
      %112 = sbr.rel (0) target = $region37
    $region36: #{tpu_custom_call.1} parent=1 // pred_region
      %s114 = ssub.s32 128, 128
      %115 = vsyncadd [#allocation15], %s114
      %s117 = sshll.u32 [#allocation16], 4
      %s118 = int_to_ptr.vmem [resolvable:$true] %s117
      %120 = dma.hbm_to_vmem [thread:$0]  %s8, 128, %s118, [#allocation15]
    $region37: #{tpu_custom_call.1} parent=1 // pred_fallthru
      _
    // Predicated region
    $region38: #{tpu_custom_call.1} parent=1 // pred_check
      _
    $region39: #{tpu_custom_call.1} parent=1 // pred_check_branch
      %122 = sbr.rel (0) target = $region41
    $region40: #{tpu_custom_call.1} parent=1 // pred_region
      %s124 = ssub.s32 128, 128
      %125 = vsyncadd [#allocation18], %s124
      %s127 = sshll.u32 [#allocation17], 4
      %s128 = int_to_ptr.vmem [resolvable:$true] %s127
      %130 = dma.hbm_to_vmem [thread:$0]  %s9, 128, %s128, [#allocation18]
    $region41: #{tpu_custom_call.1} parent=1 // pred_fallthru
      _
    // Predicated region
    $region42: #{tpu_custom_call.1} parent=1 // pred_check
      _
    $region43: #{tpu_custom_call.1} parent=1 // pred_check_branch
      %132 = sbr.rel (0) target = $region45
    $region44: #{tpu_custom_call.1} parent=1 // pred_region
      %s134 = ssub.s32 57344, 57344
      %135 = vsyncadd [#allocation18], %s134
      %s136 = sshll.u32 [#allocation19], 4
      %s137 = int_to_ptr.vmem [resolvable:$true] %s136
      %142 = dma.hbm_to_vmem [thread:$0]  %s10, 57344, %s137, [#allocation18], 448, 448, 28
    $region45: #{tpu_custom_call.1} parent=1 // pred_fallthru
      _
    // Predicated region
    $region46: #{tpu_custom_call.1} parent=1 // pred_check
      _
    $region47: #{tpu_custom_call.1} parent=1 // pred_check_branch
      %144 = sbr.rel (0) target = $region49
    $region48: #{tpu_custom_call.1} parent=1 // pred_region
      %s146 = ssub.s32 112, 112
      %147 = vsyncadd [#allocation21], %s146
      %s149 = sshll.u32 [#allocation20], 4
      %s150 = int_to_ptr.vmem [resolvable:$true] %s149
      %152 = dma.hbm_to_vmem [thread:$0]  %s11, 112, %s150, [#allocation21]
    $region49: #{tpu_custom_call.1} parent=1 // pred_fallthru
      _
    // Predicated region
    $region50: #{tpu_custom_call.1} parent=1 // pred_check
      _
    $region51: #{tpu_custom_call.1} parent=1 // pred_check_branch
      %154 = sbr.rel (0) target = $region53
    $region52: #{tpu_custom_call.1} parent=1 // pred_region
      %155 = dma.done [#allocation3], 64
    $region53: #{tpu_custom_call.1} parent=1 // pred_fallthru
      _
    // Predicated region
    $region54: #{tpu_custom_call.1} parent=1 // pred_check
      _
    $region55: #{tpu_custom_call.1} parent=1 // pred_check_branch
      %157 = sbr.rel (0) target = $region57
    $region56: #{tpu_custom_call.1} parent=1 // pred_region
      %158 = dma.done [#allocation6], 2048
    $region57: #{tpu_custom_call.1} parent=1 // pred_fallthru
      _
    // Predicated region
    $region58: #{tpu_custom_call.1} parent=1 // pred_check
      _
    $region59: #{tpu_custom_call.1} parent=1 // pred_check_branch
      %160 = sbr.rel (0) target = $region61
    $region60: #{tpu_custom_call.1} parent=1 // pred_region
      %161 = dma.done [#allocation6], 32
    $region61: #{tpu_custom_call.1} parent=1 // pred_fallthru
      _
    // Predicated region
    $region62: #{tpu_custom_call.1} parent=1 // pred_check
      _
    $region63: #{tpu_custom_call.1} parent=1 // pred_check_branch
      %163 = sbr.rel (0) target = $region65
    $region64: #{tpu_custom_call.1} parent=1 // pred_region
      %164 = dma.done [#allocation9], 32
    $region65: #{tpu_custom_call.1} parent=1 // pred_fallthru
      _
    // Predicated region
    $region66: #{tpu_custom_call.1} parent=1 // pred_check
      _
    $region67: #{tpu_custom_call.1} parent=1 // pred_check_branch
      %166 = sbr.rel (0) target = $region69
    $region68: #{tpu_custom_call.1} parent=1 // pred_region
      %167 = dma.done [#allocation9], 8192
    $region69: #{tpu_custom_call.1} parent=1 // pred_fallthru
      _
    // Predicated region
    $region70: #{tpu_custom_call.1} parent=1 // pred_check
      _
    $region71: #{tpu_custom_call.1} parent=1 // pred_check_branch
      %169 = sbr.rel (0) target = $region73
    $region72: #{tpu_custom_call.1} parent=1 // pred_region
      %170 = dma.done [#allocation12], 64
    $region73: #{tpu_custom_call.1} parent=1 // pred_fallthru
      _
    // Predicated region
    $region74: #{tpu_custom_call.1} parent=1 // pred_check
      _
    $region75: #{tpu_custom_call.1} parent=1 // pred_check_branch
      %172 = sbr.rel (0) target = $region77
    $region76: #{tpu_custom_call.1} parent=1 // pred_region
      %173 = dma.done [#allocation12], 64
    $region77: #{tpu_custom_call.1} parent=1 // pred_fallthru
      _
    // Predicated region
    $region78: #{tpu_custom_call.1} parent=1 // pred_check
      _
    $region79: #{tpu_custom_call.1} parent=1 // pred_check_branch
      %175 = sbr.rel (0) target = $region81
    $region80: #{tpu_custom_call.1} parent=1 // pred_region
      %176 = dma.done [#allocation15], 32768
    $region81: #{tpu_custom_call.1} parent=1 // pred_fallthru
      _
    // Predicated region
    $region82: #{tpu_custom_call.1} parent=1 // pred_check
      _
    $region83: #{tpu_custom_call.1} parent=1 // pred_check_branch
      %178 = sbr.rel (0) target = $region85
    $region84: #{tpu_custom_call.1} parent=1 // pred_region
      %179 = dma.done [#allocation15], 128
    $region85: #{tpu_custom_call.1} parent=1 // pred_fallthru
      _
    // Predicated region
    $region86: #{tpu_custom_call.1} parent=1 // pred_check
      _
    $region87: #{tpu_custom_call.1} parent=1 // pred_check_branch
      %181 = sbr.rel (0) target = $region89
    $region88: #{tpu_custom_call.1} parent=1 // pred_region
      %182 = dma.done [#allocation18], 128
    $region89: #{tpu_custom_call.1} parent=1 // pred_fallthru
      _
    // Predicated region
    $region90: #{tpu_custom_call.1} parent=1 // pred_check
      _
    $region91: #{tpu_custom_call.1} parent=1 // pred_check_branch
      %184 = sbr.rel (0) target = $region93
    $region92: #{tpu_custom_call.1} parent=1 // pred_region
      %185 = dma.done [#allocation18], 57344
    $region93: #{tpu_custom_call.1} parent=1 // pred_fallthru
      _
    // Predicated region
    $region94: #{tpu_custom_call.1} parent=1 // pred_check
      _
    $region95: #{tpu_custom_call.1} parent=1 // pred_check_branch
      %187 = sbr.rel (0) target = $region97
    $region96: #{tpu_custom_call.1} parent=1 // pred_region
      %188 = dma.done [#allocation21], 112
    $region97: #{tpu_custom_call.1} parent=1 // pred_fallthru
      _
    %v190 = vld [vmem:[#allocation2] sm:$0xf]
    %v191 = vld [vmem:[#allocation5] sm:$0xff]
    %v192 = vld [vmem:[#allocation5 + $0x8] sm:$0xff]
    %v193 = vld [vmem:[#allocation5 + $0x10] sm:$0xff]
    %v194 = vld [vmem:[#allocation5 + $0x18] sm:$0xff]
    %v195 = vld [vmem:[#allocation5 + $0x20] sm:$0xff]
    %v196 = vld [vmem:[#allocation5 + $0x28] sm:$0xff]
    %v197 = vld [vmem:[#allocation5 + $0x30] sm:$0xff]
    %v198 = vld [vmem:[#allocation5 + $0x38] sm:$0xff]
    %v199 = vld [vmem:[#allocation5 + $0x40] sm:$0xff]
    %v200 = vld [vmem:[#allocation5 + $0x48] sm:$0xff]
    %v201 = vld [vmem:[#allocation5 + $0x50] sm:$0xff]
    %v202 = vld [vmem:[#allocation5 + $0x58] sm:$0xff]
    %v203 = vld [vmem:[#allocation5 + $0x60] sm:$0xff]
    %v204 = vld [vmem:[#allocation5 + $0x68] sm:$0xff]
    %v205 = vld [vmem:[#allocation5 + $0x70] sm:$0xff]
    %v206 = vld [vmem:[#allocation5 + $0x78] sm:$0xff]
    %v223 = vunpack.c.l.b16 %v191
    %v224 = vunpack.c.h.b16 %v191
    %v225 = vunpack.c.l.b16 %v192
    %v226 = vunpack.c.h.b16 %v192
    %v227 = vunpack.c.l.b16 %v193
    %v228 = vunpack.c.h.b16 %v193
    %v229 = vunpack.c.l.b16 %v194
    %v230 = vunpack.c.h.b16 %v194
    %v231 = vunpack.c.l.b16 %v195
    %v232 = vunpack.c.h.b16 %v195
    %v233 = vunpack.c.l.b16 %v196
    %v234 = vunpack.c.h.b16 %v196
    %v235 = vunpack.c.l.b16 %v197
    %v236 = vunpack.c.h.b16 %v197
    %v237 = vunpack.c.l.b16 %v198
    %v238 = vunpack.c.h.b16 %v198
    %v239 = vunpack.c.l.b16 %v199
    %v240 = vunpack.c.h.b16 %v199
    %v241 = vunpack.c.l.b16 %v200
    %v242 = vunpack.c.h.b16 %v200
    %v243 = vunpack.c.l.b16 %v201
    %v244 = vunpack.c.h.b16 %v201
    %v245 = vunpack.c.l.b16 %v202
    %v246 = vunpack.c.h.b16 %v202
    %v247 = vunpack.c.l.b16 %v203
    %v248 = vunpack.c.h.b16 %v203
    %v249 = vunpack.c.l.b16 %v204
    %v250 = vunpack.c.h.b16 %v204
    %v251 = vunpack.c.l.b16 %v205
    %v252 = vunpack.c.h.b16 %v205
    %v253 = vunpack.c.l.b16 %v206
    %v254 = vunpack.c.h.b16 %v206
    %v255 = vpack.c.b16 %v225, %v223
    %v256 = vpack.c.b16 %v226, %v224
    %v257 = vpack.c.b16 %v229, %v227
    %v258 = vpack.c.b16 %v230, %v228
    %v259 = vpack.c.b16 %v233, %v231
    %v260 = vpack.c.b16 %v234, %v232
    %v261 = vpack.c.b16 %v237, %v235
    %v262 = vpack.c.b16 %v238, %v236
    %v263 = vpack.c.b16 %v241, %v239
    %v264 = vpack.c.b16 %v242, %v240
    %v265 = vpack.c.b16 %v245, %v243
    %v266 = vpack.c.b16 %v246, %v244
    %v267 = vpack.c.b16 %v249, %v247
    %v268 = vpack.c.b16 %v250, %v248
    %v269 = vpack.c.b16 %v253, %v251
    %v270 = vpack.c.b16 %v254, %v252
    %287 = vmatprep.subr.bf16.mxu0 %v270
    %288 = vmatpush1.bf16.msra.mxu0 %v269
    %289 = vmatprep.subr.bf16.mxu0 %v268
    %290 = vmatpush1.bf16.msra.mxu0 %v267
    %291 = vmatprep.subr.bf16.mxu0 %v266
    %292 = vmatpush1.bf16.msra.mxu0 %v265
    %293 = vmatprep.subr.bf16.mxu0 %v264
    %294 = vmatpush1.bf16.msra.mxu0 %v263
    %295 = vmatprep.subr.bf16.mxu0 %v262
    %296 = vmatpush1.bf16.msra.mxu0 %v261
    %297 = vmatprep.subr.bf16.mxu0 %v260
    %298 = vmatpush1.bf16.msra.mxu0 %v259
    %299 = vmatprep.subr.bf16.mxu0 %v258
    %300 = vmatpush1.bf16.msra.mxu0 %v257
    %301 = vmatprep.subr.bf16.mxu0 %v256
    %302 = vmatpush1.bf16.msra.mxu0 %v255
    %303 = vmatprep.subr.bf16.mxu0 0
    %304 = vmatpush2.bf16.msra.mxu0 0
    %305 = vmatprep.subr.bf16.mxu0 0
    %306 = vmatpush2.bf16.msra.mxu0 0
    %307 = vmatprep.subr.bf16.mxu0 0
    %308 = vmatpush2.bf16.msra.mxu0 0
    %309 = vmatprep.subr.bf16.mxu0 0
    %310 = vmatpush2.bf16.msra.mxu0 0
    %311 = vmatprep.subr.bf16.mxu0 0
    %312 = vmatpush2.bf16.msra.mxu0 0
    %313 = vmatprep.subr.bf16.mxu0 0
    %314 = vmatpush2.bf16.msra.mxu0 0
    %315 = vmatprep.subr.bf16.mxu0 0
    %316 = vmatpush2.bf16.msra.mxu0 0
    %317 = vmatprep.subr.bf16.mxu0 0
    %318 = vmatpush2.bf16.msra.mxu0 0
    %319 = vmatprep.mubr.bf16.mxu0 0
    %320 = vmatmul.mubr.bf16.gmra.mxu0 %v190
    %v321 = vpop.f32.mrf.mxu0
    %v322 = vadd.f32 0.0, %v321
    %v323 = vpop.f32.mrf.mxu0
    %v324 = vadd.f32 0.0, %v323
    %v325 = vpop.f32.mrf.mxu0
    %v326 = vpop.f32.mrf.mxu0
    %327 = vdwg.mxu0
    %v328 = vld [vmem:[#allocation7] sm:$0x3]
    %v329 = vld [vmem:[#allocation8] sm:$0x3]
    %v330 = vrot.slane %v322, 4
    %v331 = vadd.f32 %v322, %v330
    %v332 = vrot.slane %v331, 2
    %v333 = vadd.f32 %v331, %v332
    %v334 = vrot.slane %v333, 1
    %v335 = vadd.f32 %v333, %v334
    %v336 = vrot.slane %v324, 4
    %v337 = vadd.f32 %v324, %v336
    %v338 = vrot.slane %v337, 2
    %v339 = vadd.f32 %v337, %v338
    %v340 = vrot.slane %v339, 1
    %v341 = vadd.f32 %v339, %v340
    %v342 = vrcp.pop 8.0
    %v343 = vmul.f32 %v335, %v342
    %v344 = vmul.f32 %v341, %v342
    %v345 = vsub.f32 %v322, %v343
    %v346 = vsub.f32 %v324, %v344
    %v347 = vmul.f32 %v345, %v345
    %v348 = vmul.f32 %v346, %v346
    %v349 = vrot.slane %v347, 4
    %v350 = vadd.f32 %v347, %v349
    %v351 = vrot.slane %v350, 2
    %v352 = vadd.f32 %v350, %v351
    %v353 = vrot.slane %v352, 1
    %v354 = vadd.f32 %v352, %v353
    %v355 = vrot.slane %v348, 4
    %v356 = vadd.f32 %v348, %v355
    %v357 = vrot.slane %v356, 2
    %v358 = vadd.f32 %v356, %v357
    %v359 = vrot.slane %v358, 1
    %v360 = vadd.f32 %v358, %v359
    %v361 = vmul.f32 %v354, %v342
    %v362 = vmul.f32 %v360, %v342
    %v363 = vadd.f32 %v361, 1e-05
    %v364 = vadd.f32 %v362, 1e-05
    %v365 = vrsqrt.pop %v363
    %v366 = vrsqrt.pop %v364
    %v369 = vcombine.low %v365, %v366
    %v371 = vunpack.c.l.s4 1966171168
    %v372 = vunpack.c.0.s8 %v371
    %v373 = vlaneseq
    %v374 = vshrl.u32 %v373, 7
    %v375 = vsub.s32 %v372, %v374
    %v376 = vrot.slane %v369, %v375
    %v378 = vunpack.c.l.s4 1966171168
    %v379 = vunpack.c.0.s8 %v378
    %v380 = vlaneseq
    %v381 = vshrl.u32 %v380, 7
    %v382 = vsub.s32 %v379, %v381
    %v383 = vrot.slane %v376, %v382
    %v385 = vmul.f32 %v328, %v383
    %v387 = vlaneseq
    %v388 = vshrl.u32 %v387, 7
    %v389 = vsub.s32 0, %v388
    %v390 = vrot.slane %v385, %v389
    %v391 = vlaneseq
    %v392 = vshrl.u32 %v391, 7
    %v393 = vsub.s32 1, %v392
    %v394 = vrot.slane %v385, %v393
    %v397 = vmul.f32 %v343, %v390
    %v398 = vmul.f32 %v344, %v394
    %v401 = vcombine.low %v397, %v398
    %v403 = vunpack.c.l.s4 1966171168
    %v404 = vunpack.c.0.s8 %v403
    %v405 = vlaneseq
    %v406 = vshrl.u32 %v405, 7
    %v407 = vsub.s32 %v404, %v406
    %v408 = vrot.slane %v401, %v407
    %v410 = vunpack.c.l.s4 1966171168
    %v411 = vunpack.c.0.s8 %v410
    %v412 = vlaneseq
    %v413 = vshrl.u32 %v412, 7
    %v414 = vsub.s32 %v411, %v413
    %v415 = vrot.slane %v408, %v414
    %v417 = vsub.f32 %v329, %v415
    %v418 = vmul.f32 %v322, %v390
    %v419 = vmul.f32 %v324, %v394
    %v421 = vlaneseq
    %v422 = vshrl.u32 %v421, 7
    %v423 = vsub.s32 0, %v422
    %v424 = vrot.slane %v417, %v423
    %v425 = vlaneseq
    %v426 = vshrl.u32 %v425, 7
    %v427 = vsub.s32 1, %v426
    %v428 = vrot.slane %v417, %v427
    %v431 = vadd.f32 %v418, %v424
    %v432 = vadd.f32 %v419, %v428
    %vm433 = vcmp.gt.f32.partialorder %v431, 0.0
    %vm434 = vcmp.gt.f32.partialorder %v432, 0.0
    %v435 = vmul.f32 %v431, 0.2
    %v436 = vmul.f32 %v432, 0.2
    %v437 = vsel %vm433, %v431, %v435
    %v438 = vsel %vm434, %v432, %v436
    %v439 = vpack.c.bf16 %v437, %v437
    %v440 = vpack.c.bf16 %v438, %v438
    %v441 = vld [vmem:[#allocation10] sm:$0xff]
    %v442 = vld [vmem:[#allocation10 + $0x8] sm:$0xff]
    %v443 = vld [vmem:[#allocation10 + $0x10] sm:$0xff]
    %v444 = vld [vmem:[#allocation10 + $0x18] sm:$0xff]
    %v445 = vld [vmem:[#allocation10 + $0x20] sm:$0xff]
    %v446 = vld [vmem:[#allocation10 + $0x28] sm:$0xff]
    %v447 = vld [vmem:[#allocation10 + $0x30] sm:$0xff]
    %v448 = vld [vmem:[#allocation10 + $0x38] sm:$0xff]
    %v449 = vld [vmem:[#allocation10 + $0x40] sm:$0xff]
    %v450 = vld [vmem:[#allocation10 + $0x48] sm:$0xff]
    %v451 = vld [vmem:[#allocation10 + $0x50] sm:$0xff]
    %v452 = vld [vmem:[#allocation10 + $0x58] sm:$0xff]
    %v453 = vld [vmem:[#allocation10 + $0x60] sm:$0xff]
    %v454 = vld [vmem:[#allocation10 + $0x68] sm:$0xff]
    %v455 = vld [vmem:[#allocation10 + $0x70] sm:$0xff]
    %v456 = vld [vmem:[#allocation10 + $0x78] sm:$0xff]
    %v457 = vld [vmem:[#allocation10 + $0x80] sm:$0xff]
    %v458 = vld [vmem:[#allocation10 + $0x88] sm:$0xff]
    %v459 = vld [vmem:[#allocation10 + $0x90] sm:$0xff]
    %v460 = vld [vmem:[#allocation10 + $0x98] sm:$0xff]
    %v461 = vld [vmem:[#allocation10 + $0xa0] sm:$0xff]
    %v462 = vld [vmem:[#allocation10 + $0xa8] sm:$0xff]
    %v463 = vld [vmem:[#allocation10 + $0xb0] sm:$0xff]
    %v464 = vld [vmem:[#allocation10 + $0xb8] sm:$0xff]
    %v465 = vld [vmem:[#allocation10 + $0xc0] sm:$0xff]
    %v466 = vld [vmem:[#allocation10 + $0xc8] sm:$0xff]
    %v467 = vld [vmem:[#allocation10 + $0xd0] sm:$0xff]
    %v468 = vld [vmem:[#allocation10 + $0xd8] sm:$0xff]
    %v469 = vld [vmem:[#allocation10 + $0xe0] sm:$0xff]
    %v470 = vld [vmem:[#allocation10 + $0xe8] sm:$0xff]
    %v471 = vld [vmem:[#allocation10 + $0xf0] sm:$0xff]
    %v472 = vld [vmem:[#allocation10 + $0xf8] sm:$0xff]
    %v473 = vld [vmem:[#allocation10 + $0x100] sm:$0xff]
    %v474 = vld [vmem:[#allocation10 + $0x108] sm:$0xff]
    %v475 = vld [vmem:[#allocation10 + $0x110] sm:$0xff]
    %v476 = vld [vmem:[#allocation10 + $0x118] sm:$0xff]
    %v477 = vld [vmem:[#allocation10 + $0x120] sm:$0xff]
    %v478 = vld [vmem:[#allocation10 + $0x128] sm:$0xff]
    %v479 = vld [vmem:[#allocation10 + $0x130] sm:$0xff]
    %v480 = vld [vmem:[#allocation10 + $0x138] sm:$0xff]
    %v481 = vld [vmem:[#allocation10 + $0x140] sm:$0xff]
    %v482 = vld [vmem:[#allocation10 + $0x148] sm:$0xff]
    %v483 = vld [vmem:[#allocation10 + $0x150] sm:$0xff]
    %v484 = vld [vmem:[#allocation10 + $0x158] sm:$0xff]
    %v485 = vld [vmem:[#allocation10 + $0x160] sm:$0xff]
    %v486 = vld [vmem:[#allocation10 + $0x168] sm:$0xff]
    %v487 = vld [vmem:[#allocation10 + $0x170] sm:$0xff]
    %v488 = vld [vmem:[#allocation10 + $0x178] sm:$0xff]
    %v489 = vld [vmem:[#allocation10 + $0x180] sm:$0xff]
    %v490 = vld [vmem:[#allocation10 + $0x188] sm:$0xff]
    %v491 = vld [vmem:[#allocation10 + $0x190] sm:$0xff]
    %v492 = vld [vmem:[#allocation10 + $0x198] sm:$0xff]
    %v493 = vld [vmem:[#allocation10 + $0x1a0] sm:$0xff]
    %v494 = vld [vmem:[#allocation10 + $0x1a8] sm:$0xff]
    %v495 = vld [vmem:[#allocation10 + $0x1b0] sm:$0xff]
    %v496 = vld [vmem:[#allocation10 + $0x1b8] sm:$0xff]
    %v497 = vld [vmem:[#allocation10 + $0x1c0] sm:$0xff]
    %v498 = vld [vmem:[#allocation10 + $0x1c8] sm:$0xff]
    %v499 = vld [vmem:[#allocation10 + $0x1d0] sm:$0xff]
    %v500 = vld [vmem:[#allocation10 + $0x1d8] sm:$0xff]
    %v501 = vld [vmem:[#allocation10 + $0x1e0] sm:$0xff]
    %v502 = vld [vmem:[#allocation10 + $0x1e8] sm:$0xff]
    %v503 = vld [vmem:[#allocation10 + $0x1f0] sm:$0xff]
    %v504 = vld [vmem:[#allocation10 + $0x1f8] sm:$0xff]
    %v569 = vunpack.c.l.b16 %v441
    %v570 = vunpack.c.h.b16 %v441
    %v571 = vunpack.c.l.b16 %v442
    %v572 = vunpack.c.h.b16 %v442
    %v573 = vunpack.c.l.b16 %v443
    %v574 = vunpack.c.h.b16 %v443
    %v575 = vunpack.c.l.b16 %v444
    %v576 = vunpack.c.h.b16 %v444
    %v577 = vunpack.c.l.b16 %v445
    %v578 = vunpack.c.h.b16 %v445
    %v579 = vunpack.c.l.b16 %v446
    %v580 = vunpack.c.h.b16 %v446
    %v581 = vunpack.c.l.b16 %v447
    %v582 = vunpack.c.h.b16 %v447
    %v583 = vunpack.c.l.b16 %v448
    %v584 = vunpack.c.h.b16 %v448
    %v585 = vunpack.c.l.b16 %v449
    %v586 = vunpack.c.h.b16 %v449
    %v587 = vunpack.c.l.b16 %v450
    %v588 = vunpack.c.h.b16 %v450
    %v589 = vunpack.c.l.b16 %v451
    %v590 = vunpack.c.h.b16 %v451
    %v591 = vunpack.c.l.b16 %v452
    %v592 = vunpack.c.h.b16 %v452
    %v593 = vunpack.c.l.b16 %v453
    %v594 = vunpack.c.h.b16 %v453
    %v595 = vunpack.c.l.b16 %v454
    %v596 = vunpack.c.h.b16 %v454
    %v597 = vunpack.c.l.b16 %v455
    %v598 = vunpack.c.h.b16 %v455
    %v599 = vunpack.c.l.b16 %v456
    %v600 = vunpack.c.h.b16 %v456
    %v601 = vunpack.c.l.b16 %v457
    %v602 = vunpack.c.h.b16 %v457
    %v603 = vunpack.c.l.b16 %v458
    %v604 = vunpack.c.h.b16 %v458
    %v605 = vunpack.c.l.b16 %v459
    %v606 = vunpack.c.h.b16 %v459
    %v607 = vunpack.c.l.b16 %v460
    %v608 = vunpack.c.h.b16 %v460
    %v609 = vunpack.c.l.b16 %v461
    %v610 = vunpack.c.h.b16 %v461
    %v611 = vunpack.c.l.b16 %v462
    %v612 = vunpack.c.h.b16 %v462
    %v613 = vunpack.c.l.b16 %v463
    %v614 = vunpack.c.h.b16 %v463
    %v615 = vunpack.c.l.b16 %v464
    %v616 = vunpack.c.h.b16 %v464
    %v617 = vunpack.c.l.b16 %v465
    %v618 = vunpack.c.h.b16 %v465
    %v619 = vunpack.c.l.b16 %v466
    %v620 = vunpack.c.h.b16 %v466
    %v621 = vunpack.c.l.b16 %v467
    %v622 = vunpack.c.h.b16 %v467
    %v623 = vunpack.c.l.b16 %v468
    %v624 = vunpack.c.h.b16 %v468
    %v625 = vunpack.c.l.b16 %v469
    %v626 = vunpack.c.h.b16 %v469
    %v627 = vunpack.c.l.b16 %v470
    %v628 = vunpack.c.h.b16 %v470
    %v629 = vunpack.c.l.b16 %v471
    %v630 = vunpack.c.h.b16 %v471
    %v631 = vunpack.c.l.b16 %v472
    %v632 = vunpack.c.h.b16 %v472
    %v633 = vunpack.c.l.b16 %v473
    %v634 = vunpack.c.h.b16 %v473
    %v635 = vunpack.c.l.b16 %v474
    %v636 = vunpack.c.h.b16 %v474
    %v637 = vunpack.c.l.b16 %v475
    %v638 = vunpack.c.h.b16 %v475
    %v639 = vunpack.c.l.b16 %v476
    %v640 = vunpack.c.h.b16 %v476
    %v641 = vunpack.c.l.b16 %v477
    %v642 = vunpack.c.h.b16 %v477
    %v643 = vunpack.c.l.b16 %v478
    %v644 = vunpack.c.h.b16 %v478
    %v645 = vunpack.c.l.b16 %v479
    %v646 = vunpack.c.h.b16 %v479
    %v647 = vunpack.c.l.b16 %v480
    %v648 = vunpack.c.h.b16 %v480
    %v649 = vunpack.c.l.b16 %v481
    %v650 = vunpack.c.h.b16 %v481
    %v651 = vunpack.c.l.b16 %v482
    %v652 = vunpack.c.h.b16 %v482
    %v653 = vunpack.c.l.b16 %v483
    %v654 = vunpack.c.h.b16 %v483
    %v655 = vunpack.c.l.b16 %v484
    %v656 = vunpack.c.h.b16 %v484
    %v657 = vunpack.c.l.b16 %v485
    %v658 = vunpack.c.h.b16 %v485
    %v659 = vunpack.c.l.b16 %v486
    %v660 = vunpack.c.h.b16 %v486
    %v661 = vunpack.c.l.b16 %v487
    %v662 = vunpack.c.h.b16 %v487
    %v663 = vunpack.c.l.b16 %v488
    %v664 = vunpack.c.h.b16 %v488
    %v665 = vunpack.c.l.b16 %v489
    %v666 = vunpack.c.h.b16 %v489
    %v667 = vunpack.c.l.b16 %v490
    %v668 = vunpack.c.h.b16 %v490
    %v669 = vunpack.c.l.b16 %v491
    %v670 = vunpack.c.h.b16 %v491
    %v671 = vunpack.c.l.b16 %v492
    %v672 = vunpack.c.h.b16 %v492
    %v673 = vunpack.c.l.b16 %v493
    %v674 = vunpack.c.h.b16 %v493
    %v675 = vunpack.c.l.b16 %v494
    %v676 = vunpack.c.h.b16 %v494
    %v677 = vunpack.c.l.b16 %v495
    %v678 = vunpack.c.h.b16 %v495
    %v679 = vunpack.c.l.b16 %v496
    %v680 = vunpack.c.h.b16 %v496
    %v681 = vunpack.c.l.b16 %v497
    %v682 = vunpack.c.h.b16 %v497
    %v683 = vunpack.c.l.b16 %v498
    %v684 = vunpack.c.h.b16 %v498
    %v685 = vunpack.c.l.b16 %v499
    %v686 = vunpack.c.h.b16 %v499
    %v687 = vunpack.c.l.b16 %v500
    %v688 = vunpack.c.h.b16 %v500
    %v689 = vunpack.c.l.b16 %v501
    %v690 = vunpack.c.h.b16 %v501
    %v691 = vunpack.c.l.b16 %v502
    %v692 = vunpack.c.h.b16 %v502
    %v693 = vunpack.c.l.b16 %v503
    %v694 = vunpack.c.h.b16 %v503
    %v695 = vunpack.c.l.b16 %v504
    %v696 = vunpack.c.h.b16 %v504
    %v697 = vpack.c.b16 %v573, %v569
    %v698 = vpack.c.b16 %v574, %v570
    %v699 = vpack.c.b16 %v575, %v571
    %v700 = vpack.c.b16 %v576, %v572
    %v701 = vpack.c.b16 %v581, %v577
    %v702 = vpack.c.b16 %v582, %v578
    %v703 = vpack.c.b16 %v583, %v579
    %v704 = vpack.c.b16 %v584, %v580
    %v705 = vpack.c.b16 %v589, %v585
    %v706 = vpack.c.b16 %v590, %v586
    %v707 = vpack.c.b16 %v591, %v587
    %v708 = vpack.c.b16 %v592, %v588
    %v709 = vpack.c.b16 %v597, %v593
    %v710 = vpack.c.b16 %v598, %v594
    %v711 = vpack.c.b16 %v599, %v595
    %v712 = vpack.c.b16 %v600, %v596
    %v713 = vpack.c.b16 %v605, %v601
    %v714 = vpack.c.b16 %v606, %v602
    %v715 = vpack.c.b16 %v607, %v603
    %v716 = vpack.c.b16 %v608, %v604
    %v717 = vpack.c.b16 %v613, %v609
    %v718 = vpack.c.b16 %v614, %v610
    %v719 = vpack.c.b16 %v615, %v611
    %v720 = vpack.c.b16 %v616, %v612
    %v721 = vpack.c.b16 %v621, %v617
    %v722 = vpack.c.b16 %v622, %v618
    %v723 = vpack.c.b16 %v623, %v619
    %v724 = vpack.c.b16 %v624, %v620
    %v725 = vpack.c.b16 %v629, %v625
    %v726 = vpack.c.b16 %v630, %v626
    %v727 = vpack.c.b16 %v631, %v627
    %v728 = vpack.c.b16 %v632, %v628
    %v729 = vpack.c.b16 %v637, %v633
    %v730 = vpack.c.b16 %v638, %v634
    %v731 = vpack.c.b16 %v639, %v635
    %v732 = vpack.c.b16 %v640, %v636
    %v733 = vpack.c.b16 %v645, %v641
    %v734 = vpack.c.b16 %v646, %v642
    %v735 = vpack.c.b16 %v647, %v643
    %v736 = vpack.c.b16 %v648, %v644
    %v737 = vpack.c.b16 %v653, %v649
    %v738 = vpack.c.b16 %v654, %v650
    %v739 = vpack.c.b16 %v655, %v651
    %v740 = vpack.c.b16 %v656, %v652
    %v741 = vpack.c.b16 %v661, %v657
    %v742 = vpack.c.b16 %v662, %v658
    %v743 = vpack.c.b16 %v663, %v659
    %v744 = vpack.c.b16 %v664, %v660
    %v745 = vpack.c.b16 %v669, %v665
    %v746 = vpack.c.b16 %v670, %v666
    %v747 = vpack.c.b16 %v671, %v667
    %v748 = vpack.c.b16 %v672, %v668
    %v749 = vpack.c.b16 %v677, %v673
    %v750 = vpack.c.b16 %v678, %v674
    %v751 = vpack.c.b16 %v679, %v675
    %v752 = vpack.c.b16 %v680, %v676
    %v753 = vpack.c.b16 %v685, %v681
    %v754 = vpack.c.b16 %v686, %v682
    %v755 = vpack.c.b16 %v687, %v683
    %v756 = vpack.c.b16 %v688, %v684
    %v757 = vpack.c.b16 %v693, %v689
    %v758 = vpack.c.b16 %v694, %v690
    %v759 = vpack.c.b16 %v695, %v691
    %v760 = vpack.c.b16 %v696, %v692
    %825 = vmatprep.subr.bf16.mxu0 %v726
    %826 = vmatpush1.bf16.msra.mxu0 %v725
    %827 = vmatprep.subr.bf16.mxu0 %v722
    %828 = vmatpush1.bf16.msra.mxu0 %v721
    %829 = vmatprep.subr.bf16.mxu0 %v718
    %830 = vmatpush1.bf16.msra.mxu0 %v717
    %831 = vmatprep.subr.bf16.mxu0 %v714
    %832 = vmatpush1.bf16.msra.mxu0 %v713
    %833 = vmatprep.subr.bf16.mxu0 %v710
    %834 = vmatpush1.bf16.msra.mxu0 %v709
    %835 = vmatprep.subr.bf16.mxu0 %v706
    %836 = vmatpush1.bf16.msra.mxu0 %v705
    %837 = vmatprep.subr.bf16.mxu0 %v702
    %838 = vmatpush1.bf16.msra.mxu0 %v701
    %839 = vmatprep.subr.bf16.mxu0 %v698
    %840 = vmatpush1.bf16.msra.mxu0 %v697
    %841 = vmatprep.subr.bf16.mxu0 %v758
    %842 = vmatpush2.bf16.msra.mxu0 %v757
    %843 = vmatprep.subr.bf16.mxu0 %v754
    %844 = vmatpush2.bf16.msra.mxu0 %v753
    %845 = vmatprep.subr.bf16.mxu0 %v750
    %846 = vmatpush2.bf16.msra.mxu0 %v749
    %847 = vmatprep.subr.bf16.mxu0 %v746
    %848 = vmatpush2.bf16.msra.mxu0 %v745
    %849 = vmatprep.subr.bf16.mxu0 %v742
    %850 = vmatpush2.bf16.msra.mxu0 %v741
    %851 = vmatprep.subr.bf16.mxu0 %v738
    %852 = vmatpush2.bf16.msra.mxu0 %v737
    %853 = vmatprep.subr.bf16.mxu0 %v734
    %854 = vmatpush2.bf16.msra.mxu0 %v733
    %855 = vmatprep.subr.bf16.mxu0 %v730
    %856 = vmatpush2.bf16.msra.mxu0 %v729
    %857 = vmatprep.mubr.bf16.mxu0 %v440
    %858 = vmatmul.mubr.bf16.gmra.mxu0 %v439
    %v859 = vpop.f32.mrf.mxu0
    %v860 = vadd.f32 0.0, %v859
    %v861 = vpop.f32.mrf.mxu0
    %v862 = vadd.f32 0.0, %v861
    %v863 = vpop.f32.mrf.mxu0
    %v864 = vpop.f32.mrf.mxu0
    %865 = vdwg.mxu0
    %866 = vmatprep.subr.bf16.mxu0 %v728
    %867 = vmatpush1.bf16.msra.mxu0 %v727
    %868 = vmatprep.subr.bf16.mxu0 %v724
    %869 = vmatpush1.bf16.msra.mxu0 %v723
    %870 = vmatprep.subr.bf16.mxu0 %v720
    %871 = vmatpush1.bf16.msra.mxu0 %v719
    %872 = vmatprep.subr.bf16.mxu0 %v716
    %873 = vmatpush1.bf16.msra.mxu0 %v715
    %874 = vmatprep.subr.bf16.mxu0 %v712
    %875 = vmatpush1.bf16.msra.mxu0 %v711
    %876 = vmatprep.subr.bf16.mxu0 %v708
    %877 = vmatpush1.bf16.msra.mxu0 %v707
    %878 = vmatprep.subr.bf16.mxu0 %v704
    %879 = vmatpush1.bf16.msra.mxu0 %v703
    %880 = vmatprep.subr.bf16.mxu0 %v700
    %881 = vmatpush1.bf16.msra.mxu0 %v699
    %882 = vmatprep.subr.bf16.mxu0 %v760
    %883 = vmatpush2.bf16.msra.mxu0 %v759
    %884 = vmatprep.subr.bf16.mxu0 %v756
    %885 = vmatpush2.bf16.msra.mxu0 %v755
    %886 = vmatprep.subr.bf16.mxu0 %v752
    %887 = vmatpush2.bf16.msra.mxu0 %v751
    %888 = vmatprep.subr.bf16.mxu0 %v748
    %889 = vmatpush2.bf16.msra.mxu0 %v747
    %890 = vmatprep.subr.bf16.mxu0 %v744
    %891 = vmatpush2.bf16.msra.mxu0 %v743
    %892 = vmatprep.subr.bf16.mxu0 %v740
    %893 = vmatpush2.bf16.msra.mxu0 %v739
    %894 = vmatprep.subr.bf16.mxu0 %v736
    %895 = vmatpush2.bf16.msra.mxu0 %v735
    %896 = vmatprep.subr.bf16.mxu0 %v732
    %897 = vmatpush2.bf16.msra.mxu0 %v731
    %898 = vmatprep.mubr.bf16.mxu0 %v440
    %899 = vmatmul.mubr.bf16.gmra.mxu0 %v439
    %v900 = vpop.f32.mrf.mxu0
    %v901 = vadd.f32 0.0, %v900
    %v902 = vpop.f32.mrf.mxu0
    %v903 = vadd.f32 0.0, %v902
    %v904 = vpop.f32.mrf.mxu0
    %v905 = vpop.f32.mrf.mxu0
    %906 = vdwg.mxu0
    %v907 = vld [vmem:[#allocation11] sm:$0xf]
    %v908 = vld [vmem:[#allocation13] sm:$0xf]
    %v909 = vrot.slane %v860, 4
    %v910 = vadd.f32 %v860, %v909
    %v911 = vrot.slane %v910, 2
    %v912 = vadd.f32 %v910, %v911
    %v913 = vrot.slane %v912, 1
    %v914 = vadd.f32 %v912, %v913
    %v915 = vrot.slane %v862, 4
    %v916 = vadd.f32 %v862, %v915
    %v917 = vrot.slane %v916, 2
    %v918 = vadd.f32 %v916, %v917
    %v919 = vrot.slane %v918, 1
    %v920 = vadd.f32 %v918, %v919
    %v921 = vrot.slane %v901, 4
    %v922 = vadd.f32 %v901, %v921
    %v923 = vrot.slane %v922, 2
    %v924 = vadd.f32 %v922, %v923
    %v925 = vrot.slane %v924, 1
    %v926 = vadd.f32 %v924, %v925
    %v927 = vrot.slane %v903, 4
    %v928 = vadd.f32 %v903, %v927
    %v929 = vrot.slane %v928, 2
    %v930 = vadd.f32 %v928, %v929
    %v931 = vrot.slane %v930, 1
    %v932 = vadd.f32 %v930, %v931
    %v933 = vmul.f32 %v914, %v342
    %v934 = vmul.f32 %v920, %v342
    %v935 = vmul.f32 %v926, %v342
    %v936 = vmul.f32 %v932, %v342
    %v937 = vsub.f32 %v860, %v933
    %v938 = vsub.f32 %v862, %v934
    %v939 = vsub.f32 %v901, %v935
    %v940 = vsub.f32 %v903, %v936
    %v941 = vmul.f32 %v937, %v937
    %v942 = vmul.f32 %v938, %v938
    %v943 = vmul.f32 %v939, %v939
    %v944 = vmul.f32 %v940, %v940
    %v945 = vrot.slane %v941, 4
    %v946 = vadd.f32 %v941, %v945
    %v947 = vrot.slane %v946, 2
    %v948 = vadd.f32 %v946, %v947
    %v949 = vrot.slane %v948, 1
    %v950 = vadd.f32 %v948, %v949
    %v951 = vrot.slane %v942, 4
    %v952 = vadd.f32 %v942, %v951
    %v953 = vrot.slane %v952, 2
    %v954 = vadd.f32 %v952, %v953
    %v955 = vrot.slane %v954, 1
    %v956 = vadd.f32 %v954, %v955
    %v957 = vrot.slane %v943, 4
    %v958 = vadd.f32 %v943, %v957
    %v959 = vrot.slane %v958, 2
    %v960 = vadd.f32 %v958, %v959
    %v961 = vrot.slane %v960, 1
    %v962 = vadd.f32 %v960, %v961
    %v963 = vrot.slane %v944, 4
    %v964 = vadd.f32 %v944, %v963
    %v965 = vrot.slane %v964, 2
    %v966 = vadd.f32 %v964, %v965
    %v967 = vrot.slane %v966, 1
    %v968 = vadd.f32 %v966, %v967
    %v969 = vmul.f32 %v950, %v342
    %v970 = vmul.f32 %v956, %v342
    %v971 = vmul.f32 %v962, %v342
    %v972 = vmul.f32 %v968, %v342
    %v973 = vadd.f32 %v969, 1e-05
    %v974 = vadd.f32 %v970, 1e-05
    %v975 = vadd.f32 %v971, 1e-05
    %v976 = vadd.f32 %v972, 1e-05
    %v977 = vrsqrt.pop %v973
    %v978 = vrsqrt.pop %v974
    %v979 = vrsqrt.pop %v975
    %v980 = vrsqrt.pop %v976
    %v985 = vcombine.low %v977, %v978
    %v986 = vcombine.low %v979, %v980
    %v988 = vunpack.c.l.s4 1966171168
    %v989 = vunpack.c.0.s8 %v988
    %v990 = vlaneseq
    %v991 = vshrl.u32 %v990, 7
    %v992 = vsub.s32 %v989, %v991
    %v993 = vrot.slane %v985, %v992
    %v995 = vunpack.c.l.s4 1966171168
    %v996 = vunpack.c.0.s8 %v995
    %v997 = vlaneseq
    %v998 = vshrl.u32 %v997, 7
    %v999 = vsub.s32 %v996, %v998
    %v1000 = vrot.slane %v986, %v999
    %v1001 = vcombine.low %v993, %v1000
    %v1003 = vunpack.c.l.s4 1966171168
    %v1004 = vunpack.c.0.s8 %v1003
    %v1005 = vlaneseq
    %v1006 = vshrl.u32 %v1005, 7
    %v1007 = vsub.s32 %v1004, %v1006
    %v1008 = vrot.slane %v1001, %v1007
    %v1010 = vmul.f32 %v907, %v1008
    %v1012 = vlaneseq
    %v1013 = vshrl.u32 %v1012, 7
    %v1014 = vsub.s32 0, %v1013
    %v1015 = vrot.slane %v1010, %v1014
    %v1016 = vlaneseq
    %v1017 = vshrl.u32 %v1016, 7
    %v1018 = vsub.s32 1, %v1017
    %v1019 = vrot.slane %v1010, %v1018
    %v1020 = vlaneseq
    %v1021 = vshrl.u32 %v1020, 7
    %v1022 = vsub.s32 2, %v1021
    %v1023 = vrot.slane %v1010, %v1022
    %v1024 = vlaneseq
    %v1025 = vshrl.u32 %v1024, 7
    %v1026 = vsub.s32 3, %v1025
    %v1027 = vrot.slane %v1010, %v1026
    %v1032 = vmul.f32 %v933, %v1015
    %v1033 = vmul.f32 %v934, %v1019
    %v1034 = vmul.f32 %v935, %v1023
    %v1035 = vmul.f32 %v936, %v1027
    %v1040 = vcombine.low %v1032, %v1033
    %v1041 = vcombine.low %v1034, %v1035
    %v1043 = vunpack.c.l.s4 1966171168
    %v1044 = vunpack.c.0.s8 %v1043
    %v1045 = vlaneseq
    %v1046 = vshrl.u32 %v1045, 7
    %v1047 = vsub.s32 %v1044, %v1046
    %v1048 = vrot.slane %v1040, %v1047
    %v1050 = vunpack.c.l.s4 1966171168
    %v1051 = vunpack.c.0.s8 %v1050
    %v1052 = vlaneseq
    %v1053 = vshrl.u32 %v1052, 7
    %v1054 = vsub.s32 %v1051, %v1053
    %v1055 = vrot.slane %v1041, %v1054
    %v1056 = vcombine.low %v1048, %v1055
    %v1058 = vunpack.c.l.s4 1966171168
    %v1059 = vunpack.c.0.s8 %v1058
    %v1060 = vlaneseq
    %v1061 = vshrl.u32 %v1060, 7
    %v1062 = vsub.s32 %v1059, %v1061
    %v1063 = vrot.slane %v1056, %v1062
    %v1065 = vsub.f32 %v908, %v1063
    %v1066 = vmul.f32 %v860, %v1015
    %v1067 = vmul.f32 %v862, %v1019
    %v1068 = vmul.f32 %v901, %v1023
    %v1069 = vmul.f32 %v903, %v1027
    %v1071 = vlaneseq
    %v1072 = vshrl.u32 %v1071, 7
    %v1073 = vsub.s32 0, %v1072
    %v1074 = vrot.slane %v1065, %v1073
    %v1075 = vlaneseq
    %v1076 = vshrl.u32 %v1075, 7
    %v1077 = vsub.s32 1, %v1076
    %v1078 = vrot.slane %v1065, %v1077
    %v1079 = vlaneseq
    %v1080 = vshrl.u32 %v1079, 7
    %v1081 = vsub.s32 2, %v1080
    %v1082 = vrot.slane %v1065, %v1081
    %v1083 = vlaneseq
    %v1084 = vshrl.u32 %v1083, 7
    %v1085 = vsub.s32 3, %v1084
    %v1086 = vrot.slane %v1065, %v1085
    %v1091 = vadd.f32 %v1066, %v1074
    %v1092 = vadd.f32 %v1067, %v1078
    %v1093 = vadd.f32 %v1068, %v1082
    %v1094 = vadd.f32 %v1069, %v1086
    %vm1095 = vcmp.gt.f32.partialorder %v1091, 0.0
    %vm1096 = vcmp.gt.f32.partialorder %v1092, 0.0
    %vm1097 = vcmp.gt.f32.partialorder %v1093, 0.0
    %vm1098 = vcmp.gt.f32.partialorder %v1094, 0.0
    %v1099 = vmul.f32 %v1091, 0.2
    %v1100 = vmul.f32 %v1092, 0.2
    %v1101 = vmul.f32 %v1093, 0.2
    %v1102 = vmul.f32 %v1094, 0.2
    %v1103 = vsel %vm1095, %v1091, %v1099
    %v1104 = vsel %vm1096, %v1092, %v1100
    %v1105 = vsel %vm1097, %v1093, %v1101
    %v1106 = vsel %vm1098, %v1094, %v1102
    %v1107 = vpack.c.bf16 %v1103, %v1103
    %v1108 = vpack.c.bf16 %v1104, %v1104
    %v1109 = vpack.c.bf16 %v1105, %v1105
    %v1110 = vpack.c.bf16 %v1106, %v1106
    %v1111 = vld [vmem:[#allocation14] sm:$0xff]
    %v1112 = vld [vmem:[#allocation14 + $0x8] sm:$0xff]
    %v1113 = vld [vmem:[#allocation14 + $0x10] sm:$0xff]
    %v1114 = vld [vmem:[#allocation14 + $0x18] sm:$0xff]
    %v1115 = vld [vmem:[#allocation14 + $0x20] sm:$0xff]
    %v1116 = vld [vmem:[#allocation14 + $0x28] sm:$0xff]
    %v1117 = vld [vmem:[#allocation14 + $0x30] sm:$0xff]
    %v1118 = vld [vmem:[#allocation14 + $0x38] sm:$0xff]
    %v1119 = vld [vmem:[#allocation14 + $0x40] sm:$0xff]
    %v1120 = vld [vmem:[#allocation14 + $0x48] sm:$0xff]
    %v1121 = vld [vmem:[#allocation14 + $0x50] sm:$0xff]
    %v1122 = vld [vmem:[#allocation14 + $0x58] sm:$0xff]
    %v1123 = vld [vmem:[#allocation14 + $0x60] sm:$0xff]
    %v1124 = vld [vmem:[#allocation14 + $0x68] sm:$0xff]
    %v1125 = vld [vmem:[#allocation14 + $0x70] sm:$0xff]
    %v1126 = vld [vmem:[#allocation14 + $0x78] sm:$0xff]
    %v1127 = vld [vmem:[#allocation14 + $0x80] sm:$0xff]
    %v1128 = vld [vmem:[#allocation14 + $0x88] sm:$0xff]
    %v1129 = vld [vmem:[#allocation14 + $0x90] sm:$0xff]
    %v1130 = vld [vmem:[#allocation14 + $0x98] sm:$0xff]
    %v1131 = vld [vmem:[#allocation14 + $0xa0] sm:$0xff]
    %v1132 = vld [vmem:[#allocation14 + $0xa8] sm:$0xff]
    %v1133 = vld [vmem:[#allocation14 + $0xb0] sm:$0xff]
    %v1134 = vld [vmem:[#allocation14 + $0xb8] sm:$0xff]
    %v1135 = vld [vmem:[#allocation14 + $0xc0] sm:$0xff]
    %v1136 = vld [vmem:[#allocation14 + $0xc8] sm:$0xff]
    %v1137 = vld [vmem:[#allocation14 + $0xd0] sm:$0xff]
    %v1138 = vld [vmem:[#allocation14 + $0xd8] sm:$0xff]
    %v1139 = vld [vmem:[#allocation14 + $0xe0] sm:$0xff]
    %v1140 = vld [vmem:[#allocation14 + $0xe8] sm:$0xff]
    %v1141 = vld [vmem:[#allocation14 + $0xf0] sm:$0xff]
    %v1142 = vld [vmem:[#allocation14 + $0xf8] sm:$0xff]
    %v1143 = vld [vmem:[#allocation14 + $0x100] sm:$0xff]
    %v1144 = vld [vmem:[#allocation14 + $0x108] sm:$0xff]
    %v1145 = vld [vmem:[#allocation14 + $0x110] sm:$0xff]
    %v1146 = vld [vmem:[#allocation14 + $0x118] sm:$0xff]
    %v1147 = vld [vmem:[#allocation14 + $0x120] sm:$0xff]
    %v1148 = vld [vmem:[#allocation14 + $0x128] sm:$0xff]
    %v1149 = vld [vmem:[#allocation14 + $0x130] sm:$0xff]
    %v1150 = vld [vmem:[#allocation14 + $0x138] sm:$0xff]
    %v1151 = vld [vmem:[#allocation14 + $0x140] sm:$0xff]
    %v1152 = vld [vmem:[#allocation14 + $0x148] sm:$0xff]
    %v1153 = vld [vmem:[#allocation14 + $0x150] sm:$0xff]
    %v1154 = vld [vmem:[#allocation14 + $0x158] sm:$0xff]
    %v1155 = vld [vmem:[#allocation14 + $0x160] sm:$0xff]
    %v1156 = vld [vmem:[#allocation14 + $0x168] sm:$0xff]
    %v1157 = vld [vmem:[#allocation14 + $0x170] sm:$0xff]
    %v1158 = vld [vmem:[#allocation14 + $0x178] sm:$0xff]
    %v1159 = vld [vmem:[#allocation14 + $0x180] sm:$0xff]
    %v1160 = vld [vmem:[#allocation14 + $0x188] sm:$0xff]
    %v1161 = vld [vmem:[#allocation14 + $0x190] sm:$0xff]
    %v1162 = vld [vmem:[#allocation14 + $0x198] sm:$0xff]
    %v1163 = vld [vmem:[#allocation14 + $0x1a0] sm:$0xff]
    %v1164 = vld [vmem:[#allocation14 + $0x1a8] sm:$0xff]
    %v1165 = vld [vmem:[#allocation14 + $0x1b0] sm:$0xff]
    %v1166 = vld [vmem:[#allocation14 + $0x1b8] sm:$0xff]
    %v1167 = vld [vmem:[#allocation14 + $0x1c0] sm:$0xff]
    %v1168 = vld [vmem:[#allocation14 + $0x1c8] sm:$0xff]
    %v1169 = vld [vmem:[#allocation14 + $0x1d0] sm:$0xff]
    %v1170 = vld [vmem:[#allocation14 + $0x1d8] sm:$0xff]
    %v1171 = vld [vmem:[#allocation14 + $0x1e0] sm:$0xff]
    %v1172 = vld [vmem:[#allocation14 + $0x1e8] sm:$0xff]
    %v1173 = vld [vmem:[#allocation14 + $0x1f0] sm:$0xff]
    %v1174 = vld [vmem:[#allocation14 + $0x1f8] sm:$0xff]
    %v1175 = vld [vmem:[#allocation14 + $0x200] sm:$0xff]
    %v1176 = vld [vmem:[#allocation14 + $0x208] sm:$0xff]
    %v1177 = vld [vmem:[#allocation14 + $0x210] sm:$0xff]
    %v1178 = vld [vmem:[#allocation14 + $0x218] sm:$0xff]
    %v1179 = vld [vmem:[#allocation14 + $0x220] sm:$0xff]
    %v1180 = vld [vmem:[#allocation14 + $0x228] sm:$0xff]
    %v1181 = vld [vmem:[#allocation14 + $0x230] sm:$0xff]
    %v1182 = vld [vmem:[#allocation14 + $0x238] sm:$0xff]
    %v1183 = vld [vmem:[#allocation14 + $0x240] sm:$0xff]
    %v1184 = vld [vmem:[#allocation14 + $0x248] sm:$0xff]
    %v1185 = vld [vmem:[#allocation14 + $0x250] sm:$0xff]
    %v1186 = vld [vmem:[#allocation14 + $0x258] sm:$0xff]
    %v1187 = vld [vmem:[#allocation14 + $0x260] sm:$0xff]
    %v1188 = vld [vmem:[#allocation14 + $0x268] sm:$0xff]
    %v1189 = vld [vmem:[#allocation14 + $0x270] sm:$0xff]
    %v1190 = vld [vmem:[#allocation14 + $0x278] sm:$0xff]
    %v1191 = vld [vmem:[#allocation14 + $0x280] sm:$0xff]
    %v1192 = vld [vmem:[#allocation14 + $0x288] sm:$0xff]
    %v1193 = vld [vmem:[#allocation14 + $0x290] sm:$0xff]
    %v1194 = vld [vmem:[#allocation14 + $0x298] sm:$0xff]
    %v1195 = vld [vmem:[#allocation14 + $0x2a0] sm:$0xff]
    %v1196 = vld [vmem:[#allocation14 + $0x2a8] sm:$0xff]
    %v1197 = vld [vmem:[#allocation14 + $0x2b0] sm:$0xff]
    %v1198 = vld [vmem:[#allocation14 + $0x2b8] sm:$0xff]
    %v1199 = vld [vmem:[#allocation14 + $0x2c0] sm:$0xff]
    %v1200 = vld [vmem:[#allocation14 + $0x2c8] sm:$0xff]
    %v1201 = vld [vmem:[#allocation14 + $0x2d0] sm:$0xff]
    %v1202 = vld [vmem:[#allocation14 + $0x2d8] sm:$0xff]
    %v1203 = vld [vmem:[#allocation14 + $0x2e0] sm:$0xff]
    %v1204 = vld [vmem:[#allocation14 + $0x2e8] sm:$0xff]
    %v1205 = vld [vmem:[#allocation14 + $0x2f0] sm:$0xff]
    %v1206 = vld [vmem:[#allocation14 + $0x2f8] sm:$0xff]
    %v1207 = vld [vmem:[#allocation14 + $0x300] sm:$0xff]
    %v1208 = vld [vmem:[#allocation14 + $0x308] sm:$0xff]
    %v1209 = vld [vmem:[#allocation14 + $0x310] sm:$0xff]
    %v1210 = vld [vmem:[#allocation14 + $0x318] sm:$0xff]
    %v1211 = vld [vmem:[#allocation14 + $0x320] sm:$0xff]
    %v1212 = vld [vmem:[#allocation14 + $0x328] sm:$0xff]
    %v1213 = vld [vmem:[#allocation14 + $0x330] sm:$0xff]
    %v1214 = vld [vmem:[#allocation14 + $0x338] sm:$0xff]
    %v1215 = vld [vmem:[#allocation14 + $0x340] sm:$0xff]
    %v1216 = vld [vmem:[#allocation14 + $0x348] sm:$0xff]
    %v1217 = vld [vmem:[#allocation14 + $0x350] sm:$0xff]
    %v1218 = vld [vmem:[#allocation14 + $0x358] sm:$0xff]
    %v1219 = vld [vmem:[#allocation14 + $0x360] sm:$0xff]
    %v1220 = vld [vmem:[#allocation14 + $0x368] sm:$0xff]
    %v1221 = vld [vmem:[#allocation14 + $0x370] sm:$0xff]
    %v1222 = vld [vmem:[#allocation14 + $0x378] sm:$0xff]
    %v1223 = vld [vmem:[#allocation14 + $0x380] sm:$0xff]
    %v1224 = vld [vmem:[#allocation14 + $0x388] sm:$0xff]
    %v1225 = vld [vmem:[#allocation14 + $0x390] sm:$0xff]
    %v1226 = vld [vmem:[#allocation14 + $0x398] sm:$0xff]
    %v1227 = vld [vmem:[#allocation14 + $0x3a0] sm:$0xff]
    %v1228 = vld [vmem:[#allocation14 + $0x3a8] sm:$0xff]
    %v1229 = vld [vmem:[#allocation14 + $0x3b0] sm:$0xff]
    %v1230 = vld [vmem:[#allocation14 + $0x3b8] sm:$0xff]
    %v1231 = vld [vmem:[#allocation14 + $0x3c0] sm:$0xff]
    %v1232 = vld [vmem:[#allocation14 + $0x3c8] sm:$0xff]
    %v1233 = vld [vmem:[#allocation14 + $0x3d0] sm:$0xff]
    %v1234 = vld [vmem:[#allocation14 + $0x3d8] sm:$0xff]
    %v1235 = vld [vmem:[#allocation14 + $0x3e0] sm:$0xff]
    %v1236 = vld [vmem:[#allocation14 + $0x3e8] sm:$0xff]
    %v1237 = vld [vmem:[#allocation14 + $0x3f0] sm:$0xff]
    %v1238 = vld [vmem:[#allocation14 + $0x3f8] sm:$0xff]
    %v1239 = vld [vmem:[#allocation14 + $0x400] sm:$0xff]
    %v1240 = vld [vmem:[#allocation14 + $0x408] sm:$0xff]
    %v1241 = vld [vmem:[#allocation14 + $0x410] sm:$0xff]
    %v1242 = vld [vmem:[#allocation14 + $0x418] sm:$0xff]
    %v1243 = vld [vmem:[#allocation14 + $0x420] sm:$0xff]
    %v1244 = vld [vmem:[#allocation14 + $0x428] sm:$0xff]
    %v1245 = vld [vmem:[#allocation14 + $0x430] sm:$0xff]
    %v1246 = vld [vmem:[#allocation14 + $0x438] sm:$0xff]
    %v1247 = vld [vmem:[#allocation14 + $0x440] sm:$0xff]
    %v1248 = vld [vmem:[#allocation14 + $0x448] sm:$0xff]
    %v1249 = vld [vmem:[#allocation14 + $0x450] sm:$0xff]
    %v1250 = vld [vmem:[#allocation14 + $0x458] sm:$0xff]
    %v1251 = vld [vmem:[#allocation14 + $0x460] sm:$0xff]
    %v1252 = vld [vmem:[#allocation14 + $0x468] sm:$0xff]
    %v1253 = vld [vmem:[#allocation14 + $0x470] sm:$0xff]
    %v1254 = vld [vmem:[#allocation14 + $0x478] sm:$0xff]
    %v1255 = vld [vmem:[#allocation14 + $0x480] sm:$0xff]
    %v1256 = vld [vmem:[#allocation14 + $0x488] sm:$0xff]
    %v1257 = vld [vmem:[#allocation14 + $0x490] sm:$0xff]
    %v1258 = vld [vmem:[#allocation14 + $0x498] sm:$0xff]
    %v1259 = vld [vmem:[#allocation14 + $0x4a0] sm:$0xff]
    %v1260 = vld [vmem:[#allocation14 + $0x4a8] sm:$0xff]
    %v1261 = vld [vmem:[#allocation14 + $0x4b0] sm:$0xff]
    %v1262 = vld [vmem:[#allocation14 + $0x4b8] sm:$0xff]
    %v1263 = vld [vmem:[#allocation14 + $0x4c0] sm:$0xff]
    %v1264 = vld [vmem:[#allocation14 + $0x4c8] sm:$0xff]
    %v1265 = vld [vmem:[#allocation14 + $0x4d0] sm:$0xff]
    %v1266 = vld [vmem:[#allocation14 + $0x4d8] sm:$0xff]
    %v1267 = vld [vmem:[#allocation14 + $0x4e0] sm:$0xff]
    %v1268 = vld [vmem:[#allocation14 + $0x4e8] sm:$0xff]
    %v1269 = vld [vmem:[#allocation14 + $0x4f0] sm:$0xff]
    %v1270 = vld [vmem:[#allocation14 + $0x4f8] sm:$0xff]
    %v1271 = vld [vmem:[#allocation14 + $0x500] sm:$0xff]
    %v1272 = vld [vmem:[#allocation14 + $0x508] sm:$0xff]
    %v1273 = vld [vmem:[#allocation14 + $0x510] sm:$0xff]
    %v1274 = vld [vmem:[#allocation14 + $0x518] sm:$0xff]
    %v1275 = vld [vmem:[#allocation14 + $0x520] sm:$0xff]
    %v1276 = vld [vmem:[#allocation14 + $0x528] sm:$0xff]
    %v1277 = vld [vmem:[#allocation14 + $0x530] sm:$0xff]
    %v1278 = vld [vmem:[#allocation14 + $0x538] sm:$0xff]
    %v1279 = vld [vmem:[#allocation14 + $0x540] sm:$0xff]
    %v1280 = vld [vmem:[#allocation14 + $0x548] sm:$0xff]
    %v1281 = vld [vmem:[#allocation14 + $0x550] sm:$0xff]
    %v1282 = vld [vmem:[#allocation14 + $0x558] sm:$0xff]
    %v1283 = vld [vmem:[#allocation14 + $0x560] sm:$0xff]
    %v1284 = vld [vmem:[#allocation14 + $0x568] sm:$0xff]
    %v1285 = vld [vmem:[#allocation14 + $0x570] sm:$0xff]
    %v1286 = vld [vmem:[#allocation14 + $0x578] sm:$0xff]
    %v1287 = vld [vmem:[#allocation14 + $0x580] sm:$0xff]
    %v1288 = vld [vmem:[#allocation14 + $0x588] sm:$0xff]
    %v1289 = vld [vmem:[#allocation14 + $0x590] sm:$0xff]
    %v1290 = vld [vmem:[#allocation14 + $0x598] sm:$0xff]
    %v1291 = vld [vmem:[#allocation14 + $0x5a0] sm:$0xff]
    %v1292 = vld [vmem:[#allocation14 + $0x5a8] sm:$0xff]
    %v1293 = vld [vmem:[#allocation14 + $0x5b0] sm:$0xff]
    %v1294 = vld [vmem:[#allocation14 + $0x5b8] sm:$0xff]
    %v1295 = vld [vmem:[#allocation14 + $0x5c0] sm:$0xff]
    %v1296 = vld [vmem:[#allocation14 + $0x5c8] sm:$0xff]
    %v1297 = vld [vmem:[#allocation14 + $0x5d0] sm:$0xff]
    %v1298 = vld [vmem:[#allocation14 + $0x5d8] sm:$0xff]
    %v1299 = vld [vmem:[#allocation14 + $0x5e0] sm:$0xff]
    %v1300 = vld [vmem:[#allocation14 + $0x5e8] sm:$0xff]
    %v1301 = vld [vmem:[#allocation14 + $0x5f0] sm:$0xff]
    %v1302 = vld [vmem:[#allocation14 + $0x5f8] sm:$0xff]
    %v1303 = vld [vmem:[#allocation14 + $0x600] sm:$0xff]
    %v1304 = vld [vmem:[#allocation14 + $0x608] sm:$0xff]
    %v1305 = vld [vmem:[#allocation14 + $0x610] sm:$0xff]
    %v1306 = vld [vmem:[#allocation14 + $0x618] sm:$0xff]
    %v1307 = vld [vmem:[#allocation14 + $0x620] sm:$0xff]
    %v1308 = vld [vmem:[#allocation14 + $0x628] sm:$0xff]
    %v1309 = vld [vmem:[#allocation14 + $0x630] sm:$0xff]
    %v1310 = vld [vmem:[#allocation14 + $0x638] sm:$0xff]
    %v1311 = vld [vmem:[#allocation14 + $0x640] sm:$0xff]
    %v1312 = vld [vmem:[#allocation14 + $0x648] sm:$0xff]
    %v1313 = vld [vmem:[#allocation14 + $0x650] sm:$0xff]
    %v1314 = vld [vmem:[#allocation14 + $0x658] sm:$0xff]
    %v1315 = vld [vmem:[#allocation14 + $0x660] sm:$0xff]
    %v1316 = vld [vmem:[#allocation14 + $0x668] sm:$0xff]
    %v1317 = vld [vmem:[#allocation14 + $0x670] sm:$0xff]
    %v1318 = vld [vmem:[#allocation14 + $0x678] sm:$0xff]
    %v1319 = vld [vmem:[#allocation14 + $0x680] sm:$0xff]
    %v1320 = vld [vmem:[#allocation14 + $0x688] sm:$0xff]
    %v1321 = vld [vmem:[#allocation14 + $0x690] sm:$0xff]
    %v1322 = vld [vmem:[#allocation14 + $0x698] sm:$0xff]
    %v1323 = vld [vmem:[#allocation14 + $0x6a0] sm:$0xff]
    %v1324 = vld [vmem:[#allocation14 + $0x6a8] sm:$0xff]
    %v1325 = vld [vmem:[#allocation14 + $0x6b0] sm:$0xff]
    %v1326 = vld [vmem:[#allocation14 + $0x6b8] sm:$0xff]
    %v1327 = vld [vmem:[#allocation14 + $0x6c0] sm:$0xff]
    %v1328 = vld [vmem:[#allocation14 + $0x6c8] sm:$0xff]
    %v1329 = vld [vmem:[#allocation14 + $0x6d0] sm:$0xff]
    %v1330 = vld [vmem:[#allocation14 + $0x6d8] sm:$0xff]
    %v1331 = vld [vmem:[#allocation14 + $0x6e0] sm:$0xff]
    %v1332 = vld [vmem:[#allocation14 + $0x6e8] sm:$0xff]
    %v1333 = vld [vmem:[#allocation14 + $0x6f0] sm:$0xff]
    %v1334 = vld [vmem:[#allocation14 + $0x6f8] sm:$0xff]
    %v1335 = vld [vmem:[#allocation14 + $0x700] sm:$0xff]
    %v1336 = vld [vmem:[#allocation14 + $0x708] sm:$0xff]
    %v1337 = vld [vmem:[#allocation14 + $0x710] sm:$0xff]
    %v1338 = vld [vmem:[#allocation14 + $0x718] sm:$0xff]
    %v1339 = vld [vmem:[#allocation14 + $0x720] sm:$0xff]
    %v1340 = vld [vmem:[#allocation14 + $0x728] sm:$0xff]
    %v1341 = vld [vmem:[#allocation14 + $0x730] sm:$0xff]
    %v1342 = vld [vmem:[#allocation14 + $0x738] sm:$0xff]
    %v1343 = vld [vmem:[#allocation14 + $0x740] sm:$0xff]
    %v1344 = vld [vmem:[#allocation14 + $0x748] sm:$0xff]
    %v1345 = vld [vmem:[#allocation14 + $0x750] sm:$0xff]
    %v1346 = vld [vmem:[#allocation14 + $0x758] sm:$0xff]
    %v1347 = vld [vmem:[#allocation14 + $0x760] sm:$0xff]
    %v1348 = vld [vmem:[#allocation14 + $0x768] sm:$0xff]
    %v1349 = vld [vmem:[#allocation14 + $0x770] sm:$0xff]
    %v1350 = vld [vmem:[#allocation14 + $0x778] sm:$0xff]
    %v1351 = vld [vmem:[#allocation14 + $0x780] sm:$0xff]
    %v1352 = vld [vmem:[#allocation14 + $0x788] sm:$0xff]
    %v1353 = vld [vmem:[#allocation14 + $0x790] sm:$0xff]
    %v1354 = vld [vmem:[#allocation14 + $0x798] sm:$0xff]
    %v1355 = vld [vmem:[#allocation14 + $0x7a0] sm:$0xff]
    %v1356 = vld [vmem:[#allocation14 + $0x7a8] sm:$0xff]
    %v1357 = vld [vmem:[#allocation14 + $0x7b0] sm:$0xff]
    %v1358 = vld [vmem:[#allocation14 + $0x7b8] sm:$0xff]
    %v1359 = vld [vmem:[#allocation14 + $0x7c0] sm:$0xff]
    %v1360 = vld [vmem:[#allocation14 + $0x7c8] sm:$0xff]
    %v1361 = vld [vmem:[#allocation14 + $0x7d0] sm:$0xff]
    %v1362 = vld [vmem:[#allocation14 + $0x7d8] sm:$0xff]
    %v1363 = vld [vmem:[#allocation14 + $0x7e0] sm:$0xff]
    %v1364 = vld [vmem:[#allocation14 + $0x7e8] sm:$0xff]
    %v1365 = vld [vmem:[#allocation14 + $0x7f0] sm:$0xff]
    %v1366 = vld [vmem:[#allocation14 + $0x7f8] sm:$0xff]
    %v1623 = vunpack.c.l.b16 %v1111
    %v1624 = vunpack.c.h.b16 %v1111
    %v1625 = vunpack.c.l.b16 %v1112
    %v1626 = vunpack.c.h.b16 %v1112
    %v1627 = vunpack.c.l.b16 %v1113
    %v1628 = vunpack.c.h.b16 %v1113
    %v1629 = vunpack.c.l.b16 %v1114
    %v1630 = vunpack.c.h.b16 %v1114
    %v1631 = vunpack.c.l.b16 %v1115
    %v1632 = vunpack.c.h.b16 %v1115
    %v1633 = vunpack.c.l.b16 %v1116
    %v1634 = vunpack.c.h.b16 %v1116
    %v1635 = vunpack.c.l.b16 %v1117
    %v1636 = vunpack.c.h.b16 %v1117
    %v1637 = vunpack.c.l.b16 %v1118
    %v1638 = vunpack.c.h.b16 %v1118
    %v1639 = vunpack.c.l.b16 %v1119
    %v1640 = vunpack.c.h.b16 %v1119
    %v1641 = vunpack.c.l.b16 %v1120
    %v1642 = vunpack.c.h.b16 %v1120
    %v1643 = vunpack.c.l.b16 %v1121
    %v1644 = vunpack.c.h.b16 %v1121
    %v1645 = vunpack.c.l.b16 %v1122
    %v1646 = vunpack.c.h.b16 %v1122
    %v1647 = vunpack.c.l.b16 %v1123
    %v1648 = vunpack.c.h.b16 %v1123
    %v1649 = vunpack.c.l.b16 %v1124
    %v1650 = vunpack.c.h.b16 %v1124
    %v1651 = vunpack.c.l.b16 %v1125
    %v1652 = vunpack.c.h.b16 %v1125
    %v1653 = vunpack.c.l.b16 %v1126
    %v1654 = vunpack.c.h.b16 %v1126
    %v1655 = vunpack.c.l.b16 %v1127
    %v1656 = vunpack.c.h.b16 %v1127
    %v1657 = vunpack.c.l.b16 %v1128
    %v1658 = vunpack.c.h.b16 %v1128
    %v1659 = vunpack.c.l.b16 %v1129
    %v1660 = vunpack.c.h.b16 %v1129
    %v1661 = vunpack.c.l.b16 %v1130
    %v1662 = vunpack.c.h.b16 %v1130
    %v1663 = vunpack.c.l.b16 %v1131
    %v1664 = vunpack.c.h.b16 %v1131
    %v1665 = vunpack.c.l.b16 %v1132
    %v1666 = vunpack.c.h.b16 %v1132
    %v1667 = vunpack.c.l.b16 %v1133
    %v1668 = vunpack.c.h.b16 %v1133
    %v1669 = vunpack.c.l.b16 %v1134
    %v1670 = vunpack.c.h.b16 %v1134
    %v1671 = vunpack.c.l.b16 %v1135
    %v1672 = vunpack.c.h.b16 %v1135
    %v1673 = vunpack.c.l.b16 %v1136
    %v1674 = vunpack.c.h.b16 %v1136
    %v1675 = vunpack.c.l.b16 %v1137
    %v1676 = vunpack.c.h.b16 %v1137
    %v1677 = vunpack.c.l.b16 %v1138
    %v1678 = vunpack.c.h.b16 %v1138
    %v1679 = vunpack.c.l.b16 %v1139
    %v1680 = vunpack.c.h.b16 %v1139
    %v1681 = vunpack.c.l.b16 %v1140
    %v1682 = vunpack.c.h.b16 %v1140
    %v1683 = vunpack.c.l.b16 %v1141
    %v1684 = vunpack.c.h.b16 %v1141
    %v1685 = vunpack.c.l.b16 %v1142
    %v1686 = vunpack.c.h.b16 %v1142
    %v1687 = vunpack.c.l.b16 %v1143
    %v1688 = vunpack.c.h.b16 %v1143
    %v1689 = vunpack.c.l.b16 %v1144
    %v1690 = vunpack.c.h.b16 %v1144
    %v1691 = vunpack.c.l.b16 %v1145
    %v1692 = vunpack.c.h.b16 %v1145
    %v1693 = vunpack.c.l.b16 %v1146
    %v1694 = vunpack.c.h.b16 %v1146
    %v1695 = vunpack.c.l.b16 %v1147
    %v1696 = vunpack.c.h.b16 %v1147
    %v1697 = vunpack.c.l.b16 %v1148
    %v1698 = vunpack.c.h.b16 %v1148
    %v1699 = vunpack.c.l.b16 %v1149
    %v1700 = vunpack.c.h.b16 %v1149
    %v1701 = vunpack.c.l.b16 %v1150
    %v1702 = vunpack.c.h.b16 %v1150
    %v1703 = vunpack.c.l.b16 %v1151
    %v1704 = vunpack.c.h.b16 %v1151
    %v1705 = vunpack.c.l.b16 %v1152
    %v1706 = vunpack.c.h.b16 %v1152
    %v1707 = vunpack.c.l.b16 %v1153
    %v1708 = vunpack.c.h.b16 %v1153
    %v1709 = vunpack.c.l.b16 %v1154
    %v1710 = vunpack.c.h.b16 %v1154
    %v1711 = vunpack.c.l.b16 %v1155
    %v1712 = vunpack.c.h.b16 %v1155
    %v1713 = vunpack.c.l.b16 %v1156
    %v1714 = vunpack.c.h.b16 %v1156
    %v1715 = vunpack.c.l.b16 %v1157
    %v1716 = vunpack.c.h.b16 %v1157
    %v1717 = vunpack.c.l.b16 %v1158
    %v1718 = vunpack.c.h.b16 %v1158
    %v1719 = vunpack.c.l.b16 %v1159
    %v1720 = vunpack.c.h.b16 %v1159
    %v1721 = vunpack.c.l.b16 %v1160
    %v1722 = vunpack.c.h.b16 %v1160
    %v1723 = vunpack.c.l.b16 %v1161
    %v1724 = vunpack.c.h.b16 %v1161
    %v1725 = vunpack.c.l.b16 %v1162
    %v1726 = vunpack.c.h.b16 %v1162
    %v1727 = vunpack.c.l.b16 %v1163
    %v1728 = vunpack.c.h.b16 %v1163
    %v1729 = vunpack.c.l.b16 %v1164
    %v1730 = vunpack.c.h.b16 %v1164
    %v1731 = vunpack.c.l.b16 %v1165
    %v1732 = vunpack.c.h.b16 %v1165
    %v1733 = vunpack.c.l.b16 %v1166
    %v1734 = vunpack.c.h.b16 %v1166
    %v1735 = vunpack.c.l.b16 %v1167
    %v1736 = vunpack.c.h.b16 %v1167
    %v1737 = vunpack.c.l.b16 %v1168
    %v1738 = vunpack.c.h.b16 %v1168
    %v1739 = vunpack.c.l.b16 %v1169
    %v1740 = vunpack.c.h.b16 %v1169
    %v1741 = vunpack.c.l.b16 %v1170
    %v1742 = vunpack.c.h.b16 %v1170
    %v1743 = vunpack.c.l.b16 %v1171
    %v1744 = vunpack.c.h.b16 %v1171
    %v1745 = vunpack.c.l.b16 %v1172
    %v1746 = vunpack.c.h.b16 %v1172
    %v1747 = vunpack.c.l.b16 %v1173
    %v1748 = vunpack.c.h.b16 %v1173
    %v1749 = vunpack.c.l.b16 %v1174
    %v1750 = vunpack.c.h.b16 %v1174
    %v1751 = vunpack.c.l.b16 %v1175
    %v1752 = vunpack.c.h.b16 %v1175
    %v1753 = vunpack.c.l.b16 %v1176
    %v1754 = vunpack.c.h.b16 %v1176
    %v1755 = vunpack.c.l.b16 %v1177
    %v1756 = vunpack.c.h.b16 %v1177
    %v1757 = vunpack.c.l.b16 %v1178
    %v1758 = vunpack.c.h.b16 %v1178
    %v1759 = vunpack.c.l.b16 %v1179
    %v1760 = vunpack.c.h.b16 %v1179
    %v1761 = vunpack.c.l.b16 %v1180
    %v1762 = vunpack.c.h.b16 %v1180
    %v1763 = vunpack.c.l.b16 %v1181
    %v1764 = vunpack.c.h.b16 %v1181
    %v1765 = vunpack.c.l.b16 %v1182
    %v1766 = vunpack.c.h.b16 %v1182
    %v1767 = vunpack.c.l.b16 %v1183
    %v1768 = vunpack.c.h.b16 %v1183
    %v1769 = vunpack.c.l.b16 %v1184
    %v1770 = vunpack.c.h.b16 %v1184
    %v1771 = vunpack.c.l.b16 %v1185
    %v1772 = vunpack.c.h.b16 %v1185
    %v1773 = vunpack.c.l.b16 %v1186
    %v1774 = vunpack.c.h.b16 %v1186
    %v1775 = vunpack.c.l.b16 %v1187
    %v1776 = vunpack.c.h.b16 %v1187
    %v1777 = vunpack.c.l.b16 %v1188
    %v1778 = vunpack.c.h.b16 %v1188
    %v1779 = vunpack.c.l.b16 %v1189
    %v1780 = vunpack.c.h.b16 %v1189
    %v1781 = vunpack.c.l.b16 %v1190
    %v1782 = vunpack.c.h.b16 %v1190
    %v1783 = vunpack.c.l.b16 %v1191
    %v1784 = vunpack.c.h.b16 %v1191
    %v1785 = vunpack.c.l.b16 %v1192
    %v1786 = vunpack.c.h.b16 %v1192
    %v1787 = vunpack.c.l.b16 %v1193
    %v1788 = vunpack.c.h.b16 %v1193
    %v1789 = vunpack.c.l.b16 %v1194
    %v1790 = vunpack.c.h.b16 %v1194
    %v1791 = vunpack.c.l.b16 %v1195
    %v1792 = vunpack.c.h.b16 %v1195
    %v1793 = vunpack.c.l.b16 %v1196
    %v1794 = vunpack.c.h.b16 %v1196
    %v1795 = vunpack.c.l.b16 %v1197
    %v1796 = vunpack.c.h.b16 %v1197
    %v1797 = vunpack.c.l.b16 %v1198
    %v1798 = vunpack.c.h.b16 %v1198
    %v1799 = vunpack.c.l.b16 %v1199
    %v1800 = vunpack.c.h.b16 %v1199
    %v1801 = vunpack.c.l.b16 %v1200
    %v1802 = vunpack.c.h.b16 %v1200
    %v1803 = vunpack.c.l.b16 %v1201
    %v1804 = vunpack.c.h.b16 %v1201
    %v1805 = vunpack.c.l.b16 %v1202
    %v1806 = vunpack.c.h.b16 %v1202
    %v1807 = vunpack.c.l.b16 %v1203
    %v1808 = vunpack.c.h.b16 %v1203
    %v1809 = vunpack.c.l.b16 %v1204
    %v1810 = vunpack.c.h.b16 %v1204
    %v1811 = vunpack.c.l.b16 %v1205
    %v1812 = vunpack.c.h.b16 %v1205
    %v1813 = vunpack.c.l.b16 %v1206
    %v1814 = vunpack.c.h.b16 %v1206
    %v1815 = vunpack.c.l.b16 %v1207
    %v1816 = vunpack.c.h.b16 %v1207
    %v1817 = vunpack.c.l.b16 %v1208
    %v1818 = vunpack.c.h.b16 %v1208
    %v1819 = vunpack.c.l.b16 %v1209
    %v1820 = vunpack.c.h.b16 %v1209
    %v1821 = vunpack.c.l.b16 %v1210
    %v1822 = vunpack.c.h.b16 %v1210
    %v1823 = vunpack.c.l.b16 %v1211
    %v1824 = vunpack.c.h.b16 %v1211
    %v1825 = vunpack.c.l.b16 %v1212
    %v1826 = vunpack.c.h.b16 %v1212
    %v1827 = vunpack.c.l.b16 %v1213
    %v1828 = vunpack.c.h.b16 %v1213
    %v1829 = vunpack.c.l.b16 %v1214
    %v1830 = vunpack.c.h.b16 %v1214
    %v1831 = vunpack.c.l.b16 %v1215
    %v1832 = vunpack.c.h.b16 %v1215
    %v1833 = vunpack.c.l.b16 %v1216
    %v1834 = vunpack.c.h.b16 %v1216
    %v1835 = vunpack.c.l.b16 %v1217
    %v1836 = vunpack.c.h.b16 %v1217
    %v1837 = vunpack.c.l.b16 %v1218
    %v1838 = vunpack.c.h.b16 %v1218
    %v1839 = vunpack.c.l.b16 %v1219
    %v1840 = vunpack.c.h.b16 %v1219
    %v1841 = vunpack.c.l.b16 %v1220
    %v1842 = vunpack.c.h.b16 %v1220
    %v1843 = vunpack.c.l.b16 %v1221
    %v1844 = vunpack.c.h.b16 %v1221
    %v1845 = vunpack.c.l.b16 %v1222
    %v1846 = vunpack.c.h.b16 %v1222
    %v1847 = vunpack.c.l.b16 %v1223
    %v1848 = vunpack.c.h.b16 %v1223
    %v1849 = vunpack.c.l.b16 %v1224
    %v1850 = vunpack.c.h.b16 %v1224
    %v1851 = vunpack.c.l.b16 %v1225
    %v1852 = vunpack.c.h.b16 %v1225
    %v1853 = vunpack.c.l.b16 %v1226
    %v1854 = vunpack.c.h.b16 %v1226
    %v1855 = vunpack.c.l.b16 %v1227
    %v1856 = vunpack.c.h.b16 %v1227
    %v1857 = vunpack.c.l.b16 %v1228
    %v1858 = vunpack.c.h.b16 %v1228
    %v1859 = vunpack.c.l.b16 %v1229
    %v1860 = vunpack.c.h.b16 %v1229
    %v1861 = vunpack.c.l.b16 %v1230
    %v1862 = vunpack.c.h.b16 %v1230
    %v1863 = vunpack.c.l.b16 %v1231
    %v1864 = vunpack.c.h.b16 %v1231
    %v1865 = vunpack.c.l.b16 %v1232
    %v1866 = vunpack.c.h.b16 %v1232
    %v1867 = vunpack.c.l.b16 %v1233
    %v1868 = vunpack.c.h.b16 %v1233
    %v1869 = vunpack.c.l.b16 %v1234
    %v1870 = vunpack.c.h.b16 %v1234
    %v1871 = vunpack.c.l.b16 %v1235
    %v1872 = vunpack.c.h.b16 %v1235
    %v1873 = vunpack.c.l.b16 %v1236
    %v1874 = vunpack.c.h.b16 %v1236
    %v1875 = vunpack.c.l.b16 %v1237
    %v1876 = vunpack.c.h.b16 %v1237
    %v1877 = vunpack.c.l.b16 %v1238
    %v1878 = vunpack.c.h.b16 %v1238
    %v1879 = vunpack.c.l.b16 %v1239
    %v1880 = vunpack.c.h.b16 %v1239
    %v1881 = vunpack.c.l.b16 %v1240
    %v1882 = vunpack.c.h.b16 %v1240
    %v1883 = vunpack.c.l.b16 %v1241
    %v1884 = vunpack.c.h.b16 %v1241
    %v1885 = vunpack.c.l.b16 %v1242
    %v1886 = vunpack.c.h.b16 %v1242
    %v1887 = vunpack.c.l.b16 %v1243
    %v1888 = vunpack.c.h.b16 %v1243
    %v1889 = vunpack.c.l.b16 %v1244
    %v1890 = vunpack.c.h.b16 %v1244
    %v1891 = vunpack.c.l.b16 %v1245
    %v1892 = vunpack.c.h.b16 %v1245
    %v1893 = vunpack.c.l.b16 %v1246
    %v1894 = vunpack.c.h.b16 %v1246
    %v1895 = vunpack.c.l.b16 %v1247
    %v1896 = vunpack.c.h.b16 %v1247
    %v1897 = vunpack.c.l.b16 %v1248
    %v1898 = vunpack.c.h.b16 %v1248
    %v1899 = vunpack.c.l.b16 %v1249
    %v1900 = vunpack.c.h.b16 %v1249
    %v1901 = vunpack.c.l.b16 %v1250
    %v1902 = vunpack.c.h.b16 %v1250
    %v1903 = vunpack.c.l.b16 %v1251
    %v1904 = vunpack.c.h.b16 %v1251
    %v1905 = vunpack.c.l.b16 %v1252
    %v1906 = vunpack.c.h.b16 %v1252
    %v1907 = vunpack.c.l.b16 %v1253
    %v1908 = vunpack.c.h.b16 %v1253
    %v1909 = vunpack.c.l.b16 %v1254
    %v1910 = vunpack.c.h.b16 %v1254
    %v1911 = vunpack.c.l.b16 %v1255
    %v1912 = vunpack.c.h.b16 %v1255
    %v1913 = vunpack.c.l.b16 %v1256
    %v1914 = vunpack.c.h.b16 %v1256
    %v1915 = vunpack.c.l.b16 %v1257
    %v1916 = vunpack.c.h.b16 %v1257
    %v1917 = vunpack.c.l.b16 %v1258
    %v1918 = vunpack.c.h.b16 %v1258
    %v1919 = vunpack.c.l.b16 %v1259
    %v1920 = vunpack.c.h.b16 %v1259
    %v1921 = vunpack.c.l.b16 %v1260
    %v1922 = vunpack.c.h.b16 %v1260
    %v1923 = vunpack.c.l.b16 %v1261
    %v1924 = vunpack.c.h.b16 %v1261
    %v1925 = vunpack.c.l.b16 %v1262
    %v1926 = vunpack.c.h.b16 %v1262
    %v1927 = vunpack.c.l.b16 %v1263
    %v1928 = vunpack.c.h.b16 %v1263
    %v1929 = vunpack.c.l.b16 %v1264
    %v1930 = vunpack.c.h.b16 %v1264
    %v1931 = vunpack.c.l.b16 %v1265
    %v1932 = vunpack.c.h.b16 %v1265
    %v1933 = vunpack.c.l.b16 %v1266
    %v1934 = vunpack.c.h.b16 %v1266
    %v1935 = vunpack.c.l.b16 %v1267
    %v1936 = vunpack.c.h.b16 %v1267
    %v1937 = vunpack.c.l.b16 %v1268
    %v1938 = vunpack.c.h.b16 %v1268
    %v1939 = vunpack.c.l.b16 %v1269
    %v1940 = vunpack.c.h.b16 %v1269
    %v1941 = vunpack.c.l.b16 %v1270
    %v1942 = vunpack.c.h.b16 %v1270
    %v1943 = vunpack.c.l.b16 %v1271
    %v1944 = vunpack.c.h.b16 %v1271
    %v1945 = vunpack.c.l.b16 %v1272
    %v1946 = vunpack.c.h.b16 %v1272
    %v1947 = vunpack.c.l.b16 %v1273
    %v1948 = vunpack.c.h.b16 %v1273
    %v1949 = vunpack.c.l.b16 %v1274
    %v1950 = vunpack.c.h.b16 %v1274
    %v1951 = vunpack.c.l.b16 %v1275
    %v1952 = vunpack.c.h.b16 %v1275
    %v1953 = vunpack.c.l.b16 %v1276
    %v1954 = vunpack.c.h.b16 %v1276
    %v1955 = vunpack.c.l.b16 %v1277
    %v1956 = vunpack.c.h.b16 %v1277
    %v1957 = vunpack.c.l.b16 %v1278
    %v1958 = vunpack.c.h.b16 %v1278
    %v1959 = vunpack.c.l.b16 %v1279
    %v1960 = vunpack.c.h.b16 %v1279
    %v1961 = vunpack.c.l.b16 %v1280
    %v1962 = vunpack.c.h.b16 %v1280
    %v1963 = vunpack.c.l.b16 %v1281
    %v1964 = vunpack.c.h.b16 %v1281
    %v1965 = vunpack.c.l.b16 %v1282
    %v1966 = vunpack.c.h.b16 %v1282
    %v1967 = vunpack.c.l.b16 %v1283
    %v1968 = vunpack.c.h.b16 %v1283
    %v1969 = vunpack.c.l.b16 %v1284
    %v1970 = vunpack.c.h.b16 %v1284
    %v1971 = vunpack.c.l.b16 %v1285
    %v1972 = vunpack.c.h.b16 %v1285
    %v1973 = vunpack.c.l.b16 %v1286
    %v1974 = vunpack.c.h.b16 %v1286
    %v1975 = vunpack.c.l.b16 %v1287
    %v1976 = vunpack.c.h.b16 %v1287
    %v1977 = vunpack.c.l.b16 %v1288
    %v1978 = vunpack.c.h.b16 %v1288
    %v1979 = vunpack.c.l.b16 %v1289
    %v1980 = vunpack.c.h.b16 %v1289
    %v1981 = vunpack.c.l.b16 %v1290
    %v1982 = vunpack.c.h.b16 %v1290
    %v1983 = vunpack.c.l.b16 %v1291
    %v1984 = vunpack.c.h.b16 %v1291
    %v1985 = vunpack.c.l.b16 %v1292
    %v1986 = vunpack.c.h.b16 %v1292
    %v1987 = vunpack.c.l.b16 %v1293
    %v1988 = vunpack.c.h.b16 %v1293
    %v1989 = vunpack.c.l.b16 %v1294
    %v1990 = vunpack.c.h.b16 %v1294
    %v1991 = vunpack.c.l.b16 %v1295
    %v1992 = vunpack.c.h.b16 %v1295
    %v1993 = vunpack.c.l.b16 %v1296
    %v1994 = vunpack.c.h.b16 %v1296
    %v1995 = vunpack.c.l.b16 %v1297
    %v1996 = vunpack.c.h.b16 %v1297
    %v1997 = vunpack.c.l.b16 %v1298
    %v1998 = vunpack.c.h.b16 %v1298
    %v1999 = vunpack.c.l.b16 %v1299
    %v2000 = vunpack.c.h.b16 %v1299
    %v2001 = vunpack.c.l.b16 %v1300
    %v2002 = vunpack.c.h.b16 %v1300
    %v2003 = vunpack.c.l.b16 %v1301
    %v2004 = vunpack.c.h.b16 %v1301
    %v2005 = vunpack.c.l.b16 %v1302
    %v2006 = vunpack.c.h.b16 %v1302
    %v2007 = vunpack.c.l.b16 %v1303
    %v2008 = vunpack.c.h.b16 %v1303
    %v2009 = vunpack.c.l.b16 %v1304
    %v2010 = vunpack.c.h.b16 %v1304
    %v2011 = vunpack.c.l.b16 %v1305
    %v2012 = vunpack.c.h.b16 %v1305
    %v2013 = vunpack.c.l.b16 %v1306
    %v2014 = vunpack.c.h.b16 %v1306
    %v2015 = vunpack.c.l.b16 %v1307
    %v2016 = vunpack.c.h.b16 %v1307
    %v2017 = vunpack.c.l.b16 %v1308
    %v2018 = vunpack.c.h.b16 %v1308
    %v2019 = vunpack.c.l.b16 %v1309
    %v2020 = vunpack.c.h.b16 %v1309
    %v2021 = vunpack.c.l.b16 %v1310
    %v2022 = vunpack.c.h.b16 %v1310
    %v2023 = vunpack.c.l.b16 %v1311
    %v2024 = vunpack.c.h.b16 %v1311
    %v2025 = vunpack.c.l.b16 %v1312
    %v2026 = vunpack.c.h.b16 %v1312
    %v2027 = vunpack.c.l.b16 %v1313
    %v2028 = vunpack.c.h.b16 %v1313
    %v2029 = vunpack.c.l.b16 %v1314
    %v2030 = vunpack.c.h.b16 %v1314
    %v2031 = vunpack.c.l.b16 %v1315
    %v2032 = vunpack.c.h.b16 %v1315
    %v2033 = vunpack.c.l.b16 %v1316
    %v2034 = vunpack.c.h.b16 %v1316
    %v2035 = vunpack.c.l.b16 %v1317
    %v2036 = vunpack.c.h.b16 %v1317
    %v2037 = vunpack.c.l.b16 %v1318
    %v2038 = vunpack.c.h.b16 %v1318
    %v2039 = vunpack.c.l.b16 %v1319
    %v2040 = vunpack.c.h.b16 %v1319
    %v2041 = vunpack.c.l.b16 %v1320
    %v2042 = vunpack.c.h.b16 %v1320
    %v2043 = vunpack.c.l.b16 %v1321
    %v2044 = vunpack.c.h.b16 %v1321
    %v2045 = vunpack.c.l.b16 %v1322
    %v2046 = vunpack.c.h.b16 %v1322
    %v2047 = vunpack.c.l.b16 %v1323
    %v2048 = vunpack.c.h.b16 %v1323
    %v2049 = vunpack.c.l.b16 %v1324
    %v2050 = vunpack.c.h.b16 %v1324
    %v2051 = vunpack.c.l.b16 %v1325
    %v2052 = vunpack.c.h.b16 %v1325
    %v2053 = vunpack.c.l.b16 %v1326
    %v2054 = vunpack.c.h.b16 %v1326
    %v2055 = vunpack.c.l.b16 %v1327
    %v2056 = vunpack.c.h.b16 %v1327
    %v2057 = vunpack.c.l.b16 %v1328
    %v2058 = vunpack.c.h.b16 %v1328
    %v2059 = vunpack.c.l.b16 %v1329
    %v2060 = vunpack.c.h.b16 %v1329
    %v2061 = vunpack.c.l.b16 %v1330
    %v2062 = vunpack.c.h.b16 %v1330
    %v2063 = vunpack.c.l.b16 %v1331
    %v2064 = vunpack.c.h.b16 %v1331
    %v2065 = vunpack.c.l.b16 %v1332
    %v2066 = vunpack.c.h.b16 %v1332
    %v2067 = vunpack.c.l.b16 %v1333
    %v2068 = vunpack.c.h.b16 %v1333
    %v2069 = vunpack.c.l.b16 %v1334
    %v2070 = vunpack.c.h.b16 %v1334
    %v2071 = vunpack.c.l.b16 %v1335
    %v2072 = vunpack.c.h.b16 %v1335
    %v2073 = vunpack.c.l.b16 %v1336
    %v2074 = vunpack.c.h.b16 %v1336
    %v2075 = vunpack.c.l.b16 %v1337
    %v2076 = vunpack.c.h.b16 %v1337
    %v2077 = vunpack.c.l.b16 %v1338
    %v2078 = vunpack.c.h.b16 %v1338
    %v2079 = vunpack.c.l.b16 %v1339
    %v2080 = vunpack.c.h.b16 %v1339
    %v2081 = vunpack.c.l.b16 %v1340
    %v2082 = vunpack.c.h.b16 %v1340
    %v2083 = vunpack.c.l.b16 %v1341
    %v2084 = vunpack.c.h.b16 %v1341
    %v2085 = vunpack.c.l.b16 %v1342
    %v2086 = vunpack.c.h.b16 %v1342
    %v2087 = vunpack.c.l.b16 %v1343
    %v2088 = vunpack.c.h.b16 %v1343
    %v2089 = vunpack.c.l.b16 %v1344
    %v2090 = vunpack.c.h.b16 %v1344
    %v2091 = vunpack.c.l.b16 %v1345
    %v2092 = vunpack.c.h.b16 %v1345
    %v2093 = vunpack.c.l.b16 %v1346
    %v2094 = vunpack.c.h.b16 %v1346
    %v2095 = vunpack.c.l.b16 %v1347
    %v2096 = vunpack.c.h.b16 %v1347
    %v2097 = vunpack.c.l.b16 %v1348
    %v2098 = vunpack.c.h.b16 %v1348
    %v2099 = vunpack.c.l.b16 %v1349
    %v2100 = vunpack.c.h.b16 %v1349
    %v2101 = vunpack.c.l.b16 %v1350
    %v2102 = vunpack.c.h.b16 %v1350
    %v2103 = vunpack.c.l.b16 %v1351
    %v2104 = vunpack.c.h.b16 %v1351
    %v2105 = vunpack.c.l.b16 %v1352
    %v2106 = vunpack.c.h.b16 %v1352
    %v2107 = vunpack.c.l.b16 %v1353
    %v2108 = vunpack.c.h.b16 %v1353
    %v2109 = vunpack.c.l.b16 %v1354
    %v2110 = vunpack.c.h.b16 %v1354
    %v2111 = vunpack.c.l.b16 %v1355
    %v2112 = vunpack.c.h.b16 %v1355
    %v2113 = vunpack.c.l.b16 %v1356
    %v2114 = vunpack.c.h.b16 %v1356
    %v2115 = vunpack.c.l.b16 %v1357
    %v2116 = vunpack.c.h.b16 %v1357
    %v2117 = vunpack.c.l.b16 %v1358
    %v2118 = vunpack.c.h.b16 %v1358
    %v2119 = vunpack.c.l.b16 %v1359
    %v2120 = vunpack.c.h.b16 %v1359
    %v2121 = vunpack.c.l.b16 %v1360
    %v2122 = vunpack.c.h.b16 %v1360
    %v2123 = vunpack.c.l.b16 %v1361
    %v2124 = vunpack.c.h.b16 %v1361
    %v2125 = vunpack.c.l.b16 %v1362
    %v2126 = vunpack.c.h.b16 %v1362
    %v2127 = vunpack.c.l.b16 %v1363
    %v2128 = vunpack.c.h.b16 %v1363
    %v2129 = vunpack.c.l.b16 %v1364
    %v2130 = vunpack.c.h.b16 %v1364
    %v2131 = vunpack.c.l.b16 %v1365
    %v2132 = vunpack.c.h.b16 %v1365
    %v2133 = vunpack.c.l.b16 %v1366
    %v2134 = vunpack.c.h.b16 %v1366
    %v2135 = vpack.c.b16 %v1631, %v1623
    %v2136 = vpack.c.b16 %v1632, %v1624
    %v2137 = vpack.c.b16 %v1633, %v1625
    %v2138 = vpack.c.b16 %v1634, %v1626
    %v2139 = vpack.c.b16 %v1635, %v1627
    %v2140 = vpack.c.b16 %v1636, %v1628
    %v2141 = vpack.c.b16 %v1637, %v1629
    %v2142 = vpack.c.b16 %v1638, %v1630
    %v2143 = vpack.c.b16 %v1647, %v1639
    %v2144 = vpack.c.b16 %v1648, %v1640
    %v2145 = vpack.c.b16 %v1649, %v1641
    %v2146 = vpack.c.b16 %v1650, %v1642
    %v2147 = vpack.c.b16 %v1651, %v1643
    %v2148 = vpack.c.b16 %v1652, %v1644
    %v2149 = vpack.c.b16 %v1653, %v1645
    %v2150 = vpack.c.b16 %v1654, %v1646
    %v2151 = vpack.c.b16 %v1663, %v1655
    %v2152 = vpack.c.b16 %v1664, %v1656
    %v2153 = vpack.c.b16 %v1665, %v1657
    %v2154 = vpack.c.b16 %v1666, %v1658
    %v2155 = vpack.c.b16 %v1667, %v1659
    %v2156 = vpack.c.b16 %v1668, %v1660
    %v2157 = vpack.c.b16 %v1669, %v1661
    %v2158 = vpack.c.b16 %v1670, %v1662
    %v2159 = vpack.c.b16 %v1679, %v1671
    %v2160 = vpack.c.b16 %v1680, %v1672
    %v2161 = vpack.c.b16 %v1681, %v1673
    %v2162 = vpack.c.b16 %v1682, %v1674
    %v2163 = vpack.c.b16 %v1683, %v1675
    %v2164 = vpack.c.b16 %v1684, %v1676
    %v2165 = vpack.c.b16 %v1685, %v1677
    %v2166 = vpack.c.b16 %v1686, %v1678
    %v2167 = vpack.c.b16 %v1695, %v1687
    %v2168 = vpack.c.b16 %v1696, %v1688
    %v2169 = vpack.c.b16 %v1697, %v1689
    %v2170 = vpack.c.b16 %v1698, %v1690
    %v2171 = vpack.c.b16 %v1699, %v1691
    %v2172 = vpack.c.b16 %v1700, %v1692
    %v2173 = vpack.c.b16 %v1701, %v1693
    %v2174 = vpack.c.b16 %v1702, %v1694
    %v2175 = vpack.c.b16 %v1711, %v1703
    %v2176 = vpack.c.b16 %v1712, %v1704
    %v2177 = vpack.c.b16 %v1713, %v1705
    %v2178 = vpack.c.b16 %v1714, %v1706
    %v2179 = vpack.c.b16 %v1715, %v1707
    %v2180 = vpack.c.b16 %v1716, %v1708
    %v2181 = vpack.c.b16 %v1717, %v1709
    %v2182 = vpack.c.b16 %v1718, %v1710
    %v2183 = vpack.c.b16 %v1727, %v1719
    %v2184 = vpack.c.b16 %v1728, %v1720
    %v2185 = vpack.c.b16 %v1729, %v1721
    %v2186 = vpack.c.b16 %v1730, %v1722
    %v2187 = vpack.c.b16 %v1731, %v1723
    %v2188 = vpack.c.b16 %v1732, %v1724
    %v2189 = vpack.c.b16 %v1733, %v1725
    %v2190 = vpack.c.b16 %v1734, %v1726
    %v2191 = vpack.c.b16 %v1743, %v1735
    %v2192 = vpack.c.b16 %v1744, %v1736
    %v2193 = vpack.c.b16 %v1745, %v1737
    %v2194 = vpack.c.b16 %v1746, %v1738
    %v2195 = vpack.c.b16 %v1747, %v1739
    %v2196 = vpack.c.b16 %v1748, %v1740
    %v2197 = vpack.c.b16 %v1749, %v1741
    %v2198 = vpack.c.b16 %v1750, %v1742
    %v2199 = vpack.c.b16 %v1759, %v1751
    %v2200 = vpack.c.b16 %v1760, %v1752
    %v2201 = vpack.c.b16 %v1761, %v1753
    %v2202 = vpack.c.b16 %v1762, %v1754
    %v2203 = vpack.c.b16 %v1763, %v1755
    %v2204 = vpack.c.b16 %v1764, %v1756
    %v2205 = vpack.c.b16 %v1765, %v1757
    %v2206 = vpack.c.b16 %v1766, %v1758
    %v2207 = vpack.c.b16 %v1775, %v1767
    %v2208 = vpack.c.b16 %v1776, %v1768
    %v2209 = vpack.c.b16 %v1777, %v1769
    %v2210 = vpack.c.b16 %v1778, %v1770
    %v2211 = vpack.c.b16 %v1779, %v1771
    %v2212 = vpack.c.b16 %v1780, %v1772
    %v2213 = vpack.c.b16 %v1781, %v1773
    %v2214 = vpack.c.b16 %v1782, %v1774
    %v2215 = vpack.c.b16 %v1791, %v1783
    %v2216 = vpack.c.b16 %v1792, %v1784
    %v2217 = vpack.c.b16 %v1793, %v1785
    %v2218 = vpack.c.b16 %v1794, %v1786
    %v2219 = vpack.c.b16 %v1795, %v1787
    %v2220 = vpack.c.b16 %v1796, %v1788
    %v2221 = vpack.c.b16 %v1797, %v1789
    %v2222 = vpack.c.b16 %v1798, %v1790
    %v2223 = vpack.c.b16 %v1807, %v1799
    %v2224 = vpack.c.b16 %v1808, %v1800
    %v2225 = vpack.c.b16 %v1809, %v1801
    %v2226 = vpack.c.b16 %v1810, %v1802
    %v2227 = vpack.c.b16 %v1811, %v1803
    %v2228 = vpack.c.b16 %v1812, %v1804
    %v2229 = vpack.c.b16 %v1813, %v1805
    %v2230 = vpack.c.b16 %v1814, %v1806
    %v2231 = vpack.c.b16 %v1823, %v1815
    %v2232 = vpack.c.b16 %v1824, %v1816
    %v2233 = vpack.c.b16 %v1825, %v1817
    %v2234 = vpack.c.b16 %v1826, %v1818
    %v2235 = vpack.c.b16 %v1827, %v1819
    %v2236 = vpack.c.b16 %v1828, %v1820
    %v2237 = vpack.c.b16 %v1829, %v1821
    %v2238 = vpack.c.b16 %v1830, %v1822
    %v2239 = vpack.c.b16 %v1839, %v1831
    %v2240 = vpack.c.b16 %v1840, %v1832
    %v2241 = vpack.c.b16 %v1841, %v1833
    %v2242 = vpack.c.b16 %v1842, %v1834
    %v2243 = vpack.c.b16 %v1843, %v1835
    %v2244 = vpack.c.b16 %v1844, %v1836
    %v2245 = vpack.c.b16 %v1845, %v1837
    %v2246 = vpack.c.b16 %v1846, %v1838
    %v2247 = vpack.c.b16 %v1855, %v1847
    %v2248 = vpack.c.b16 %v1856, %v1848
    %v2249 = vpack.c.b16 %v1857, %v1849
    %v2250 = vpack.c.b16 %v1858, %v1850
    %v2251 = vpack.c.b16 %v1859, %v1851
    %v2252 = vpack.c.b16 %v1860, %v1852
    %v2253 = vpack.c.b16 %v1861, %v1853
    %v2254 = vpack.c.b16 %v1862, %v1854
    %v2255 = vpack.c.b16 %v1871, %v1863
    %v2256 = vpack.c.b16 %v1872, %v1864
    %v2257 = vpack.c.b16 %v1873, %v1865
    %v2258 = vpack.c.b16 %v1874, %v1866
    %v2259 = vpack.c.b16 %v1875, %v1867
    %v2260 = vpack.c.b16 %v1876, %v1868
    %v2261 = vpack.c.b16 %v1877, %v1869
    %v2262 = vpack.c.b16 %v1878, %v1870
    %v2263 = vpack.c.b16 %v1887, %v1879
    %v2264 = vpack.c.b16 %v1888, %v1880
    %v2265 = vpack.c.b16 %v1889, %v1881
    %v2266 = vpack.c.b16 %v1890, %v1882
    %v2267 = vpack.c.b16 %v1891, %v1883
    %v2268 = vpack.c.b16 %v1892, %v1884
    %v2269 = vpack.c.b16 %v1893, %v1885
    %v2270 = vpack.c.b16 %v1894, %v1886
    %v2271 = vpack.c.b16 %v1903, %v1895
    %v2272 = vpack.c.b16 %v1904, %v1896
    %v2273 = vpack.c.b16 %v1905, %v1897
    %v2274 = vpack.c.b16 %v1906, %v1898
    %v2275 = vpack.c.b16 %v1907, %v1899
    %v2276 = vpack.c.b16 %v1908, %v1900
    %v2277 = vpack.c.b16 %v1909, %v1901
    %v2278 = vpack.c.b16 %v1910, %v1902
    %v2279 = vpack.c.b16 %v1919, %v1911
    %v2280 = vpack.c.b16 %v1920, %v1912
    %v2281 = vpack.c.b16 %v1921, %v1913
    %v2282 = vpack.c.b16 %v1922, %v1914
    %v2283 = vpack.c.b16 %v1923, %v1915
    %v2284 = vpack.c.b16 %v1924, %v1916
    %v2285 = vpack.c.b16 %v1925, %v1917
    %v2286 = vpack.c.b16 %v1926, %v1918
    %v2287 = vpack.c.b16 %v1935, %v1927
    %v2288 = vpack.c.b16 %v1936, %v1928
    %v2289 = vpack.c.b16 %v1937, %v1929
    %v2290 = vpack.c.b16 %v1938, %v1930
    %v2291 = vpack.c.b16 %v1939, %v1931
    %v2292 = vpack.c.b16 %v1940, %v1932
    %v2293 = vpack.c.b16 %v1941, %v1933
    %v2294 = vpack.c.b16 %v1942, %v1934
    %v2295 = vpack.c.b16 %v1951, %v1943
    %v2296 = vpack.c.b16 %v1952, %v1944
    %v2297 = vpack.c.b16 %v1953, %v1945
    %v2298 = vpack.c.b16 %v1954, %v1946
    %v2299 = vpack.c.b16 %v1955, %v1947
    %v2300 = vpack.c.b16 %v1956, %v1948
    %v2301 = vpack.c.b16 %v1957, %v1949
    %v2302 = vpack.c.b16 %v1958, %v1950
    %v2303 = vpack.c.b16 %v1967, %v1959
    %v2304 = vpack.c.b16 %v1968, %v1960
    %v2305 = vpack.c.b16 %v1969, %v1961
    %v2306 = vpack.c.b16 %v1970, %v1962
    %v2307 = vpack.c.b16 %v1971, %v1963
    %v2308 = vpack.c.b16 %v1972, %v1964
    %v2309 = vpack.c.b16 %v1973, %v1965
    %v2310 = vpack.c.b16 %v1974, %v1966
    %v2311 = vpack.c.b16 %v1983, %v1975
    %v2312 = vpack.c.b16 %v1984, %v1976
    %v2313 = vpack.c.b16 %v1985, %v1977
    %v2314 = vpack.c.b16 %v1986, %v1978
    %v2315 = vpack.c.b16 %v1987, %v1979
    %v2316 = vpack.c.b16 %v1988, %v1980
    %v2317 = vpack.c.b16 %v1989, %v1981
    %v2318 = vpack.c.b16 %v1990, %v1982
    %v2319 = vpack.c.b16 %v1999, %v1991
    %v2320 = vpack.c.b16 %v2000, %v1992
    %v2321 = vpack.c.b16 %v2001, %v1993
    %v2322 = vpack.c.b16 %v2002, %v1994
    %v2323 = vpack.c.b16 %v2003, %v1995
    %v2324 = vpack.c.b16 %v2004, %v1996
    %v2325 = vpack.c.b16 %v2005, %v1997
    %v2326 = vpack.c.b16 %v2006, %v1998
    %v2327 = vpack.c.b16 %v2015, %v2007
    %v2328 = vpack.c.b16 %v2016, %v2008
    %v2329 = vpack.c.b16 %v2017, %v2009
    %v2330 = vpack.c.b16 %v2018, %v2010
    %v2331 = vpack.c.b16 %v2019, %v2011
    %v2332 = vpack.c.b16 %v2020, %v2012
    %v2333 = vpack.c.b16 %v2021, %v2013
    %v2334 = vpack.c.b16 %v2022, %v2014
    %v2335 = vpack.c.b16 %v2031, %v2023
    %v2336 = vpack.c.b16 %v2032, %v2024
    %v2337 = vpack.c.b16 %v2033, %v2025
    %v2338 = vpack.c.b16 %v2034, %v2026
    %v2339 = vpack.c.b16 %v2035, %v2027
    %v2340 = vpack.c.b16 %v2036, %v2028
    %v2341 = vpack.c.b16 %v2037, %v2029
    %v2342 = vpack.c.b16 %v2038, %v2030
    %v2343 = vpack.c.b16 %v2047, %v2039
    %v2344 = vpack.c.b16 %v2048, %v2040
    %v2345 = vpack.c.b16 %v2049, %v2041
    %v2346 = vpack.c.b16 %v2050, %v2042
    %v2347 = vpack.c.b16 %v2051, %v2043
    %v2348 = vpack.c.b16 %v2052, %v2044
    %v2349 = vpack.c.b16 %v2053, %v2045
    %v2350 = vpack.c.b16 %v2054, %v2046
    %v2351 = vpack.c.b16 %v2063, %v2055
    %v2352 = vpack.c.b16 %v2064, %v2056
    %v2353 = vpack.c.b16 %v2065, %v2057
    %v2354 = vpack.c.b16 %v2066, %v2058
    %v2355 = vpack.c.b16 %v2067, %v2059
    %v2356 = vpack.c.b16 %v2068, %v2060
    %v2357 = vpack.c.b16 %v2069, %v2061
    %v2358 = vpack.c.b16 %v2070, %v2062
    %v2359 = vpack.c.b16 %v2079, %v2071
    %v2360 = vpack.c.b16 %v2080, %v2072
    %v2361 = vpack.c.b16 %v2081, %v2073
    %v2362 = vpack.c.b16 %v2082, %v2074
    %v2363 = vpack.c.b16 %v2083, %v2075
    %v2364 = vpack.c.b16 %v2084, %v2076
    %v2365 = vpack.c.b16 %v2085, %v2077
    %v2366 = vpack.c.b16 %v2086, %v2078
    %v2367 = vpack.c.b16 %v2095, %v2087
    %v2368 = vpack.c.b16 %v2096, %v2088
    %v2369 = vpack.c.b16 %v2097, %v2089
    %v2370 = vpack.c.b16 %v2098, %v2090
    %v2371 = vpack.c.b16 %v2099, %v2091
    %v2372 = vpack.c.b16 %v2100, %v2092
    %v2373 = vpack.c.b16 %v2101, %v2093
    %v2374 = vpack.c.b16 %v2102, %v2094
    %v2375 = vpack.c.b16 %v2111, %v2103
    %v2376 = vpack.c.b16 %v2112, %v2104
    %v2377 = vpack.c.b16 %v2113, %v2105
    %v2378 = vpack.c.b16 %v2114, %v2106
    %v2379 = vpack.c.b16 %v2115, %v2107
    %v2380 = vpack.c.b16 %v2116, %v2108
    %v2381 = vpack.c.b16 %v2117, %v2109
    %v2382 = vpack.c.b16 %v2118, %v2110
    %v2383 = vpack.c.b16 %v2127, %v2119
    %v2384 = vpack.c.b16 %v2128, %v2120
    %v2385 = vpack.c.b16 %v2129, %v2121
    %v2386 = vpack.c.b16 %v2130, %v2122
    %v2387 = vpack.c.b16 %v2131, %v2123
    %v2388 = vpack.c.b16 %v2132, %v2124
    %v2389 = vpack.c.b16 %v2133, %v2125
    %v2390 = vpack.c.b16 %v2134, %v2126
    %2647 = vmatprep.subr.bf16.mxu0 %v2192
    %2648 = vmatpush1.bf16.msra.mxu0 %v2191
    %2649 = vmatprep.subr.bf16.mxu0 %v2184
    %2650 = vmatpush1.bf16.msra.mxu0 %v2183
    %2651 = vmatprep.subr.bf16.mxu0 %v2176
    %2652 = vmatpush1.bf16.msra.mxu0 %v2175
    %2653 = vmatprep.subr.bf16.mxu0 %v2168
    %2654 = vmatpush1.bf16.msra.mxu0 %v2167
    %2655 = vmatprep.subr.bf16.mxu0 %v2160
    %2656 = vmatpush1.bf16.msra.mxu0 %v2159
    %2657 = vmatprep.subr.bf16.mxu0 %v2152
    %2658 = vmatpush1.bf16.msra.mxu0 %v2151
    %2659 = vmatprep.subr.bf16.mxu0 %v2144
    %2660 = vmatpush1.bf16.msra.mxu0 %v2143
    %2661 = vmatprep.subr.bf16.mxu0 %v2136
    %2662 = vmatpush1.bf16.msra.mxu0 %v2135
    %2663 = vmatprep.subr.bf16.mxu0 %v2256
    %2664 = vmatpush2.bf16.msra.mxu0 %v2255
    %2665 = vmatprep.subr.bf16.mxu0 %v2248
    %2666 = vmatpush2.bf16.msra.mxu0 %v2247
    %2667 = vmatprep.subr.bf16.mxu0 %v2240
    %2668 = vmatpush2.bf16.msra.mxu0 %v2239
    %2669 = vmatprep.subr.bf16.mxu0 %v2232
    %2670 = vmatpush2.bf16.msra.mxu0 %v2231
    %2671 = vmatprep.subr.bf16.mxu0 %v2224
    %2672 = vmatpush2.bf16.msra.mxu0 %v2223
    %2673 = vmatprep.subr.bf16.mxu0 %v2216
    %2674 = vmatpush2.bf16.msra.mxu0 %v2215
    %2675 = vmatprep.subr.bf16.mxu0 %v2208
    %2676 = vmatpush2.bf16.msra.mxu0 %v2207
    %2677 = vmatprep.subr.bf16.mxu0 %v2200
    %2678 = vmatpush2.bf16.msra.mxu0 %v2199
    %2679 = vmatprep.mubr.bf16.mxu0 %v1108
    %2680 = vmatmul.mubr.bf16.gmra.mxu0 %v1107
    %v2681 = vpop.f32.mrf.mxu0
    %v2682 = vadd.f32 0.0, %v2681
    %v2683 = vpop.f32.mrf.mxu0
    %v2684 = vadd.f32 0.0, %v2683
    %v2685 = vpop.f32.mrf.mxu0
    %v2686 = vpop.f32.mrf.mxu0
    %2687 = vdwg.mxu0
    %2688 = vmatprep.subr.bf16.mxu0 %v2320
    %2689 = vmatpush1.bf16.msra.mxu0 %v2319
    %2690 = vmatprep.subr.bf16.mxu0 %v2312
    %2691 = vmatpush1.bf16.msra.mxu0 %v2311
    %2692 = vmatprep.subr.bf16.mxu0 %v2304
    %2693 = vmatpush1.bf16.msra.mxu0 %v2303
    %2694 = vmatprep.subr.bf16.mxu0 %v2296
    %2695 = vmatpush1.bf16.msra.mxu0 %v2295
    %2696 = vmatprep.subr.bf16.mxu0 %v2288
    %2697 = vmatpush1.bf16.msra.mxu0 %v2287
    %2698 = vmatprep.subr.bf16.mxu0 %v2280
    %2699 = vmatpush1.bf16.msra.mxu0 %v2279
    %2700 = vmatprep.subr.bf16.mxu0 %v2272
    %2701 = vmatpush1.bf16.msra.mxu0 %v2271
    %2702 = vmatprep.subr.bf16.mxu0 %v2264
    %2703 = vmatpush1.bf16.msra.mxu0 %v2263
    %2704 = vmatprep.subr.bf16.mxu0 %v2384
    %2705 = vmatpush2.bf16.msra.mxu0 %v2383
    %2706 = vmatprep.subr.bf16.mxu0 %v2376
    %2707 = vmatpush2.bf16.msra.mxu0 %v2375
    %2708 = vmatprep.subr.bf16.mxu0 %v2368
    %2709 = vmatpush2.bf16.msra.mxu0 %v2367
    %2710 = vmatprep.subr.bf16.mxu0 %v2360
    %2711 = vmatpush2.bf16.msra.mxu0 %v2359
    %2712 = vmatprep.subr.bf16.mxu0 %v2352
    %2713 = vmatpush2.bf16.msra.mxu0 %v2351
    %2714 = vmatprep.subr.bf16.mxu0 %v2344
    %2715 = vmatpush2.bf16.msra.mxu0 %v2343
    %2716 = vmatprep.subr.bf16.mxu0 %v2336
    %2717 = vmatpush2.bf16.msra.mxu0 %v2335
    %2718 = vmatprep.subr.bf16.mxu0 %v2328
    %2719 = vmatpush2.bf16.msra.mxu0 %v2327
    %2720 = vmatprep.mubr.bf16.mxu0 %v1110
    %2721 = vmatmul.mubr.bf16.gmra.mxu0 %v1109
    %v2722 = vpop.f32.mrf.mxu0
    %v2723 = vadd.f32 %v2682, %v2722
    %v2724 = vpop.f32.mrf.mxu0
    %v2725 = vadd.f32 %v2684, %v2724
    %v2726 = vpop.f32.mrf.mxu0
    %v2727 = vpop.f32.mrf.mxu0
    %2728 = vdwg.mxu0
    %2729 = vmatprep.subr.bf16.mxu0 %v2194
    %2730 = vmatpush1.bf16.msra.mxu0 %v2193
    %2731 = vmatprep.subr.bf16.mxu0 %v2186
    %2732 = vmatpush1.bf16.msra.mxu0 %v2185
    %2733 = vmatprep.subr.bf16.mxu0 %v2178
    %2734 = vmatpush1.bf16.msra.mxu0 %v2177
    %2735 = vmatprep.subr.bf16.mxu0 %v2170
    %2736 = vmatpush1.bf16.msra.mxu0 %v2169
    %2737 = vmatprep.subr.bf16.mxu0 %v2162
    %2738 = vmatpush1.bf16.msra.mxu0 %v2161
    %2739 = vmatprep.subr.bf16.mxu0 %v2154
    %2740 = vmatpush1.bf16.msra.mxu0 %v2153
    %2741 = vmatprep.subr.bf16.mxu0 %v2146
    %2742 = vmatpush1.bf16.msra.mxu0 %v2145
    %2743 = vmatprep.subr.bf16.mxu0 %v2138
    %2744 = vmatpush1.bf16.msra.mxu0 %v2137
    %2745 = vmatprep.subr.bf16.mxu0 %v2258
    %2746 = vmatpush2.bf16.msra.mxu0 %v2257
    %2747 = vmatprep.subr.bf16.mxu0 %v2250
    %2748 = vmatpush2.bf16.msra.mxu0 %v2249
    %2749 = vmatprep.subr.bf16.mxu0 %v2242
    %2750 = vmatpush2.bf16.msra.mxu0 %v2241
    %2751 = vmatprep.subr.bf16.mxu0 %v2234
    %2752 = vmatpush2.bf16.msra.mxu0 %v2233
    %2753 = vmatprep.subr.bf16.mxu0 %v2226
    %2754 = vmatpush2.bf16.msra.mxu0 %v2225
    %2755 = vmatprep.subr.bf16.mxu0 %v2218
    %2756 = vmatpush2.bf16.msra.mxu0 %v2217
    %2757 = vmatprep.subr.bf16.mxu0 %v2210
    %2758 = vmatpush2.bf16.msra.mxu0 %v2209
    %2759 = vmatprep.subr.bf16.mxu0 %v2202
    %2760 = vmatpush2.bf16.msra.mxu0 %v2201
    %2761 = vmatprep.mubr.bf16.mxu0 %v1108
    %2762 = vmatmul.mubr.bf16.gmra.mxu0 %v1107
    %v2763 = vpop.f32.mrf.mxu0
    %v2764 = vadd.f32 0.0, %v2763
    %v2765 = vpop.f32.mrf.mxu0
    %v2766 = vadd.f32 0.0, %v2765
    %v2767 = vpop.f32.mrf.mxu0
    %v2768 = vpop.f32.mrf.mxu0
    %2769 = vdwg.mxu0
    %2770 = vmatprep.subr.bf16.mxu0 %v2322
    %2771 = vmatpush1.bf16.msra.mxu0 %v2321
    %2772 = vmatprep.subr.bf16.mxu0 %v2314
    %2773 = vmatpush1.bf16.msra.mxu0 %v2313
    %2774 = vmatprep.subr.bf16.mxu0 %v2306
    %2775 = vmatpush1.bf16.msra.mxu0 %v2305
    %2776 = vmatprep.subr.bf16.mxu0 %v2298
    %2777 = vmatpush1.bf16.msra.mxu0 %v2297
    %2778 = vmatprep.subr.bf16.mxu0 %v2290
    %2779 = vmatpush1.bf16.msra.mxu0 %v2289
    %2780 = vmatprep.subr.bf16.mxu0 %v2282
    %2781 = vmatpush1.bf16.msra.mxu0 %v2281
    %2782 = vmatprep.subr.bf16.mxu0 %v2274
    %2783 = vmatpush1.bf16.msra.mxu0 %v2273
    %2784 = vmatprep.subr.bf16.mxu0 %v2266
    %2785 = vmatpush1.bf16.msra.mxu0 %v2265
    %2786 = vmatprep.subr.bf16.mxu0 %v2386
    %2787 = vmatpush2.bf16.msra.mxu0 %v2385
    %2788 = vmatprep.subr.bf16.mxu0 %v2378
    %2789 = vmatpush2.bf16.msra.mxu0 %v2377
    %2790 = vmatprep.subr.bf16.mxu0 %v2370
    %2791 = vmatpush2.bf16.msra.mxu0 %v2369
    %2792 = vmatprep.subr.bf16.mxu0 %v2362
    %2793 = vmatpush2.bf16.msra.mxu0 %v2361
    %2794 = vmatprep.subr.bf16.mxu0 %v2354
    %2795 = vmatpush2.bf16.msra.mxu0 %v2353
    %2796 = vmatprep.subr.bf16.mxu0 %v2346
    %2797 = vmatpush2.bf16.msra.mxu0 %v2345
    %2798 = vmatprep.subr.bf16.mxu0 %v2338
    %2799 = vmatpush2.bf16.msra.mxu0 %v2337
    %2800 = vmatprep.subr.bf16.mxu0 %v2330
    %2801 = vmatpush2.bf16.msra.mxu0 %v2329
    %2802 = vmatprep.mubr.bf16.mxu0 %v1110
    %2803 = vmatmul.mubr.bf16.gmra.mxu0 %v1109
    %v2804 = vpop.f32.mrf.mxu0
    %v2805 = vadd.f32 %v2764, %v2804
    %v2806 = vpop.f32.mrf.mxu0
    %v2807 = vadd.f32 %v2766, %v2806
    %v2808 = vpop.f32.mrf.mxu0
    %v2809 = vpop.f32.mrf.mxu0
    %2810 = vdwg.mxu0
    %2811 = vmatprep.subr.bf16.mxu0 %v2196
    %2812 = vmatpush1.bf16.msra.mxu0 %v2195
    %2813 = vmatprep.subr.bf16.mxu0 %v2188
    %2814 = vmatpush1.bf16.msra.mxu0 %v2187
    %2815 = vmatprep.subr.bf16.mxu0 %v2180
    %2816 = vmatpush1.bf16.msra.mxu0 %v2179
    %2817 = vmatprep.subr.bf16.mxu0 %v2172
    %2818 = vmatpush1.bf16.msra.mxu0 %v2171
    %2819 = vmatprep.subr.bf16.mxu0 %v2164
    %2820 = vmatpush1.bf16.msra.mxu0 %v2163
    %2821 = vmatprep.subr.bf16.mxu0 %v2156
    %2822 = vmatpush1.bf16.msra.mxu0 %v2155
    %2823 = vmatprep.subr.bf16.mxu0 %v2148
    %2824 = vmatpush1.bf16.msra.mxu0 %v2147
    %2825 = vmatprep.subr.bf16.mxu0 %v2140
    %2826 = vmatpush1.bf16.msra.mxu0 %v2139
    %2827 = vmatprep.subr.bf16.mxu0 %v2260
    %2828 = vmatpush2.bf16.msra.mxu0 %v2259
    %2829 = vmatprep.subr.bf16.mxu0 %v2252
    %2830 = vmatpush2.bf16.msra.mxu0 %v2251
    %2831 = vmatprep.subr.bf16.mxu0 %v2244
    %2832 = vmatpush2.bf16.msra.mxu0 %v2243
    %2833 = vmatprep.subr.bf16.mxu0 %v2236
    %2834 = vmatpush2.bf16.msra.mxu0 %v2235
    %2835 = vmatprep.subr.bf16.mxu0 %v2228
    %2836 = vmatpush2.bf16.msra.mxu0 %v2227
    %2837 = vmatprep.subr.bf16.mxu0 %v2220
    %2838 = vmatpush2.bf16.msra.mxu0 %v2219
    %2839 = vmatprep.subr.bf16.mxu0 %v2212
    %2840 = vmatpush2.bf16.msra.mxu0 %v2211
    %2841 = vmatprep.subr.bf16.mxu0 %v2204
    %2842 = vmatpush2.bf16.msra.mxu0 %v2203
    %2843 = vmatprep.mubr.bf16.mxu0 %v1108
    %2844 = vmatmul.mubr.bf16.gmra.mxu0 %v1107
    %v2845 = vpop.f32.mrf.mxu0
    %v2846 = vadd.f32 0.0, %v2845
    %v2847 = vpop.f32.mrf.mxu0
    %v2848 = vadd.f32 0.0, %v2847
    %v2849 = vpop.f32.mrf.mxu0
    %v2850 = vpop.f32.mrf.mxu0
    %2851 = vdwg.mxu0
    %2852 = vmatprep.subr.bf16.mxu0 %v2324
    %2853 = vmatpush1.bf16.msra.mxu0 %v2323
    %2854 = vmatprep.subr.bf16.mxu0 %v2316
    %2855 = vmatpush1.bf16.msra.mxu0 %v2315
    %2856 = vmatprep.subr.bf16.mxu0 %v2308
    %2857 = vmatpush1.bf16.msra.mxu0 %v2307
    %2858 = vmatprep.subr.bf16.mxu0 %v2300
    %2859 = vmatpush1.bf16.msra.mxu0 %v2299
    %2860 = vmatprep.subr.bf16.mxu0 %v2292
    %2861 = vmatpush1.bf16.msra.mxu0 %v2291
    %2862 = vmatprep.subr.bf16.mxu0 %v2284
    %2863 = vmatpush1.bf16.msra.mxu0 %v2283
    %2864 = vmatprep.subr.bf16.mxu0 %v2276
    %2865 = vmatpush1.bf16.msra.mxu0 %v2275
    %2866 = vmatprep.subr.bf16.mxu0 %v2268
    %2867 = vmatpush1.bf16.msra.mxu0 %v2267
    %2868 = vmatprep.subr.bf16.mxu0 %v2388
    %2869 = vmatpush2.bf16.msra.mxu0 %v2387
    %2870 = vmatprep.subr.bf16.mxu0 %v2380
    %2871 = vmatpush2.bf16.msra.mxu0 %v2379
    %2872 = vmatprep.subr.bf16.mxu0 %v2372
    %2873 = vmatpush2.bf16.msra.mxu0 %v2371
    %2874 = vmatprep.subr.bf16.mxu0 %v2364
    %2875 = vmatpush2.bf16.msra.mxu0 %v2363
    %2876 = vmatprep.subr.bf16.mxu0 %v2356
    %2877 = vmatpush2.bf16.msra.mxu0 %v2355
    %2878 = vmatprep.subr.bf16.mxu0 %v2348
    %2879 = vmatpush2.bf16.msra.mxu0 %v2347
    %2880 = vmatprep.subr.bf16.mxu0 %v2340
    %2881 = vmatpush2.bf16.msra.mxu0 %v2339
    %2882 = vmatprep.subr.bf16.mxu0 %v2332
    %2883 = vmatpush2.bf16.msra.mxu0 %v2331
    %2884 = vmatprep.mubr.bf16.mxu0 %v1110
    %2885 = vmatmul.mubr.bf16.gmra.mxu0 %v1109
    %v2886 = vpop.f32.mrf.mxu0
    %v2887 = vadd.f32 %v2846, %v2886
    %v2888 = vpop.f32.mrf.mxu0
    %v2889 = vadd.f32 %v2848, %v2888
    %v2890 = vpop.f32.mrf.mxu0
    %v2891 = vpop.f32.mrf.mxu0
    %2892 = vdwg.mxu0
    %2893 = vmatprep.subr.bf16.mxu0 %v2198
    %2894 = vmatpush1.bf16.msra.mxu0 %v2197
    %2895 = vmatprep.subr.bf16.mxu0 %v2190
    %2896 = vmatpush1.bf16.msra.mxu0 %v2189
    %2897 = vmatprep.subr.bf16.mxu0 %v2182
    %2898 = vmatpush1.bf16.msra.mxu0 %v2181
    %2899 = vmatprep.subr.bf16.mxu0 %v2174
    %2900 = vmatpush1.bf16.msra.mxu0 %v2173
    %2901 = vmatprep.subr.bf16.mxu0 %v2166
    %2902 = vmatpush1.bf16.msra.mxu0 %v2165
    %2903 = vmatprep.subr.bf16.mxu0 %v2158
    %2904 = vmatpush1.bf16.msra.mxu0 %v2157
    %2905 = vmatprep.subr.bf16.mxu0 %v2150
    %2906 = vmatpush1.bf16.msra.mxu0 %v2149
    %2907 = vmatprep.subr.bf16.mxu0 %v2142
    %2908 = vmatpush1.bf16.msra.mxu0 %v2141
    %2909 = vmatprep.subr.bf16.mxu0 %v2262
    %2910 = vmatpush2.bf16.msra.mxu0 %v2261
    %2911 = vmatprep.subr.bf16.mxu0 %v2254
    %2912 = vmatpush2.bf16.msra.mxu0 %v2253
    %2913 = vmatprep.subr.bf16.mxu0 %v2246
    %2914 = vmatpush2.bf16.msra.mxu0 %v2245
    %2915 = vmatprep.subr.bf16.mxu0 %v2238
    %2916 = vmatpush2.bf16.msra.mxu0 %v2237
    %2917 = vmatprep.subr.bf16.mxu0 %v2230
    %2918 = vmatpush2.bf16.msra.mxu0 %v2229
    %2919 = vmatprep.subr.bf16.mxu0 %v2222
    %2920 = vmatpush2.bf16.msra.mxu0 %v2221
    %2921 = vmatprep.subr.bf16.mxu0 %v2214
    %2922 = vmatpush2.bf16.msra.mxu0 %v2213
    %2923 = vmatprep.subr.bf16.mxu0 %v2206
    %2924 = vmatpush2.bf16.msra.mxu0 %v2205
    %2925 = vmatprep.mubr.bf16.mxu0 %v1108
    %2926 = vmatmul.mubr.bf16.gmra.mxu0 %v1107
    %v2927 = vpop.f32.mrf.mxu0
    %v2928 = vadd.f32 0.0, %v2927
    %v2929 = vpop.f32.mrf.mxu0
    %v2930 = vadd.f32 0.0, %v2929
    %v2931 = vpop.f32.mrf.mxu0
    %v2932 = vpop.f32.mrf.mxu0
    %2933 = vdwg.mxu0
    %2934 = vmatprep.subr.bf16.mxu0 %v2326
    %2935 = vmatpush1.bf16.msra.mxu0 %v2325
    %2936 = vmatprep.subr.bf16.mxu0 %v2318
    %2937 = vmatpush1.bf16.msra.mxu0 %v2317
    %2938 = vmatprep.subr.bf16.mxu0 %v2310
    %2939 = vmatpush1.bf16.msra.mxu0 %v2309
    %2940 = vmatprep.subr.bf16.mxu0 %v2302
    %2941 = vmatpush1.bf16.msra.mxu0 %v2301
    %2942 = vmatprep.subr.bf16.mxu0 %v2294
    %2943 = vmatpush1.bf16.msra.mxu0 %v2293
    %2944 = vmatprep.subr.bf16.mxu0 %v2286
    %2945 = vmatpush1.bf16.msra.mxu0 %v2285
    %2946 = vmatprep.subr.bf16.mxu0 %v2278
    %2947 = vmatpush1.bf16.msra.mxu0 %v2277
    %2948 = vmatprep.subr.bf16.mxu0 %v2270
    %2949 = vmatpush1.bf16.msra.mxu0 %v2269
    %2950 = vmatprep.subr.bf16.mxu0 %v2390
    %2951 = vmatpush2.bf16.msra.mxu0 %v2389
    %2952 = vmatprep.subr.bf16.mxu0 %v2382
    %2953 = vmatpush2.bf16.msra.mxu0 %v2381
    %2954 = vmatprep.subr.bf16.mxu0 %v2374
    %2955 = vmatpush2.bf16.msra.mxu0 %v2373
    %2956 = vmatprep.subr.bf16.mxu0 %v2366
    %2957 = vmatpush2.bf16.msra.mxu0 %v2365
    %2958 = vmatprep.subr.bf16.mxu0 %v2358
    %2959 = vmatpush2.bf16.msra.mxu0 %v2357
    %2960 = vmatprep.subr.bf16.mxu0 %v2350
    %2961 = vmatpush2.bf16.msra.mxu0 %v2349
    %2962 = vmatprep.subr.bf16.mxu0 %v2342
    %2963 = vmatpush2.bf16.msra.mxu0 %v2341
    %2964 = vmatprep.subr.bf16.mxu0 %v2334
    %2965 = vmatpush2.bf16.msra.mxu0 %v2333
    %2966 = vmatprep.mubr.bf16.mxu0 %v1110
    %2967 = vmatmul.mubr.bf16.gmra.mxu0 %v1109
    %v2968 = vpop.f32.mrf.mxu0
    %v2969 = vadd.f32 %v2928, %v2968
    %v2970 = vpop.f32.mrf.mxu0
    %v2971 = vadd.f32 %v2930, %v2970
    %v2972 = vpop.f32.mrf.mxu0
    %v2973 = vpop.f32.mrf.mxu0
    %2974 = vdwg.mxu0
    %v2975 = vld [vmem:[#allocation16] sm:$0xff]
    %v2976 = vld [vmem:[#allocation17] sm:$0xff]
    %v2977 = vrot.slane %v2723, 4
    %v2978 = vadd.f32 %v2723, %v2977
    %v2979 = vrot.slane %v2978, 2
    %v2980 = vadd.f32 %v2978, %v2979
    %v2981 = vrot.slane %v2980, 1
    %v2982 = vadd.f32 %v2980, %v2981
    %v2983 = vrot.slane %v2725, 4
    %v2984 = vadd.f32 %v2725, %v2983
    %v2985 = vrot.slane %v2984, 2
    %v2986 = vadd.f32 %v2984, %v2985
    %v2987 = vrot.slane %v2986, 1
    %v2988 = vadd.f32 %v2986, %v2987
    %v2989 = vrot.slane %v2805, 4
    %v2990 = vadd.f32 %v2805, %v2989
    %v2991 = vrot.slane %v2990, 2
    %v2992 = vadd.f32 %v2990, %v2991
    %v2993 = vrot.slane %v2992, 1
    %v2994 = vadd.f32 %v2992, %v2993
    %v2995 = vrot.slane %v2807, 4
    %v2996 = vadd.f32 %v2807, %v2995
    %v2997 = vrot.slane %v2996, 2
    %v2998 = vadd.f32 %v2996, %v2997
    %v2999 = vrot.slane %v2998, 1
    %v3000 = vadd.f32 %v2998, %v2999
    %v3001 = vrot.slane %v2887, 4
    %v3002 = vadd.f32 %v2887, %v3001
    %v3003 = vrot.slane %v3002, 2
    %v3004 = vadd.f32 %v3002, %v3003
    %v3005 = vrot.slane %v3004, 1
    %v3006 = vadd.f32 %v3004, %v3005
    %v3007 = vrot.slane %v2889, 4
    %v3008 = vadd.f32 %v2889, %v3007
    %v3009 = vrot.slane %v3008, 2
    %v3010 = vadd.f32 %v3008, %v3009
    %v3011 = vrot.slane %v3010, 1
    %v3012 = vadd.f32 %v3010, %v3011
    %v3013 = vrot.slane %v2969, 4
    %v3014 = vadd.f32 %v2969, %v3013
    %v3015 = vrot.slane %v3014, 2
    %v3016 = vadd.f32 %v3014, %v3015
    %v3017 = vrot.slane %v3016, 1
    %v3018 = vadd.f32 %v3016, %v3017
    %v3019 = vrot.slane %v2971, 4
    %v3020 = vadd.f32 %v2971, %v3019
    %v3021 = vrot.slane %v3020, 2
    %v3022 = vadd.f32 %v3020, %v3021
    %v3023 = vrot.slane %v3022, 1
    %v3024 = vadd.f32 %v3022, %v3023
    %v3025 = vmul.f32 %v2982, %v342
    %v3026 = vmul.f32 %v2988, %v342
    %v3027 = vmul.f32 %v2994, %v342
    %v3028 = vmul.f32 %v3000, %v342
    %v3029 = vmul.f32 %v3006, %v342
    %v3030 = vmul.f32 %v3012, %v342
    %v3031 = vmul.f32 %v3018, %v342
    %v3032 = vmul.f32 %v3024, %v342
    %v3033 = vsub.f32 %v2723, %v3025
    %v3034 = vsub.f32 %v2725, %v3026
    %v3035 = vsub.f32 %v2805, %v3027
    %v3036 = vsub.f32 %v2807, %v3028
    %v3037 = vsub.f32 %v2887, %v3029
    %v3038 = vsub.f32 %v2889, %v3030
    %v3039 = vsub.f32 %v2969, %v3031
    %v3040 = vsub.f32 %v2971, %v3032
    %v3041 = vmul.f32 %v3033, %v3033
    %v3042 = vmul.f32 %v3034, %v3034
    %v3043 = vmul.f32 %v3035, %v3035
    %v3044 = vmul.f32 %v3036, %v3036
    %v3045 = vmul.f32 %v3037, %v3037
    %v3046 = vmul.f32 %v3038, %v3038
    %v3047 = vmul.f32 %v3039, %v3039
    %v3048 = vmul.f32 %v3040, %v3040
    %v3049 = vrot.slane %v3041, 4
    %v3050 = vadd.f32 %v3041, %v3049
    %v3051 = vrot.slane %v3050, 2
    %v3052 = vadd.f32 %v3050, %v3051
    %v3053 = vrot.slane %v3052, 1
    %v3054 = vadd.f32 %v3052, %v3053
    %v3055 = vrot.slane %v3042, 4
    %v3056 = vadd.f32 %v3042, %v3055
    %v3057 = vrot.slane %v3056, 2
    %v3058 = vadd.f32 %v3056, %v3057
    %v3059 = vrot.slane %v3058, 1
    %v3060 = vadd.f32 %v3058, %v3059
    %v3061 = vrot.slane %v3043, 4
    %v3062 = vadd.f32 %v3043, %v3061
    %v3063 = vrot.slane %v3062, 2
    %v3064 = vadd.f32 %v3062, %v3063
    %v3065 = vrot.slane %v3064, 1
    %v3066 = vadd.f32 %v3064, %v3065
    %v3067 = vrot.slane %v3044, 4
    %v3068 = vadd.f32 %v3044, %v3067
    %v3069 = vrot.slane %v3068, 2
    %v3070 = vadd.f32 %v3068, %v3069
    %v3071 = vrot.slane %v3070, 1
    %v3072 = vadd.f32 %v3070, %v3071
    %v3073 = vrot.slane %v3045, 4
    %v3074 = vadd.f32 %v3045, %v3073
    %v3075 = vrot.slane %v3074, 2
    %v3076 = vadd.f32 %v3074, %v3075
    %v3077 = vrot.slane %v3076, 1
    %v3078 = vadd.f32 %v3076, %v3077
    %v3079 = vrot.slane %v3046, 4
    %v3080 = vadd.f32 %v3046, %v3079
    %v3081 = vrot.slane %v3080, 2
    %v3082 = vadd.f32 %v3080, %v3081
    %v3083 = vrot.slane %v3082, 1
    %v3084 = vadd.f32 %v3082, %v3083
    %v3085 = vrot.slane %v3047, 4
    %v3086 = vadd.f32 %v3047, %v3085
    %v3087 = vrot.slane %v3086, 2
    %v3088 = vadd.f32 %v3086, %v3087
    %v3089 = vrot.slane %v3088, 1
    %v3090 = vadd.f32 %v3088, %v3089
    %v3091 = vrot.slane %v3048, 4
    %v3092 = vadd.f32 %v3048, %v3091
    %v3093 = vrot.slane %v3092, 2
    %v3094 = vadd.f32 %v3092, %v3093
    %v3095 = vrot.slane %v3094, 1
    %v3096 = vadd.f32 %v3094, %v3095
    %v3097 = vmul.f32 %v3054, %v342
    %v3098 = vmul.f32 %v3060, %v342
    %v3099 = vmul.f32 %v3066, %v342
    %v3100 = vmul.f32 %v3072, %v342
    %v3101 = vmul.f32 %v3078, %v342
    %v3102 = vmul.f32 %v3084, %v342
    %v3103 = vmul.f32 %v3090, %v342
    %v3104 = vmul.f32 %v3096, %v342
    %v3105 = vadd.f32 %v3097, 1e-05
    %v3106 = vadd.f32 %v3098, 1e-05
    %v3107 = vadd.f32 %v3099, 1e-05
    %v3108 = vadd.f32 %v3100, 1e-05
    %v3109 = vadd.f32 %v3101, 1e-05
    %v3110 = vadd.f32 %v3102, 1e-05
    %v3111 = vadd.f32 %v3103, 1e-05
    %v3112 = vadd.f32 %v3104, 1e-05
    %v3113 = vrsqrt.pop %v3105
    %v3114 = vrsqrt.pop %v3106
    %v3115 = vrsqrt.pop %v3107
    %v3116 = vrsqrt.pop %v3108
    %v3117 = vrsqrt.pop %v3109
    %v3118 = vrsqrt.pop %v3110
    %v3119 = vrsqrt.pop %v3111
    %v3120 = vrsqrt.pop %v3112
    %v3129 = vcombine.low %v3113, %v3114
    %v3130 = vcombine.low %v3115, %v3116
    %v3131 = vcombine.low %v3117, %v3118
    %v3132 = vcombine.low %v3119, %v3120
    %v3134 = vunpack.c.l.s4 1966171168
    %v3135 = vunpack.c.0.s8 %v3134
    %v3136 = vlaneseq
    %v3137 = vshrl.u32 %v3136, 7
    %v3138 = vsub.s32 %v3135, %v3137
    %v3139 = vrot.slane %v3129, %v3138
    %v3141 = vunpack.c.l.s4 1966171168
    %v3142 = vunpack.c.0.s8 %v3141
    %v3143 = vlaneseq
    %v3144 = vshrl.u32 %v3143, 7
    %v3145 = vsub.s32 %v3142, %v3144
    %v3146 = vrot.slane %v3130, %v3145
    %v3148 = vunpack.c.l.s4 1966171168
    %v3149 = vunpack.c.0.s8 %v3148
    %v3150 = vlaneseq
    %v3151 = vshrl.u32 %v3150, 7
    %v3152 = vsub.s32 %v3149, %v3151
    %v3153 = vrot.slane %v3131, %v3152
    %v3155 = vunpack.c.l.s4 1966171168
    %v3156 = vunpack.c.0.s8 %v3155
    %v3157 = vlaneseq
    %v3158 = vshrl.u32 %v3157, 7
    %v3159 = vsub.s32 %v3156, %v3158
    %v3160 = vrot.slane %v3132, %v3159
    %v3161 = vcombine.low %v3139, %v3146
    %v3162 = vcombine.low %v3153, %v3160
    %v3164 = vunpack.c.l.s4 1966171168
    %v3165 = vunpack.c.0.s8 %v3164
    %v3166 = vlaneseq
    %v3167 = vshrl.u32 %v3166, 7
    %v3168 = vsub.s32 %v3165, %v3167
    %v3169 = vrot.slane %v3161, %v3168
    %v3171 = vunpack.c.l.s4 1966171168
    %v3172 = vunpack.c.0.s8 %v3171
    %v3173 = vlaneseq
    %v3174 = vshrl.u32 %v3173, 7
    %v3175 = vsub.s32 %v3172, %v3174
    %v3176 = vrot.slane %v3162, %v3175
    %v3177 = vcombine.low %v3169, %v3176
    %v3179 = vmul.f32 %v2975, %v3177
    %v3181 = vlaneseq
    %v3182 = vshrl.u32 %v3181, 7
    %v3183 = vsub.s32 0, %v3182
    %v3184 = vrot.slane %v3179, %v3183
    %v3185 = vlaneseq
    %v3186 = vshrl.u32 %v3185, 7
    %v3187 = vsub.s32 1, %v3186
    %v3188 = vrot.slane %v3179, %v3187
    %v3189 = vlaneseq
    %v3190 = vshrl.u32 %v3189, 7
    %v3191 = vsub.s32 2, %v3190
    %v3192 = vrot.slane %v3179, %v3191
    %v3193 = vlaneseq
    %v3194 = vshrl.u32 %v3193, 7
    %v3195 = vsub.s32 3, %v3194
    %v3196 = vrot.slane %v3179, %v3195
    %v3197 = vlaneseq
    %v3198 = vshrl.u32 %v3197, 7
    %v3199 = vsub.s32 4, %v3198
    %v3200 = vrot.slane %v3179, %v3199
    %v3201 = vlaneseq
    %v3202 = vshrl.u32 %v3201, 7
    %v3203 = vsub.s32 5, %v3202
    %v3204 = vrot.slane %v3179, %v3203
    %v3205 = vlaneseq
    %v3206 = vshrl.u32 %v3205, 7
    %v3207 = vsub.s32 6, %v3206
    %v3208 = vrot.slane %v3179, %v3207
    %v3209 = vlaneseq
    %v3210 = vshrl.u32 %v3209, 7
    %v3211 = vsub.s32 7, %v3210
    %v3212 = vrot.slane %v3179, %v3211
    %v3221 = vmul.f32 %v3025, %v3184
    %v3222 = vmul.f32 %v3026, %v3188
    %v3223 = vmul.f32 %v3027, %v3192
    %v3224 = vmul.f32 %v3028, %v3196
    %v3225 = vmul.f32 %v3029, %v3200
    %v3226 = vmul.f32 %v3030, %v3204
    %v3227 = vmul.f32 %v3031, %v3208
    %v3228 = vmul.f32 %v3032, %v3212
    %v3237 = vcombine.low %v3221, %v3222
    %v3238 = vcombine.low %v3223, %v3224
    %v3239 = vcombine.low %v3225, %v3226
    %v3240 = vcombine.low %v3227, %v3228
    %v3242 = vunpack.c.l.s4 1966171168
    %v3243 = vunpack.c.0.s8 %v3242
    %v3244 = vlaneseq
    %v3245 = vshrl.u32 %v3244, 7
    %v3246 = vsub.s32 %v3243, %v3245
    %v3247 = vrot.slane %v3237, %v3246
    %v3249 = vunpack.c.l.s4 1966171168
    %v3250 = vunpack.c.0.s8 %v3249
    %v3251 = vlaneseq
    %v3252 = vshrl.u32 %v3251, 7
    %v3253 = vsub.s32 %v3250, %v3252
    %v3254 = vrot.slane %v3238, %v3253
    %v3256 = vunpack.c.l.s4 1966171168
    %v3257 = vunpack.c.0.s8 %v3256
    %v3258 = vlaneseq
    %v3259 = vshrl.u32 %v3258, 7
    %v3260 = vsub.s32 %v3257, %v3259
    %v3261 = vrot.slane %v3239, %v3260
    %v3263 = vunpack.c.l.s4 1966171168
    %v3264 = vunpack.c.0.s8 %v3263
    %v3265 = vlaneseq
    %v3266 = vshrl.u32 %v3265, 7
    %v3267 = vsub.s32 %v3264, %v3266
    %v3268 = vrot.slane %v3240, %v3267
    %v3269 = vcombine.low %v3247, %v3254
    %v3270 = vcombine.low %v3261, %v3268
    %v3272 = vunpack.c.l.s4 1966171168
    %v3273 = vunpack.c.0.s8 %v3272
    %v3274 = vlaneseq
    %v3275 = vshrl.u32 %v3274, 7
    %v3276 = vsub.s32 %v3273, %v3275
    %v3277 = vrot.slane %v3269, %v3276
    %v3279 = vunpack.c.l.s4 1966171168
    %v3280 = vunpack.c.0.s8 %v3279
    %v3281 = vlaneseq
    %v3282 = vshrl.u32 %v3281, 7
    %v3283 = vsub.s32 %v3280, %v3282
    %v3284 = vrot.slane %v3270, %v3283
    %v3285 = vcombine.low %v3277, %v3284
    %v3287 = vsub.f32 %v2976, %v3285
    %v3288 = vmul.f32 %v2723, %v3184
    %v3289 = vmul.f32 %v2725, %v3188
    %v3290 = vmul.f32 %v2805, %v3192
    %v3291 = vmul.f32 %v2807, %v3196
    %v3292 = vmul.f32 %v2887, %v3200
    %v3293 = vmul.f32 %v2889, %v3204
    %v3294 = vmul.f32 %v2969, %v3208
    %v3295 = vmul.f32 %v2971, %v3212
    %v3297 = vlaneseq
    %v3298 = vshrl.u32 %v3297, 7
    %v3299 = vsub.s32 0, %v3298
    %v3300 = vrot.slane %v3287, %v3299
    %v3301 = vlaneseq
    %v3302 = vshrl.u32 %v3301, 7
    %v3303 = vsub.s32 1, %v3302
    %v3304 = vrot.slane %v3287, %v3303
    %v3305 = vlaneseq
    %v3306 = vshrl.u32 %v3305, 7
    %v3307 = vsub.s32 2, %v3306
    %v3308 = vrot.slane %v3287, %v3307
    %v3309 = vlaneseq
    %v3310 = vshrl.u32 %v3309, 7
    %v3311 = vsub.s32 3, %v3310
    %v3312 = vrot.slane %v3287, %v3311
    %v3313 = vlaneseq
    %v3314 = vshrl.u32 %v3313, 7
    %v3315 = vsub.s32 4, %v3314
    %v3316 = vrot.slane %v3287, %v3315
    %v3317 = vlaneseq
    %v3318 = vshrl.u32 %v3317, 7
    %v3319 = vsub.s32 5, %v3318
    %v3320 = vrot.slane %v3287, %v3319
    %v3321 = vlaneseq
    %v3322 = vshrl.u32 %v3321, 7
    %v3323 = vsub.s32 6, %v3322
    %v3324 = vrot.slane %v3287, %v3323
    %v3325 = vlaneseq
    %v3326 = vshrl.u32 %v3325, 7
    %v3327 = vsub.s32 7, %v3326
    %v3328 = vrot.slane %v3287, %v3327
    %v3337 = vadd.f32 %v3288, %v3300
    %v3338 = vadd.f32 %v3289, %v3304
    %v3339 = vadd.f32 %v3290, %v3308
    %v3340 = vadd.f32 %v3291, %v3312
    %v3341 = vadd.f32 %v3292, %v3316
    %v3342 = vadd.f32 %v3293, %v3320
    %v3343 = vadd.f32 %v3294, %v3324
    %v3344 = vadd.f32 %v3295, %v3328
    %vm3345 = vcmp.gt.f32.partialorder %v3337, 0.0
    %vm3346 = vcmp.gt.f32.partialorder %v3338, 0.0
    %vm3347 = vcmp.gt.f32.partialorder %v3339, 0.0
    %vm3348 = vcmp.gt.f32.partialorder %v3340, 0.0
    %vm3349 = vcmp.gt.f32.partialorder %v3341, 0.0
    %vm3350 = vcmp.gt.f32.partialorder %v3342, 0.0
    %vm3351 = vcmp.gt.f32.partialorder %v3343, 0.0
    %vm3352 = vcmp.gt.f32.partialorder %v3344, 0.0
    %v3353 = vmul.f32 %v3337, 0.2
    %v3354 = vmul.f32 %v3338, 0.2
    %v3355 = vmul.f32 %v3339, 0.2
    %v3356 = vmul.f32 %v3340, 0.2
    %v3357 = vmul.f32 %v3341, 0.2
    %v3358 = vmul.f32 %v3342, 0.2
    %v3359 = vmul.f32 %v3343, 0.2
    %v3360 = vmul.f32 %v3344, 0.2
    %v3361 = vsel %vm3345, %v3337, %v3353
    %v3362 = vsel %vm3346, %v3338, %v3354
    %v3363 = vsel %vm3347, %v3339, %v3355
    %v3364 = vsel %vm3348, %v3340, %v3356
    %v3365 = vsel %vm3349, %v3341, %v3357
    %v3366 = vsel %vm3350, %v3342, %v3358
    %v3367 = vsel %vm3351, %v3343, %v3359
    %v3368 = vsel %vm3352, %v3344, %v3360
    %v3369 = vpack.c.bf16 %v3361, %v3361
    %v3370 = vpack.c.bf16 %v3362, %v3362
    %v3371 = vpack.c.bf16 %v3363, %v3363
    %v3372 = vpack.c.bf16 %v3364, %v3364
    %v3373 = vpack.c.bf16 %v3365, %v3365
    %v3374 = vpack.c.bf16 %v3366, %v3366
    %v3375 = vpack.c.bf16 %v3367, %v3367
    %v3376 = vpack.c.bf16 %v3368, %v3368
    %v3377 = vld [vmem:[#allocation19] sm:$0xff]
    %v3378 = vld [vmem:[#allocation19 + $0x8] sm:$0xff]
    %v3379 = vld [vmem:[#allocation19 + $0x10] sm:$0xff]
    %v3380 = vld [vmem:[#allocation19 + $0x18] sm:$0xf]
    %v3381 = vld [vmem:[#allocation19 + $0x1c] sm:$0xff]
    %v3382 = vld [vmem:[#allocation19 + $0x24] sm:$0xff]
    %v3383 = vld [vmem:[#allocation19 + $0x2c] sm:$0xff]
    %v3384 = vld [vmem:[#allocation19 + $0x34] sm:$0xf]
    %v3385 = vld [vmem:[#allocation19 + $0x38] sm:$0xff]
    %v3386 = vld [vmem:[#allocation19 + $0x40] sm:$0xff]
    %v3387 = vld [vmem:[#allocation19 + $0x48] sm:$0xff]
    %v3388 = vld [vmem:[#allocation19 + $0x50] sm:$0xf]
    %v3389 = vld [vmem:[#allocation19 + $0x54] sm:$0xff]
    %v3390 = vld [vmem:[#allocation19 + $0x5c] sm:$0xff]
    %v3391 = vld [vmem:[#allocation19 + $0x64] sm:$0xff]
    %v3392 = vld [vmem:[#allocation19 + $0x6c] sm:$0xf]
    %v3393 = vld [vmem:[#allocation19 + $0x70] sm:$0xff]
    %v3394 = vld [vmem:[#allocation19 + $0x78] sm:$0xff]
    %v3395 = vld [vmem:[#allocation19 + $0x80] sm:$0xff]
    %v3396 = vld [vmem:[#allocation19 + $0x88] sm:$0xf]
    %v3397 = vld [vmem:[#allocation19 + $0x8c] sm:$0xff]
    %v3398 = vld [vmem:[#allocation19 + $0x94] sm:$0xff]
    %v3399 = vld [vmem:[#allocation19 + $0x9c] sm:$0xff]
    %v3400 = vld [vmem:[#allocation19 + $0xa4] sm:$0xf]
    %v3401 = vld [vmem:[#allocation19 + $0xa8] sm:$0xff]
    %v3402 = vld [vmem:[#allocation19 + $0xb0] sm:$0xff]
    %v3403 = vld [vmem:[#allocation19 + $0xb8] sm:$0xff]
    %v3404 = vld [vmem:[#allocation19 + $0xc0] sm:$0xf]
    %v3405 = vld [vmem:[#allocation19 + $0xc4] sm:$0xff]
    %v3406 = vld [vmem:[#allocation19 + $0xcc] sm:$0xff]
    %v3407 = vld [vmem:[#allocation19 + $0xd4] sm:$0xff]
    %v3408 = vld [vmem:[#allocation19 + $0xdc] sm:$0xf]
    %v3409 = vld [vmem:[#allocation19 + $0xe0] sm:$0xff]
    %v3410 = vld [vmem:[#allocation19 + $0xe8] sm:$0xff]
    %v3411 = vld [vmem:[#allocation19 + $0xf0] sm:$0xff]
    %v3412 = vld [vmem:[#allocation19 + $0xf8] sm:$0xf]
    %v3413 = vld [vmem:[#allocation19 + $0xfc] sm:$0xff]
    %v3414 = vld [vmem:[#allocation19 + $0x104] sm:$0xff]
    %v3415 = vld [vmem:[#allocation19 + $0x10c] sm:$0xff]
    %v3416 = vld [vmem:[#allocation19 + $0x114] sm:$0xf]
    %v3417 = vld [vmem:[#allocation19 + $0x118] sm:$0xff]
    %v3418 = vld [vmem:[#allocation19 + $0x120] sm:$0xff]
    %v3419 = vld [vmem:[#allocation19 + $0x128] sm:$0xff]
    %v3420 = vld [vmem:[#allocation19 + $0x130] sm:$0xf]
    %v3421 = vld [vmem:[#allocation19 + $0x134] sm:$0xff]
    %v3422 = vld [vmem:[#allocation19 + $0x13c] sm:$0xff]
    %v3423 = vld [vmem:[#allocation19 + $0x144] sm:$0xff]
    %v3424 = vld [vmem:[#allocation19 + $0x14c] sm:$0xf]
    %v3425 = vld [vmem:[#allocation19 + $0x150] sm:$0xff]
    %v3426 = vld [vmem:[#allocation19 + $0x158] sm:$0xff]
    %v3427 = vld [vmem:[#allocation19 + $0x160] sm:$0xff]
    %v3428 = vld [vmem:[#allocation19 + $0x168] sm:$0xf]
    %v3429 = vld [vmem:[#allocation19 + $0x16c] sm:$0xff]
    %v3430 = vld [vmem:[#allocation19 + $0x174] sm:$0xff]
    %v3431 = vld [vmem:[#allocation19 + $0x17c] sm:$0xff]
    %v3432 = vld [vmem:[#allocation19 + $0x184] sm:$0xf]
    %v3433 = vld [vmem:[#allocation19 + $0x188] sm:$0xff]
    %v3434 = vld [vmem:[#allocation19 + $0x190] sm:$0xff]
    %v3435 = vld [vmem:[#allocation19 + $0x198] sm:$0xff]
    %v3436 = vld [vmem:[#allocation19 + $0x1a0] sm:$0xf]
    %v3437 = vld [vmem:[#allocation19 + $0x1a4] sm:$0xff]
    %v3438 = vld [vmem:[#allocation19 + $0x1ac] sm:$0xff]
    %v3439 = vld [vmem:[#allocation19 + $0x1b4] sm:$0xff]
    %v3440 = vld [vmem:[#allocation19 + $0x1bc] sm:$0xf]
    %v3441 = vld [vmem:[#allocation19 + $0x1c0] sm:$0xff]
    %v3442 = vld [vmem:[#allocation19 + $0x1c8] sm:$0xff]
    %v3443 = vld [vmem:[#allocation19 + $0x1d0] sm:$0xff]
    %v3444 = vld [vmem:[#allocation19 + $0x1d8] sm:$0xf]
    %v3445 = vld [vmem:[#allocation19 + $0x1dc] sm:$0xff]
    %v3446 = vld [vmem:[#allocation19 + $0x1e4] sm:$0xff]
    %v3447 = vld [vmem:[#allocation19 + $0x1ec] sm:$0xff]
    %v3448 = vld [vmem:[#allocation19 + $0x1f4] sm:$0xf]
    %v3449 = vld [vmem:[#allocation19 + $0x1f8] sm:$0xff]
    %v3450 = vld [vmem:[#allocation19 + $0x200] sm:$0xff]
    %v3451 = vld [vmem:[#allocation19 + $0x208] sm:$0xff]
    %v3452 = vld [vmem:[#allocation19 + $0x210] sm:$0xf]
    %v3453 = vld [vmem:[#allocation19 + $0x214] sm:$0xff]
    %v3454 = vld [vmem:[#allocation19 + $0x21c] sm:$0xff]
    %v3455 = vld [vmem:[#allocation19 + $0x224] sm:$0xff]
    %v3456 = vld [vmem:[#allocation19 + $0x22c] sm:$0xf]
    %v3457 = vld [vmem:[#allocation19 + $0x230] sm:$0xff]
    %v3458 = vld [vmem:[#allocation19 + $0x238] sm:$0xff]
    %v3459 = vld [vmem:[#allocation19 + $0x240] sm:$0xff]
    %v3460 = vld [vmem:[#allocation19 + $0x248] sm:$0xf]
    %v3461 = vld [vmem:[#allocation19 + $0x24c] sm:$0xff]
    %v3462 = vld [vmem:[#allocation19 + $0x254] sm:$0xff]
    %v3463 = vld [vmem:[#allocation19 + $0x25c] sm:$0xff]
    %v3464 = vld [vmem:[#allocation19 + $0x264] sm:$0xf]
    %v3465 = vld [vmem:[#allocation19 + $0x268] sm:$0xff]
    %v3466 = vld [vmem:[#allocation19 + $0x270] sm:$0xff]
    %v3467 = vld [vmem:[#allocation19 + $0x278] sm:$0xff]
    %v3468 = vld [vmem:[#allocation19 + $0x280] sm:$0xf]
    %v3469 = vld [vmem:[#allocation19 + $0x284] sm:$0xff]
    %v3470 = vld [vmem:[#allocation19 + $0x28c] sm:$0xff]
    %v3471 = vld [vmem:[#allocation19 + $0x294] sm:$0xff]
    %v3472 = vld [vmem:[#allocation19 + $0x29c] sm:$0xf]
    %v3473 = vld [vmem:[#allocation19 + $0x2a0] sm:$0xff]
    %v3474 = vld [vmem:[#allocation19 + $0x2a8] sm:$0xff]
    %v3475 = vld [vmem:[#allocation19 + $0x2b0] sm:$0xff]
    %v3476 = vld [vmem:[#allocation19 + $0x2b8] sm:$0xf]
    %v3477 = vld [vmem:[#allocation19 + $0x2bc] sm:$0xff]
    %v3478 = vld [vmem:[#allocation19 + $0x2c4] sm:$0xff]
    %v3479 = vld [vmem:[#allocation19 + $0x2cc] sm:$0xff]
    %v3480 = vld [vmem:[#allocation19 + $0x2d4] sm:$0xf]
    %v3481 = vld [vmem:[#allocation19 + $0x2d8] sm:$0xff]
    %v3482 = vld [vmem:[#allocation19 + $0x2e0] sm:$0xff]
    %v3483 = vld [vmem:[#allocation19 + $0x2e8] sm:$0xff]
    %v3484 = vld [vmem:[#allocation19 + $0x2f0] sm:$0xf]
    %v3485 = vld [vmem:[#allocation19 + $0x2f4] sm:$0xff]
    %v3486 = vld [vmem:[#allocation19 + $0x2fc] sm:$0xff]
    %v3487 = vld [vmem:[#allocation19 + $0x304] sm:$0xff]
    %v3488 = vld [vmem:[#allocation19 + $0x30c] sm:$0xf]
    %v3489 = vld [vmem:[#allocation19 + $0x310] sm:$0xff]
    %v3490 = vld [vmem:[#allocation19 + $0x318] sm:$0xff]
    %v3491 = vld [vmem:[#allocation19 + $0x320] sm:$0xff]
    %v3492 = vld [vmem:[#allocation19 + $0x328] sm:$0xf]
    %v3493 = vld [vmem:[#allocation19 + $0x32c] sm:$0xff]
    %v3494 = vld [vmem:[#allocation19 + $0x334] sm:$0xff]
    %v3495 = vld [vmem:[#allocation19 + $0x33c] sm:$0xff]
    %v3496 = vld [vmem:[#allocation19 + $0x344] sm:$0xf]
    %v3497 = vld [vmem:[#allocation19 + $0x348] sm:$0xff]
    %v3498 = vld [vmem:[#allocation19 + $0x350] sm:$0xff]
    %v3499 = vld [vmem:[#allocation19 + $0x358] sm:$0xff]
    %v3500 = vld [vmem:[#allocation19 + $0x360] sm:$0xf]
    %v3501 = vld [vmem:[#allocation19 + $0x364] sm:$0xff]
    %v3502 = vld [vmem:[#allocation19 + $0x36c] sm:$0xff]
    %v3503 = vld [vmem:[#allocation19 + $0x374] sm:$0xff]
    %v3504 = vld [vmem:[#allocation19 + $0x37c] sm:$0xf]
    %v3505 = vld [vmem:[#allocation19 + $0x380] sm:$0xff]
    %v3506 = vld [vmem:[#allocation19 + $0x388] sm:$0xff]
    %v3507 = vld [vmem:[#allocation19 + $0x390] sm:$0xff]
    %v3508 = vld [vmem:[#allocation19 + $0x398] sm:$0xf]
    %v3509 = vld [vmem:[#allocation19 + $0x39c] sm:$0xff]
    %v3510 = vld [vmem:[#allocation19 + $0x3a4] sm:$0xff]
    %v3511 = vld [vmem:[#allocation19 + $0x3ac] sm:$0xff]
    %v3512 = vld [vmem:[#allocation19 + $0x3b4] sm:$0xf]
    %v3513 = vld [vmem:[#allocation19 + $0x3b8] sm:$0xff]
    %v3514 = vld [vmem:[#allocation19 + $0x3c0] sm:$0xff]
    %v3515 = vld [vmem:[#allocation19 + $0x3c8] sm:$0xff]
    %v3516 = vld [vmem:[#allocation19 + $0x3d0] sm:$0xf]
    %v3517 = vld [vmem:[#allocation19 + $0x3d4] sm:$0xff]
    %v3518 = vld [vmem:[#allocation19 + $0x3dc] sm:$0xff]
    %v3519 = vld [vmem:[#allocation19 + $0x3e4] sm:$0xff]
    %v3520 = vld [vmem:[#allocation19 + $0x3ec] sm:$0xf]
    %v3521 = vld [vmem:[#allocation19 + $0x3f0] sm:$0xff]
    %v3522 = vld [vmem:[#allocation19 + $0x3f8] sm:$0xff]
    %v3523 = vld [vmem:[#allocation19 + $0x400] sm:$0xff]
    %v3524 = vld [vmem:[#allocation19 + $0x408] sm:$0xf]
    %v3525 = vld [vmem:[#allocation19 + $0x40c] sm:$0xff]
    %v3526 = vld [vmem:[#allocation19 + $0x414] sm:$0xff]
    %v3527 = vld [vmem:[#allocation19 + $0x41c] sm:$0xff]
    %v3528 = vld [vmem:[#allocation19 + $0x424] sm:$0xf]
    %v3529 = vld [vmem:[#allocation19 + $0x428] sm:$0xff]
    %v3530 = vld [vmem:[#allocation19 + $0x430] sm:$0xff]
    %v3531 = vld [vmem:[#allocation19 + $0x438] sm:$0xff]
    %v3532 = vld [vmem:[#allocation19 + $0x440] sm:$0xf]
    %v3533 = vld [vmem:[#allocation19 + $0x444] sm:$0xff]
    %v3534 = vld [vmem:[#allocation19 + $0x44c] sm:$0xff]
    %v3535 = vld [vmem:[#allocation19 + $0x454] sm:$0xff]
    %v3536 = vld [vmem:[#allocation19 + $0x45c] sm:$0xf]
    %v3537 = vld [vmem:[#allocation19 + $0x460] sm:$0xff]
    %v3538 = vld [vmem:[#allocation19 + $0x468] sm:$0xff]
    %v3539 = vld [vmem:[#allocation19 + $0x470] sm:$0xff]
    %v3540 = vld [vmem:[#allocation19 + $0x478] sm:$0xf]
    %v3541 = vld [vmem:[#allocation19 + $0x47c] sm:$0xff]
    %v3542 = vld [vmem:[#allocation19 + $0x484] sm:$0xff]
    %v3543 = vld [vmem:[#allocation19 + $0x48c] sm:$0xff]
    %v3544 = vld [vmem:[#allocation19 + $0x494] sm:$0xf]
    %v3545 = vld [vmem:[#allocation19 + $0x498] sm:$0xff]
    %v3546 = vld [vmem:[#allocation19 + $0x4a0] sm:$0xff]
    %v3547 = vld [vmem:[#allocation19 + $0x4a8] sm:$0xff]
    %v3548 = vld [vmem:[#allocation19 + $0x4b0] sm:$0xf]
    %v3549 = vld [vmem:[#allocation19 + $0x4b4] sm:$0xff]
    %v3550 = vld [vmem:[#allocation19 + $0x4bc] sm:$0xff]
    %v3551 = vld [vmem:[#allocation19 + $0x4c4] sm:$0xff]
    %v3552 = vld [vmem:[#allocation19 + $0x4cc] sm:$0xf]
    %v3553 = vld [vmem:[#allocation19 + $0x4d0] sm:$0xff]
    %v3554 = vld [vmem:[#allocation19 + $0x4d8] sm:$0xff]
    %v3555 = vld [vmem:[#allocation19 + $0x4e0] sm:$0xff]
    %v3556 = vld [vmem:[#allocation19 + $0x4e8] sm:$0xf]
    %v3557 = vld [vmem:[#allocation19 + $0x4ec] sm:$0xff]
    %v3558 = vld [vmem:[#allocation19 + $0x4f4] sm:$0xff]
    %v3559 = vld [vmem:[#allocation19 + $0x4fc] sm:$0xff]
    %v3560 = vld [vmem:[#allocation19 + $0x504] sm:$0xf]
    %v3561 = vld [vmem:[#allocation19 + $0x508] sm:$0xff]
    %v3562 = vld [vmem:[#allocation19 + $0x510] sm:$0xff]
    %v3563 = vld [vmem:[#allocation19 + $0x518] sm:$0xff]
    %v3564 = vld [vmem:[#allocation19 + $0x520] sm:$0xf]
    %v3565 = vld [vmem:[#allocation19 + $0x524] sm:$0xff]
    %v3566 = vld [vmem:[#allocation19 + $0x52c] sm:$0xff]
    %v3567 = vld [vmem:[#allocation19 + $0x534] sm:$0xff]
    %v3568 = vld [vmem:[#allocation19 + $0x53c] sm:$0xf]
    %v3569 = vld [vmem:[#allocation19 + $0x540] sm:$0xff]
    %v3570 = vld [vmem:[#allocation19 + $0x548] sm:$0xff]
    %v3571 = vld [vmem:[#allocation19 + $0x550] sm:$0xff]
    %v3572 = vld [vmem:[#allocation19 + $0x558] sm:$0xf]
    %v3573 = vld [vmem:[#allocation19 + $0x55c] sm:$0xff]
    %v3574 = vld [vmem:[#allocation19 + $0x564] sm:$0xff]
    %v3575 = vld [vmem:[#allocation19 + $0x56c] sm:$0xff]
    %v3576 = vld [vmem:[#allocation19 + $0x574] sm:$0xf]
    %v3577 = vld [vmem:[#allocation19 + $0x578] sm:$0xff]
    %v3578 = vld [vmem:[#allocation19 + $0x580] sm:$0xff]
    %v3579 = vld [vmem:[#allocation19 + $0x588] sm:$0xff]
    %v3580 = vld [vmem:[#allocation19 + $0x590] sm:$0xf]
    %v3581 = vld [vmem:[#allocation19 + $0x594] sm:$0xff]
    %v3582 = vld [vmem:[#allocation19 + $0x59c] sm:$0xff]
    %v3583 = vld [vmem:[#allocation19 + $0x5a4] sm:$0xff]
    %v3584 = vld [vmem:[#allocation19 + $0x5ac] sm:$0xf]
    %v3585 = vld [vmem:[#allocation19 + $0x5b0] sm:$0xff]
    %v3586 = vld [vmem:[#allocation19 + $0x5b8] sm:$0xff]
    %v3587 = vld [vmem:[#allocation19 + $0x5c0] sm:$0xff]
    %v3588 = vld [vmem:[#allocation19 + $0x5c8] sm:$0xf]
    %v3589 = vld [vmem:[#allocation19 + $0x5cc] sm:$0xff]
    %v3590 = vld [vmem:[#allocation19 + $0x5d4] sm:$0xff]
    %v3591 = vld [vmem:[#allocation19 + $0x5dc] sm:$0xff]
    %v3592 = vld [vmem:[#allocation19 + $0x5e4] sm:$0xf]
    %v3593 = vld [vmem:[#allocation19 + $0x5e8] sm:$0xff]
    %v3594 = vld [vmem:[#allocation19 + $0x5f0] sm:$0xff]
    %v3595 = vld [vmem:[#allocation19 + $0x5f8] sm:$0xff]
    %v3596 = vld [vmem:[#allocation19 + $0x600] sm:$0xf]
    %v3597 = vld [vmem:[#allocation19 + $0x604] sm:$0xff]
    %v3598 = vld [vmem:[#allocation19 + $0x60c] sm:$0xff]
    %v3599 = vld [vmem:[#allocation19 + $0x614] sm:$0xff]
    %v3600 = vld [vmem:[#allocation19 + $0x61c] sm:$0xf]
    %v3601 = vld [vmem:[#allocation19 + $0x620] sm:$0xff]
    %v3602 = vld [vmem:[#allocation19 + $0x628] sm:$0xff]
    %v3603 = vld [vmem:[#allocation19 + $0x630] sm:$0xff]
    %v3604 = vld [vmem:[#allocation19 + $0x638] sm:$0xf]
    %v3605 = vld [vmem:[#allocation19 + $0x63c] sm:$0xff]
    %v3606 = vld [vmem:[#allocation19 + $0x644] sm:$0xff]
    %v3607 = vld [vmem:[#allocation19 + $0x64c] sm:$0xff]
    %v3608 = vld [vmem:[#allocation19 + $0x654] sm:$0xf]
    %v3609 = vld [vmem:[#allocation19 + $0x658] sm:$0xff]
    %v3610 = vld [vmem:[#allocation19 + $0x660] sm:$0xff]
    %v3611 = vld [vmem:[#allocation19 + $0x668] sm:$0xff]
    %v3612 = vld [vmem:[#allocation19 + $0x670] sm:$0xf]
    %v3613 = vld [vmem:[#allocation19 + $0x674] sm:$0xff]
    %v3614 = vld [vmem:[#allocation19 + $0x67c] sm:$0xff]
    %v3615 = vld [vmem:[#allocation19 + $0x684] sm:$0xff]
    %v3616 = vld [vmem:[#allocation19 + $0x68c] sm:$0xf]
    %v3617 = vld [vmem:[#allocation19 + $0x690] sm:$0xff]
    %v3618 = vld [vmem:[#allocation19 + $0x698] sm:$0xff]
    %v3619 = vld [vmem:[#allocation19 + $0x6a0] sm:$0xff]
    %v3620 = vld [vmem:[#allocation19 + $0x6a8] sm:$0xf]
    %v3621 = vld [vmem:[#allocation19 + $0x6ac] sm:$0xff]
    %v3622 = vld [vmem:[#allocation19 + $0x6b4] sm:$0xff]
    %v3623 = vld [vmem:[#allocation19 + $0x6bc] sm:$0xff]
    %v3624 = vld [vmem:[#allocation19 + $0x6c4] sm:$0xf]
    %v3625 = vld [vmem:[#allocation19 + $0x6c8] sm:$0xff]
    %v3626 = vld [vmem:[#allocation19 + $0x6d0] sm:$0xff]
    %v3627 = vld [vmem:[#allocation19 + $0x6d8] sm:$0xff]
    %v3628 = vld [vmem:[#allocation19 + $0x6e0] sm:$0xf]
    %v3629 = vld [vmem:[#allocation19 + $0x6e4] sm:$0xff]
    %v3630 = vld [vmem:[#allocation19 + $0x6ec] sm:$0xff]
    %v3631 = vld [vmem:[#allocation19 + $0x6f4] sm:$0xff]
    %v3632 = vld [vmem:[#allocation19 + $0x6fc] sm:$0xf]
    %v3633 = vld [vmem:[#allocation19 + $0x700] sm:$0xff]
    %v3634 = vld [vmem:[#allocation19 + $0x708] sm:$0xff]
    %v3635 = vld [vmem:[#allocation19 + $0x710] sm:$0xff]
    %v3636 = vld [vmem:[#allocation19 + $0x718] sm:$0xf]
    %v3637 = vld [vmem:[#allocation19 + $0x71c] sm:$0xff]
    %v3638 = vld [vmem:[#allocation19 + $0x724] sm:$0xff]
    %v3639 = vld [vmem:[#allocation19 + $0x72c] sm:$0xff]
    %v3640 = vld [vmem:[#allocation19 + $0x734] sm:$0xf]
    %v3641 = vld [vmem:[#allocation19 + $0x738] sm:$0xff]
    %v3642 = vld [vmem:[#allocation19 + $0x740] sm:$0xff]
    %v3643 = vld [vmem:[#allocation19 + $0x748] sm:$0xff]
    %v3644 = vld [vmem:[#allocation19 + $0x750] sm:$0xf]
    %v3645 = vld [vmem:[#allocation19 + $0x754] sm:$0xff]
    %v3646 = vld [vmem:[#allocation19 + $0x75c] sm:$0xff]
    %v3647 = vld [vmem:[#allocation19 + $0x764] sm:$0xff]
    %v3648 = vld [vmem:[#allocation19 + $0x76c] sm:$0xf]
    %v3649 = vld [vmem:[#allocation19 + $0x770] sm:$0xff]
    %v3650 = vld [vmem:[#allocation19 + $0x778] sm:$0xff]
    %v3651 = vld [vmem:[#allocation19 + $0x780] sm:$0xff]
    %v3652 = vld [vmem:[#allocation19 + $0x788] sm:$0xf]
    %v3653 = vld [vmem:[#allocation19 + $0x78c] sm:$0xff]
    %v3654 = vld [vmem:[#allocation19 + $0x794] sm:$0xff]
    %v3655 = vld [vmem:[#allocation19 + $0x79c] sm:$0xff]
    %v3656 = vld [vmem:[#allocation19 + $0x7a4] sm:$0xf]
    %v3657 = vld [vmem:[#allocation19 + $0x7a8] sm:$0xff]
    %v3658 = vld [vmem:[#allocation19 + $0x7b0] sm:$0xff]
    %v3659 = vld [vmem:[#allocation19 + $0x7b8] sm:$0xff]
    %v3660 = vld [vmem:[#allocation19 + $0x7c0] sm:$0xf]
    %v3661 = vld [vmem:[#allocation19 + $0x7c4] sm:$0xff]
    %v3662 = vld [vmem:[#allocation19 + $0x7cc] sm:$0xff]
    %v3663 = vld [vmem:[#allocation19 + $0x7d4] sm:$0xff]
    %v3664 = vld [vmem:[#allocation19 + $0x7dc] sm:$0xf]
    %v3665 = vld [vmem:[#allocation19 + $0x7e0] sm:$0xff]
    %v3666 = vld [vmem:[#allocation19 + $0x7e8] sm:$0xff]
    %v3667 = vld [vmem:[#allocation19 + $0x7f0] sm:$0xff]
    %v3668 = vld [vmem:[#allocation19 + $0x7f8] sm:$0xf]
    %v3669 = vld [vmem:[#allocation19 + $0x7fc] sm:$0xff]
    %v3670 = vld [vmem:[#allocation19 + $0x804] sm:$0xff]
    %v3671 = vld [vmem:[#allocation19 + $0x80c] sm:$0xff]
    %v3672 = vld [vmem:[#allocation19 + $0x814] sm:$0xf]
    %v3673 = vld [vmem:[#allocation19 + $0x818] sm:$0xff]
    %v3674 = vld [vmem:[#allocation19 + $0x820] sm:$0xff]
    %v3675 = vld [vmem:[#allocation19 + $0x828] sm:$0xff]
    %v3676 = vld [vmem:[#allocation19 + $0x830] sm:$0xf]
    %v3677 = vld [vmem:[#allocation19 + $0x834] sm:$0xff]
    %v3678 = vld [vmem:[#allocation19 + $0x83c] sm:$0xff]
    %v3679 = vld [vmem:[#allocation19 + $0x844] sm:$0xff]
    %v3680 = vld [vmem:[#allocation19 + $0x84c] sm:$0xf]
    %v3681 = vld [vmem:[#allocation19 + $0x850] sm:$0xff]
    %v3682 = vld [vmem:[#allocation19 + $0x858] sm:$0xff]
    %v3683 = vld [vmem:[#allocation19 + $0x860] sm:$0xff]
    %v3684 = vld [vmem:[#allocation19 + $0x868] sm:$0xf]
    %v3685 = vld [vmem:[#allocation19 + $0x86c] sm:$0xff]
    %v3686 = vld [vmem:[#allocation19 + $0x874] sm:$0xff]
    %v3687 = vld [vmem:[#allocation19 + $0x87c] sm:$0xff]
    %v3688 = vld [vmem:[#allocation19 + $0x884] sm:$0xf]
    %v3689 = vld [vmem:[#allocation19 + $0x888] sm:$0xff]
    %v3690 = vld [vmem:[#allocation19 + $0x890] sm:$0xff]
    %v3691 = vld [vmem:[#allocation19 + $0x898] sm:$0xff]
    %v3692 = vld [vmem:[#allocation19 + $0x8a0] sm:$0xf]
    %v3693 = vld [vmem:[#allocation19 + $0x8a4] sm:$0xff]
    %v3694 = vld [vmem:[#allocation19 + $0x8ac] sm:$0xff]
    %v3695 = vld [vmem:[#allocation19 + $0x8b4] sm:$0xff]
    %v3696 = vld [vmem:[#allocation19 + $0x8bc] sm:$0xf]
    %v3697 = vld [vmem:[#allocation19 + $0x8c0] sm:$0xff]
    %v3698 = vld [vmem:[#allocation19 + $0x8c8] sm:$0xff]
    %v3699 = vld [vmem:[#allocation19 + $0x8d0] sm:$0xff]
    %v3700 = vld [vmem:[#allocation19 + $0x8d8] sm:$0xf]
    %v3701 = vld [vmem:[#allocation19 + $0x8dc] sm:$0xff]
    %v3702 = vld [vmem:[#allocation19 + $0x8e4] sm:$0xff]
    %v3703 = vld [vmem:[#allocation19 + $0x8ec] sm:$0xff]
    %v3704 = vld [vmem:[#allocation19 + $0x8f4] sm:$0xf]
    %v3705 = vld [vmem:[#allocation19 + $0x8f8] sm:$0xff]
    %v3706 = vld [vmem:[#allocation19 + $0x900] sm:$0xff]
    %v3707 = vld [vmem:[#allocation19 + $0x908] sm:$0xff]
    %v3708 = vld [vmem:[#allocation19 + $0x910] sm:$0xf]
    %v3709 = vld [vmem:[#allocation19 + $0x914] sm:$0xff]
    %v3710 = vld [vmem:[#allocation19 + $0x91c] sm:$0xff]
    %v3711 = vld [vmem:[#allocation19 + $0x924] sm:$0xff]
    %v3712 = vld [vmem:[#allocation19 + $0x92c] sm:$0xf]
    %v3713 = vld [vmem:[#allocation19 + $0x930] sm:$0xff]
    %v3714 = vld [vmem:[#allocation19 + $0x938] sm:$0xff]
    %v3715 = vld [vmem:[#allocation19 + $0x940] sm:$0xff]
    %v3716 = vld [vmem:[#allocation19 + $0x948] sm:$0xf]
    %v3717 = vld [vmem:[#allocation19 + $0x94c] sm:$0xff]
    %v3718 = vld [vmem:[#allocation19 + $0x954] sm:$0xff]
    %v3719 = vld [vmem:[#allocation19 + $0x95c] sm:$0xff]
    %v3720 = vld [vmem:[#allocation19 + $0x964] sm:$0xf]
    %v3721 = vld [vmem:[#allocation19 + $0x968] sm:$0xff]
    %v3722 = vld [vmem:[#allocation19 + $0x970] sm:$0xff]
    %v3723 = vld [vmem:[#allocation19 + $0x978] sm:$0xff]
    %v3724 = vld [vmem:[#allocation19 + $0x980] sm:$0xf]
    %v3725 = vld [vmem:[#allocation19 + $0x984] sm:$0xff]
    %v3726 = vld [vmem:[#allocation19 + $0x98c] sm:$0xff]
    %v3727 = vld [vmem:[#allocation19 + $0x994] sm:$0xff]
    %v3728 = vld [vmem:[#allocation19 + $0x99c] sm:$0xf]
    %v3729 = vld [vmem:[#allocation19 + $0x9a0] sm:$0xff]
    %v3730 = vld [vmem:[#allocation19 + $0x9a8] sm:$0xff]
    %v3731 = vld [vmem:[#allocation19 + $0x9b0] sm:$0xff]
    %v3732 = vld [vmem:[#allocation19 + $0x9b8] sm:$0xf]
    %v3733 = vld [vmem:[#allocation19 + $0x9bc] sm:$0xff]
    %v3734 = vld [vmem:[#allocation19 + $0x9c4] sm:$0xff]
    %v3735 = vld [vmem:[#allocation19 + $0x9cc] sm:$0xff]
    %v3736 = vld [vmem:[#allocation19 + $0x9d4] sm:$0xf]
    %v3737 = vld [vmem:[#allocation19 + $0x9d8] sm:$0xff]
    %v3738 = vld [vmem:[#allocation19 + $0x9e0] sm:$0xff]
    %v3739 = vld [vmem:[#allocation19 + $0x9e8] sm:$0xff]
    %v3740 = vld [vmem:[#allocation19 + $0x9f0] sm:$0xf]
    %v3741 = vld [vmem:[#allocation19 + $0x9f4] sm:$0xff]
    %v3742 = vld [vmem:[#allocation19 + $0x9fc] sm:$0xff]
    %v3743 = vld [vmem:[#allocation19 + $0xa04] sm:$0xff]
    %v3744 = vld [vmem:[#allocation19 + $0xa0c] sm:$0xf]
    %v3745 = vld [vmem:[#allocation19 + $0xa10] sm:$0xff]
    %v3746 = vld [vmem:[#allocation19 + $0xa18] sm:$0xff]
    %v3747 = vld [vmem:[#allocation19 + $0xa20] sm:$0xff]
    %v3748 = vld [vmem:[#allocation19 + $0xa28] sm:$0xf]
    %v3749 = vld [vmem:[#allocation19 + $0xa2c] sm:$0xff]
    %v3750 = vld [vmem:[#allocation19 + $0xa34] sm:$0xff]
    %v3751 = vld [vmem:[#allocation19 + $0xa3c] sm:$0xff]
    %v3752 = vld [vmem:[#allocation19 + $0xa44] sm:$0xf]
    %v3753 = vld [vmem:[#allocation19 + $0xa48] sm:$0xff]
    %v3754 = vld [vmem:[#allocation19 + $0xa50] sm:$0xff]
    %v3755 = vld [vmem:[#allocation19 + $0xa58] sm:$0xff]
    %v3756 = vld [vmem:[#allocation19 + $0xa60] sm:$0xf]
    %v3757 = vld [vmem:[#allocation19 + $0xa64] sm:$0xff]
    %v3758 = vld [vmem:[#allocation19 + $0xa6c] sm:$0xff]
    %v3759 = vld [vmem:[#allocation19 + $0xa74] sm:$0xff]
    %v3760 = vld [vmem:[#allocation19 + $0xa7c] sm:$0xf]
    %v3761 = vld [vmem:[#allocation19 + $0xa80] sm:$0xff]
    %v3762 = vld [vmem:[#allocation19 + $0xa88] sm:$0xff]
    %v3763 = vld [vmem:[#allocation19 + $0xa90] sm:$0xff]
    %v3764 = vld [vmem:[#allocation19 + $0xa98] sm:$0xf]
    %v3765 = vld [vmem:[#allocation19 + $0xa9c] sm:$0xff]
    %v3766 = vld [vmem:[#allocation19 + $0xaa4] sm:$0xff]
    %v3767 = vld [vmem:[#allocation19 + $0xaac] sm:$0xff]
    %v3768 = vld [vmem:[#allocation19 + $0xab4] sm:$0xf]
    %v3769 = vld [vmem:[#allocation19 + $0xab8] sm:$0xff]
    %v3770 = vld [vmem:[#allocation19 + $0xac0] sm:$0xff]
    %v3771 = vld [vmem:[#allocation19 + $0xac8] sm:$0xff]
    %v3772 = vld [vmem:[#allocation19 + $0xad0] sm:$0xf]
    %v3773 = vld [vmem:[#allocation19 + $0xad4] sm:$0xff]
    %v3774 = vld [vmem:[#allocation19 + $0xadc] sm:$0xff]
    %v3775 = vld [vmem:[#allocation19 + $0xae4] sm:$0xff]
    %v3776 = vld [vmem:[#allocation19 + $0xaec] sm:$0xf]
    %v3777 = vld [vmem:[#allocation19 + $0xaf0] sm:$0xff]
    %v3778 = vld [vmem:[#allocation19 + $0xaf8] sm:$0xff]
    %v3779 = vld [vmem:[#allocation19 + $0xb00] sm:$0xff]
    %v3780 = vld [vmem:[#allocation19 + $0xb08] sm:$0xf]
    %v3781 = vld [vmem:[#allocation19 + $0xb0c] sm:$0xff]
    %v3782 = vld [vmem:[#allocation19 + $0xb14] sm:$0xff]
    %v3783 = vld [vmem:[#allocation19 + $0xb1c] sm:$0xff]
    %v3784 = vld [vmem:[#allocation19 + $0xb24] sm:$0xf]
    %v3785 = vld [vmem:[#allocation19 + $0xb28] sm:$0xff]
    %v3786 = vld [vmem:[#allocation19 + $0xb30] sm:$0xff]
    %v3787 = vld [vmem:[#allocation19 + $0xb38] sm:$0xff]
    %v3788 = vld [vmem:[#allocation19 + $0xb40] sm:$0xf]
    %v3789 = vld [vmem:[#allocation19 + $0xb44] sm:$0xff]
    %v3790 = vld [vmem:[#allocation19 + $0xb4c] sm:$0xff]
    %v3791 = vld [vmem:[#allocation19 + $0xb54] sm:$0xff]
    %v3792 = vld [vmem:[#allocation19 + $0xb5c] sm:$0xf]
    %v3793 = vld [vmem:[#allocation19 + $0xb60] sm:$0xff]
    %v3794 = vld [vmem:[#allocation19 + $0xb68] sm:$0xff]
    %v3795 = vld [vmem:[#allocation19 + $0xb70] sm:$0xff]
    %v3796 = vld [vmem:[#allocation19 + $0xb78] sm:$0xf]
    %v3797 = vld [vmem:[#allocation19 + $0xb7c] sm:$0xff]
    %v3798 = vld [vmem:[#allocation19 + $0xb84] sm:$0xff]
    %v3799 = vld [vmem:[#allocation19 + $0xb8c] sm:$0xff]
    %v3800 = vld [vmem:[#allocation19 + $0xb94] sm:$0xf]
    %v3801 = vld [vmem:[#allocation19 + $0xb98] sm:$0xff]
    %v3802 = vld [vmem:[#allocation19 + $0xba0] sm:$0xff]
    %v3803 = vld [vmem:[#allocation19 + $0xba8] sm:$0xff]
    %v3804 = vld [vmem:[#allocation19 + $0xbb0] sm:$0xf]
    %v3805 = vld [vmem:[#allocation19 + $0xbb4] sm:$0xff]
    %v3806 = vld [vmem:[#allocation19 + $0xbbc] sm:$0xff]
    %v3807 = vld [vmem:[#allocation19 + $0xbc4] sm:$0xff]
    %v3808 = vld [vmem:[#allocation19 + $0xbcc] sm:$0xf]
    %v3809 = vld [vmem:[#allocation19 + $0xbd0] sm:$0xff]
    %v3810 = vld [vmem:[#allocation19 + $0xbd8] sm:$0xff]
    %v3811 = vld [vmem:[#allocation19 + $0xbe0] sm:$0xff]
    %v3812 = vld [vmem:[#allocation19 + $0xbe8] sm:$0xf]
    %v3813 = vld [vmem:[#allocation19 + $0xbec] sm:$0xff]
    %v3814 = vld [vmem:[#allocation19 + $0xbf4] sm:$0xff]
    %v3815 = vld [vmem:[#allocation19 + $0xbfc] sm:$0xff]
    %v3816 = vld [vmem:[#allocation19 + $0xc04] sm:$0xf]
    %v3817 = vld [vmem:[#allocation19 + $0xc08] sm:$0xff]
    %v3818 = vld [vmem:[#allocation19 + $0xc10] sm:$0xff]
    %v3819 = vld [vmem:[#allocation19 + $0xc18] sm:$0xff]
    %v3820 = vld [vmem:[#allocation19 + $0xc20] sm:$0xf]
    %v3821 = vld [vmem:[#allocation19 + $0xc24] sm:$0xff]
    %v3822 = vld [vmem:[#allocation19 + $0xc2c] sm:$0xff]
    %v3823 = vld [vmem:[#allocation19 + $0xc34] sm:$0xff]
    %v3824 = vld [vmem:[#allocation19 + $0xc3c] sm:$0xf]
    %v3825 = vld [vmem:[#allocation19 + $0xc40] sm:$0xff]
    %v3826 = vld [vmem:[#allocation19 + $0xc48] sm:$0xff]
    %v3827 = vld [vmem:[#allocation19 + $0xc50] sm:$0xff]
    %v3828 = vld [vmem:[#allocation19 + $0xc58] sm:$0xf]
    %v3829 = vld [vmem:[#allocation19 + $0xc5c] sm:$0xff]
    %v3830 = vld [vmem:[#allocation19 + $0xc64] sm:$0xff]
    %v3831 = vld [vmem:[#allocation19 + $0xc6c] sm:$0xff]
    %v3832 = vld [vmem:[#allocation19 + $0xc74] sm:$0xf]
    %v3833 = vld [vmem:[#allocation19 + $0xc78] sm:$0xff]
    %v3834 = vld [vmem:[#allocation19 + $0xc80] sm:$0xff]
    %v3835 = vld [vmem:[#allocation19 + $0xc88] sm:$0xff]
    %v3836 = vld [vmem:[#allocation19 + $0xc90] sm:$0xf]
    %v3837 = vld [vmem:[#allocation19 + $0xc94] sm:$0xff]
    %v3838 = vld [vmem:[#allocation19 + $0xc9c] sm:$0xff]
    %v3839 = vld [vmem:[#allocation19 + $0xca4] sm:$0xff]
    %v3840 = vld [vmem:[#allocation19 + $0xcac] sm:$0xf]
    %v3841 = vld [vmem:[#allocation19 + $0xcb0] sm:$0xff]
    %v3842 = vld [vmem:[#allocation19 + $0xcb8] sm:$0xff]
    %v3843 = vld [vmem:[#allocation19 + $0xcc0] sm:$0xff]
    %v3844 = vld [vmem:[#allocation19 + $0xcc8] sm:$0xf]
    %v3845 = vld [vmem:[#allocation19 + $0xccc] sm:$0xff]
    %v3846 = vld [vmem:[#allocation19 + $0xcd4] sm:$0xff]
    %v3847 = vld [vmem:[#allocation19 + $0xcdc] sm:$0xff]
    %v3848 = vld [vmem:[#allocation19 + $0xce4] sm:$0xf]
    %v3849 = vld [vmem:[#allocation19 + $0xce8] sm:$0xff]
    %v3850 = vld [vmem:[#allocation19 + $0xcf0] sm:$0xff]
    %v3851 = vld [vmem:[#allocation19 + $0xcf8] sm:$0xff]
    %v3852 = vld [vmem:[#allocation19 + $0xd00] sm:$0xf]
    %v3853 = vld [vmem:[#allocation19 + $0xd04] sm:$0xff]
    %v3854 = vld [vmem:[#allocation19 + $0xd0c] sm:$0xff]
    %v3855 = vld [vmem:[#allocation19 + $0xd14] sm:$0xff]
    %v3856 = vld [vmem:[#allocation19 + $0xd1c] sm:$0xf]
    %v3857 = vld [vmem:[#allocation19 + $0xd20] sm:$0xff]
    %v3858 = vld [vmem:[#allocation19 + $0xd28] sm:$0xff]
    %v3859 = vld [vmem:[#allocation19 + $0xd30] sm:$0xff]
    %v3860 = vld [vmem:[#allocation19 + $0xd38] sm:$0xf]
    %v3861 = vld [vmem:[#allocation19 + $0xd3c] sm:$0xff]
    %v3862 = vld [vmem:[#allocation19 + $0xd44] sm:$0xff]
    %v3863 = vld [vmem:[#allocation19 + $0xd4c] sm:$0xff]
    %v3864 = vld [vmem:[#allocation19 + $0xd54] sm:$0xf]
    %v3865 = vld [vmem:[#allocation19 + $0xd58] sm:$0xff]
    %v3866 = vld [vmem:[#allocation19 + $0xd60] sm:$0xff]
    %v3867 = vld [vmem:[#allocation19 + $0xd68] sm:$0xff]
    %v3868 = vld [vmem:[#allocation19 + $0xd70] sm:$0xf]
    %v3869 = vld [vmem:[#allocation19 + $0xd74] sm:$0xff]
    %v3870 = vld [vmem:[#allocation19 + $0xd7c] sm:$0xff]
    %v3871 = vld [vmem:[#allocation19 + $0xd84] sm:$0xff]
    %v3872 = vld [vmem:[#allocation19 + $0xd8c] sm:$0xf]
    %v3873 = vld [vmem:[#allocation19 + $0xd90] sm:$0xff]
    %v3874 = vld [vmem:[#allocation19 + $0xd98] sm:$0xff]
    %v3875 = vld [vmem:[#allocation19 + $0xda0] sm:$0xff]
    %v3876 = vld [vmem:[#allocation19 + $0xda8] sm:$0xf]
    %v3877 = vld [vmem:[#allocation19 + $0xdac] sm:$0xff]
    %v3878 = vld [vmem:[#allocation19 + $0xdb4] sm:$0xff]
    %v3879 = vld [vmem:[#allocation19 + $0xdbc] sm:$0xff]
    %v3880 = vld [vmem:[#allocation19 + $0xdc4] sm:$0xf]
    %v3881 = vld [vmem:[#allocation19 + $0xdc8] sm:$0xff]
    %v3882 = vld [vmem:[#allocation19 + $0xdd0] sm:$0xff]
    %v3883 = vld [vmem:[#allocation19 + $0xdd8] sm:$0xff]
    %v3884 = vld [vmem:[#allocation19 + $0xde0] sm:$0xf]
    %v3885 = vld [vmem:[#allocation19 + $0xde4] sm:$0xff]
    %v3886 = vld [vmem:[#allocation19 + $0xdec] sm:$0xff]
    %v3887 = vld [vmem:[#allocation19 + $0xdf4] sm:$0xff]
    %v3888 = vld [vmem:[#allocation19 + $0xdfc] sm:$0xf]
    %v3889 = vld [vmem:[#allocation20] sm:$0xff]
    %v3891 = vlaneseq
    %v3892 = vshrl.u32 %v3891, 7
    %v3893 = vsub.s32 0, %v3892
    %v3894 = vrot.slane %v3889, %v3893
    %v3895 = vlaneseq
    %v3896 = vshrl.u32 %v3895, 7
    %v3897 = vsub.s32 1, %v3896
    %v3898 = vrot.slane %v3889, %v3897
    %v3899 = vlaneseq
    %v3900 = vshrl.u32 %v3899, 7
    %v3901 = vsub.s32 2, %v3900
    %v3902 = vrot.slane %v3889, %v3901
    %v3903 = vlaneseq
    %v3904 = vshrl.u32 %v3903, 7
    %v3905 = vsub.s32 3, %v3904
    %v3906 = vrot.slane %v3889, %v3905
    %v3907 = vlaneseq
    %v3908 = vshrl.u32 %v3907, 7
    %v3909 = vsub.s32 4, %v3908
    %v3910 = vrot.slane %v3889, %v3909
    %v3911 = vlaneseq
    %v3912 = vshrl.u32 %v3911, 7
    %v3913 = vsub.s32 5, %v3912
    %v3914 = vrot.slane %v3889, %v3913
    %v3915 = vlaneseq
    %v3916 = vshrl.u32 %v3915, 7
    %v3917 = vsub.s32 6, %v3916
    %v3918 = vrot.slane %v3889, %v3917
    %v4438 = vunpack.c.l.b16 %v3377
    %v4439 = vunpack.c.h.b16 %v3377
    %v4440 = vunpack.c.l.b16 %v3378
    %v4441 = vunpack.c.h.b16 %v3378
    %v4442 = vunpack.c.l.b16 %v3379
    %v4443 = vunpack.c.h.b16 %v3379
    %v4444 = vunpack.c.l.b16 %v3380
    %v4445 = vunpack.c.l.b16 %v3381
    %v4446 = vunpack.c.h.b16 %v3381
    %v4447 = vunpack.c.l.b16 %v3382
    %v4448 = vunpack.c.h.b16 %v3382
    %v4449 = vunpack.c.l.b16 %v3383
    %v4450 = vunpack.c.h.b16 %v3383
    %v4451 = vunpack.c.l.b16 %v3384
    %v4452 = vunpack.c.l.b16 %v3385
    %v4453 = vunpack.c.h.b16 %v3385
    %v4454 = vunpack.c.l.b16 %v3386
    %v4455 = vunpack.c.h.b16 %v3386
    %v4456 = vunpack.c.l.b16 %v3387
    %v4457 = vunpack.c.h.b16 %v3387
    %v4458 = vunpack.c.l.b16 %v3388
    %v4459 = vunpack.c.l.b16 %v3389
    %v4460 = vunpack.c.h.b16 %v3389
    %v4461 = vunpack.c.l.b16 %v3390
    %v4462 = vunpack.c.h.b16 %v3390
    %v4463 = vunpack.c.l.b16 %v3391
    %v4464 = vunpack.c.h.b16 %v3391
    %v4465 = vunpack.c.l.b16 %v3392
    %v4466 = vunpack.c.l.b16 %v3393
    %v4467 = vunpack.c.h.b16 %v3393
    %v4468 = vunpack.c.l.b16 %v3394
    %v4469 = vunpack.c.h.b16 %v3394
    %v4470 = vunpack.c.l.b16 %v3395
    %v4471 = vunpack.c.h.b16 %v3395
    %v4472 = vunpack.c.l.b16 %v3396
    %v4473 = vunpack.c.l.b16 %v3397
    %v4474 = vunpack.c.h.b16 %v3397
    %v4475 = vunpack.c.l.b16 %v3398
    %v4476 = vunpack.c.h.b16 %v3398
    %v4477 = vunpack.c.l.b16 %v3399
    %v4478 = vunpack.c.h.b16 %v3399
    %v4479 = vunpack.c.l.b16 %v3400
    %v4480 = vunpack.c.l.b16 %v3401
    %v4481 = vunpack.c.h.b16 %v3401
    %v4482 = vunpack.c.l.b16 %v3402
    %v4483 = vunpack.c.h.b16 %v3402
    %v4484 = vunpack.c.l.b16 %v3403
    %v4485 = vunpack.c.h.b16 %v3403
    %v4486 = vunpack.c.l.b16 %v3404
    %v4487 = vunpack.c.l.b16 %v3405
    %v4488 = vunpack.c.h.b16 %v3405
    %v4489 = vunpack.c.l.b16 %v3406
    %v4490 = vunpack.c.h.b16 %v3406
    %v4491 = vunpack.c.l.b16 %v3407
    %v4492 = vunpack.c.h.b16 %v3407
    %v4493 = vunpack.c.l.b16 %v3408
    %v4494 = vunpack.c.l.b16 %v3409
    %v4495 = vunpack.c.h.b16 %v3409
    %v4496 = vunpack.c.l.b16 %v3410
    %v4497 = vunpack.c.h.b16 %v3410
    %v4498 = vunpack.c.l.b16 %v3411
    %v4499 = vunpack.c.h.b16 %v3411
    %v4500 = vunpack.c.l.b16 %v3412
    %v4501 = vunpack.c.l.b16 %v3413
    %v4502 = vunpack.c.h.b16 %v3413
    %v4503 = vunpack.c.l.b16 %v3414
    %v4504 = vunpack.c.h.b16 %v3414
    %v4505 = vunpack.c.l.b16 %v3415
    %v4506 = vunpack.c.h.b16 %v3415
    %v4507 = vunpack.c.l.b16 %v3416
    %v4508 = vunpack.c.l.b16 %v3417
    %v4509 = vunpack.c.h.b16 %v3417
    %v4510 = vunpack.c.l.b16 %v3418
    %v4511 = vunpack.c.h.b16 %v3418
    %v4512 = vunpack.c.l.b16 %v3419
    %v4513 = vunpack.c.h.b16 %v3419
    %v4514 = vunpack.c.l.b16 %v3420
    %v4515 = vunpack.c.l.b16 %v3421
    %v4516 = vunpack.c.h.b16 %v3421
    %v4517 = vunpack.c.l.b16 %v3422
    %v4518 = vunpack.c.h.b16 %v3422
    %v4519 = vunpack.c.l.b16 %v3423
    %v4520 = vunpack.c.h.b16 %v3423
    %v4521 = vunpack.c.l.b16 %v3424
    %v4522 = vunpack.c.l.b16 %v3425
    %v4523 = vunpack.c.h.b16 %v3425
    %v4524 = vunpack.c.l.b16 %v3426
    %v4525 = vunpack.c.h.b16 %v3426
    %v4526 = vunpack.c.l.b16 %v3427
    %v4527 = vunpack.c.h.b16 %v3427
    %v4528 = vunpack.c.l.b16 %v3428
    %v4529 = vunpack.c.l.b16 %v3429
    %v4530 = vunpack.c.h.b16 %v3429
    %v4531 = vunpack.c.l.b16 %v3430
    %v4532 = vunpack.c.h.b16 %v3430
    %v4533 = vunpack.c.l.b16 %v3431
    %v4534 = vunpack.c.h.b16 %v3431
    %v4535 = vunpack.c.l.b16 %v3432
    %v4536 = vunpack.c.l.b16 %v3433
    %v4537 = vunpack.c.h.b16 %v3433
    %v4538 = vunpack.c.l.b16 %v3434
    %v4539 = vunpack.c.h.b16 %v3434
    %v4540 = vunpack.c.l.b16 %v3435
    %v4541 = vunpack.c.h.b16 %v3435
    %v4542 = vunpack.c.l.b16 %v3436
    %v4543 = vunpack.c.l.b16 %v3437
    %v4544 = vunpack.c.h.b16 %v3437
    %v4545 = vunpack.c.l.b16 %v3438
    %v4546 = vunpack.c.h.b16 %v3438
    %v4547 = vunpack.c.l.b16 %v3439
    %v4548 = vunpack.c.h.b16 %v3439
    %v4549 = vunpack.c.l.b16 %v3440
    %v4550 = vunpack.c.l.b16 %v3441
    %v4551 = vunpack.c.h.b16 %v3441
    %v4552 = vunpack.c.l.b16 %v3442
    %v4553 = vunpack.c.h.b16 %v3442
    %v4554 = vunpack.c.l.b16 %v3443
    %v4555 = vunpack.c.h.b16 %v3443
    %v4556 = vunpack.c.l.b16 %v3444
    %v4557 = vunpack.c.l.b16 %v3445
    %v4558 = vunpack.c.h.b16 %v3445
    %v4559 = vunpack.c.l.b16 %v3446
    %v4560 = vunpack.c.h.b16 %v3446
    %v4561 = vunpack.c.l.b16 %v3447
    %v4562 = vunpack.c.h.b16 %v3447
    %v4563 = vunpack.c.l.b16 %v3448
    %v4564 = vunpack.c.l.b16 %v3449
    %v4565 = vunpack.c.h.b16 %v3449
    %v4566 = vunpack.c.l.b16 %v3450
    %v4567 = vunpack.c.h.b16 %v3450
    %v4568 = vunpack.c.l.b16 %v3451
    %v4569 = vunpack.c.h.b16 %v3451
    %v4570 = vunpack.c.l.b16 %v3452
    %v4571 = vunpack.c.l.b16 %v3453
    %v4572 = vunpack.c.h.b16 %v3453
    %v4573 = vunpack.c.l.b16 %v3454
    %v4574 = vunpack.c.h.b16 %v3454
    %v4575 = vunpack.c.l.b16 %v3455
    %v4576 = vunpack.c.h.b16 %v3455
    %v4577 = vunpack.c.l.b16 %v3456
    %v4578 = vunpack.c.l.b16 %v3457
    %v4579 = vunpack.c.h.b16 %v3457
    %v4580 = vunpack.c.l.b16 %v3458
    %v4581 = vunpack.c.h.b16 %v3458
    %v4582 = vunpack.c.l.b16 %v3459
    %v4583 = vunpack.c.h.b16 %v3459
    %v4584 = vunpack.c.l.b16 %v3460
    %v4585 = vunpack.c.l.b16 %v3461
    %v4586 = vunpack.c.h.b16 %v3461
    %v4587 = vunpack.c.l.b16 %v3462
    %v4588 = vunpack.c.h.b16 %v3462
    %v4589 = vunpack.c.l.b16 %v3463
    %v4590 = vunpack.c.h.b16 %v3463
    %v4591 = vunpack.c.l.b16 %v3464
    %v4592 = vunpack.c.l.b16 %v3465
    %v4593 = vunpack.c.h.b16 %v3465
    %v4594 = vunpack.c.l.b16 %v3466
    %v4595 = vunpack.c.h.b16 %v3466
    %v4596 = vunpack.c.l.b16 %v3467
    %v4597 = vunpack.c.h.b16 %v3467
    %v4598 = vunpack.c.l.b16 %v3468
    %v4599 = vunpack.c.l.b16 %v3469
    %v4600 = vunpack.c.h.b16 %v3469
    %v4601 = vunpack.c.l.b16 %v3470
    %v4602 = vunpack.c.h.b16 %v3470
    %v4603 = vunpack.c.l.b16 %v3471
    %v4604 = vunpack.c.h.b16 %v3471
    %v4605 = vunpack.c.l.b16 %v3472
    %v4606 = vunpack.c.l.b16 %v3473
    %v4607 = vunpack.c.h.b16 %v3473
    %v4608 = vunpack.c.l.b16 %v3474
    %v4609 = vunpack.c.h.b16 %v3474
    %v4610 = vunpack.c.l.b16 %v3475
    %v4611 = vunpack.c.h.b16 %v3475
    %v4612 = vunpack.c.l.b16 %v3476
    %v4613 = vunpack.c.l.b16 %v3477
    %v4614 = vunpack.c.h.b16 %v3477
    %v4615 = vunpack.c.l.b16 %v3478
    %v4616 = vunpack.c.h.b16 %v3478
    %v4617 = vunpack.c.l.b16 %v3479
    %v4618 = vunpack.c.h.b16 %v3479
    %v4619 = vunpack.c.l.b16 %v3480
    %v4620 = vunpack.c.l.b16 %v3481
    %v4621 = vunpack.c.h.b16 %v3481
    %v4622 = vunpack.c.l.b16 %v3482
    %v4623 = vunpack.c.h.b16 %v3482
    %v4624 = vunpack.c.l.b16 %v3483
    %v4625 = vunpack.c.h.b16 %v3483
    %v4626 = vunpack.c.l.b16 %v3484
    %v4627 = vunpack.c.l.b16 %v3485
    %v4628 = vunpack.c.h.b16 %v3485
    %v4629 = vunpack.c.l.b16 %v3486
    %v4630 = vunpack.c.h.b16 %v3486
    %v4631 = vunpack.c.l.b16 %v3487
    %v4632 = vunpack.c.h.b16 %v3487
    %v4633 = vunpack.c.l.b16 %v3488
    %v4634 = vunpack.c.l.b16 %v3489
    %v4635 = vunpack.c.h.b16 %v3489
    %v4636 = vunpack.c.l.b16 %v3490
    %v4637 = vunpack.c.h.b16 %v3490
    %v4638 = vunpack.c.l.b16 %v3491
    %v4639 = vunpack.c.h.b16 %v3491
    %v4640 = vunpack.c.l.b16 %v3492
    %v4641 = vunpack.c.l.b16 %v3493
    %v4642 = vunpack.c.h.b16 %v3493
    %v4643 = vunpack.c.l.b16 %v3494
    %v4644 = vunpack.c.h.b16 %v3494
    %v4645 = vunpack.c.l.b16 %v3495
    %v4646 = vunpack.c.h.b16 %v3495
    %v4647 = vunpack.c.l.b16 %v3496
    %v4648 = vunpack.c.l.b16 %v3497
    %v4649 = vunpack.c.h.b16 %v3497
    %v4650 = vunpack.c.l.b16 %v3498
    %v4651 = vunpack.c.h.b16 %v3498
    %v4652 = vunpack.c.l.b16 %v3499
    %v4653 = vunpack.c.h.b16 %v3499
    %v4654 = vunpack.c.l.b16 %v3500
    %v4655 = vunpack.c.l.b16 %v3501
    %v4656 = vunpack.c.h.b16 %v3501
    %v4657 = vunpack.c.l.b16 %v3502
    %v4658 = vunpack.c.h.b16 %v3502
    %v4659 = vunpack.c.l.b16 %v3503
    %v4660 = vunpack.c.h.b16 %v3503
    %v4661 = vunpack.c.l.b16 %v3504
    %v4662 = vunpack.c.l.b16 %v3505
    %v4663 = vunpack.c.h.b16 %v3505
    %v4664 = vunpack.c.l.b16 %v3506
    %v4665 = vunpack.c.h.b16 %v3506
    %v4666 = vunpack.c.l.b16 %v3507
    %v4667 = vunpack.c.h.b16 %v3507
    %v4668 = vunpack.c.l.b16 %v3508
    %v4669 = vunpack.c.l.b16 %v3509
    %v4670 = vunpack.c.h.b16 %v3509
    %v4671 = vunpack.c.l.b16 %v3510
    %v4672 = vunpack.c.h.b16 %v3510
    %v4673 = vunpack.c.l.b16 %v3511
    %v4674 = vunpack.c.h.b16 %v3511
    %v4675 = vunpack.c.l.b16 %v3512
    %v4676 = vunpack.c.l.b16 %v3513
    %v4677 = vunpack.c.h.b16 %v3513
    %v4678 = vunpack.c.l.b16 %v3514
    %v4679 = vunpack.c.h.b16 %v3514
    %v4680 = vunpack.c.l.b16 %v3515
    %v4681 = vunpack.c.h.b16 %v3515
    %v4682 = vunpack.c.l.b16 %v3516
    %v4683 = vunpack.c.l.b16 %v3517
    %v4684 = vunpack.c.h.b16 %v3517
    %v4685 = vunpack.c.l.b16 %v3518
    %v4686 = vunpack.c.h.b16 %v3518
    %v4687 = vunpack.c.l.b16 %v3519
    %v4688 = vunpack.c.h.b16 %v3519
    %v4689 = vunpack.c.l.b16 %v3520
    %v4690 = vunpack.c.l.b16 %v3521
    %v4691 = vunpack.c.h.b16 %v3521
    %v4692 = vunpack.c.l.b16 %v3522
    %v4693 = vunpack.c.h.b16 %v3522
    %v4694 = vunpack.c.l.b16 %v3523
    %v4695 = vunpack.c.h.b16 %v3523
    %v4696 = vunpack.c.l.b16 %v3524
    %v4697 = vunpack.c.l.b16 %v3525
    %v4698 = vunpack.c.h.b16 %v3525
    %v4699 = vunpack.c.l.b16 %v3526
    %v4700 = vunpack.c.h.b16 %v3526
    %v4701 = vunpack.c.l.b16 %v3527
    %v4702 = vunpack.c.h.b16 %v3527
    %v4703 = vunpack.c.l.b16 %v3528
    %v4704 = vunpack.c.l.b16 %v3529
    %v4705 = vunpack.c.h.b16 %v3529
    %v4706 = vunpack.c.l.b16 %v3530
    %v4707 = vunpack.c.h.b16 %v3530
    %v4708 = vunpack.c.l.b16 %v3531
    %v4709 = vunpack.c.h.b16 %v3531
    %v4710 = vunpack.c.l.b16 %v3532
    %v4711 = vunpack.c.l.b16 %v3533
    %v4712 = vunpack.c.h.b16 %v3533
    %v4713 = vunpack.c.l.b16 %v3534
    %v4714 = vunpack.c.h.b16 %v3534
    %v4715 = vunpack.c.l.b16 %v3535
    %v4716 = vunpack.c.h.b16 %v3535
    %v4717 = vunpack.c.l.b16 %v3536
    %v4718 = vunpack.c.l.b16 %v3537
    %v4719 = vunpack.c.h.b16 %v3537
    %v4720 = vunpack.c.l.b16 %v3538
    %v4721 = vunpack.c.h.b16 %v3538
    %v4722 = vunpack.c.l.b16 %v3539
    %v4723 = vunpack.c.h.b16 %v3539
    %v4724 = vunpack.c.l.b16 %v3540
    %v4725 = vunpack.c.l.b16 %v3541
    %v4726 = vunpack.c.h.b16 %v3541
    %v4727 = vunpack.c.l.b16 %v3542
    %v4728 = vunpack.c.h.b16 %v3542
    %v4729 = vunpack.c.l.b16 %v3543
    %v4730 = vunpack.c.h.b16 %v3543
    %v4731 = vunpack.c.l.b16 %v3544
    %v4732 = vunpack.c.l.b16 %v3545
    %v4733 = vunpack.c.h.b16 %v3545
    %v4734 = vunpack.c.l.b16 %v3546
    %v4735 = vunpack.c.h.b16 %v3546
    %v4736 = vunpack.c.l.b16 %v3547
    %v4737 = vunpack.c.h.b16 %v3547
    %v4738 = vunpack.c.l.b16 %v3548
    %v4739 = vunpack.c.l.b16 %v3549
    %v4740 = vunpack.c.h.b16 %v3549
    %v4741 = vunpack.c.l.b16 %v3550
    %v4742 = vunpack.c.h.b16 %v3550
    %v4743 = vunpack.c.l.b16 %v3551
    %v4744 = vunpack.c.h.b16 %v3551
    %v4745 = vunpack.c.l.b16 %v3552
    %v4746 = vunpack.c.l.b16 %v3553
    %v4747 = vunpack.c.h.b16 %v3553
    %v4748 = vunpack.c.l.b16 %v3554
    %v4749 = vunpack.c.h.b16 %v3554
    %v4750 = vunpack.c.l.b16 %v3555
    %v4751 = vunpack.c.h.b16 %v3555
    %v4752 = vunpack.c.l.b16 %v3556
    %v4753 = vunpack.c.l.b16 %v3557
    %v4754 = vunpack.c.h.b16 %v3557
    %v4755 = vunpack.c.l.b16 %v3558
    %v4756 = vunpack.c.h.b16 %v3558
    %v4757 = vunpack.c.l.b16 %v3559
    %v4758 = vunpack.c.h.b16 %v3559
    %v4759 = vunpack.c.l.b16 %v3560
    %v4760 = vunpack.c.l.b16 %v3561
    %v4761 = vunpack.c.h.b16 %v3561
    %v4762 = vunpack.c.l.b16 %v3562
    %v4763 = vunpack.c.h.b16 %v3562
    %v4764 = vunpack.c.l.b16 %v3563
    %v4765 = vunpack.c.h.b16 %v3563
    %v4766 = vunpack.c.l.b16 %v3564
    %v4767 = vunpack.c.l.b16 %v3565
    %v4768 = vunpack.c.h.b16 %v3565
    %v4769 = vunpack.c.l.b16 %v3566
    %v4770 = vunpack.c.h.b16 %v3566
    %v4771 = vunpack.c.l.b16 %v3567
    %v4772 = vunpack.c.h.b16 %v3567
    %v4773 = vunpack.c.l.b16 %v3568
    %v4774 = vunpack.c.l.b16 %v3569
    %v4775 = vunpack.c.h.b16 %v3569
    %v4776 = vunpack.c.l.b16 %v3570
    %v4777 = vunpack.c.h.b16 %v3570
    %v4778 = vunpack.c.l.b16 %v3571
    %v4779 = vunpack.c.h.b16 %v3571
    %v4780 = vunpack.c.l.b16 %v3572
    %v4781 = vunpack.c.l.b16 %v3573
    %v4782 = vunpack.c.h.b16 %v3573
    %v4783 = vunpack.c.l.b16 %v3574
    %v4784 = vunpack.c.h.b16 %v3574
    %v4785 = vunpack.c.l.b16 %v3575
    %v4786 = vunpack.c.h.b16 %v3575
    %v4787 = vunpack.c.l.b16 %v3576
    %v4788 = vunpack.c.l.b16 %v3577
    %v4789 = vunpack.c.h.b16 %v3577
    %v4790 = vunpack.c.l.b16 %v3578
    %v4791 = vunpack.c.h.b16 %v3578
    %v4792 = vunpack.c.l.b16 %v3579
    %v4793 = vunpack.c.h.b16 %v3579
    %v4794 = vunpack.c.l.b16 %v3580
    %v4795 = vunpack.c.l.b16 %v3581
    %v4796 = vunpack.c.h.b16 %v3581
    %v4797 = vunpack.c.l.b16 %v3582
    %v4798 = vunpack.c.h.b16 %v3582
    %v4799 = vunpack.c.l.b16 %v3583
    %v4800 = vunpack.c.h.b16 %v3583
    %v4801 = vunpack.c.l.b16 %v3584
    %v4802 = vunpack.c.l.b16 %v3585
    %v4803 = vunpack.c.h.b16 %v3585
    %v4804 = vunpack.c.l.b16 %v3586
    %v4805 = vunpack.c.h.b16 %v3586
    %v4806 = vunpack.c.l.b16 %v3587
    %v4807 = vunpack.c.h.b16 %v3587
    %v4808 = vunpack.c.l.b16 %v3588
    %v4809 = vunpack.c.l.b16 %v3589
    %v4810 = vunpack.c.h.b16 %v3589
    %v4811 = vunpack.c.l.b16 %v3590
    %v4812 = vunpack.c.h.b16 %v3590
    %v4813 = vunpack.c.l.b16 %v3591
    %v4814 = vunpack.c.h.b16 %v3591
    %v4815 = vunpack.c.l.b16 %v3592
    %v4816 = vunpack.c.l.b16 %v3593
    %v4817 = vunpack.c.h.b16 %v3593
    %v4818 = vunpack.c.l.b16 %v3594
    %v4819 = vunpack.c.h.b16 %v3594
    %v4820 = vunpack.c.l.b16 %v3595
    %v4821 = vunpack.c.h.b16 %v3595
    %v4822 = vunpack.c.l.b16 %v3596
    %v4823 = vunpack.c.l.b16 %v3597
    %v4824 = vunpack.c.h.b16 %v3597
    %v4825 = vunpack.c.l.b16 %v3598
    %v4826 = vunpack.c.h.b16 %v3598
    %v4827 = vunpack.c.l.b16 %v3599
    %v4828 = vunpack.c.h.b16 %v3599
    %v4829 = vunpack.c.l.b16 %v3600
    %v4830 = vunpack.c.l.b16 %v3601
    %v4831 = vunpack.c.h.b16 %v3601
    %v4832 = vunpack.c.l.b16 %v3602
    %v4833 = vunpack.c.h.b16 %v3602
    %v4834 = vunpack.c.l.b16 %v3603
    %v4835 = vunpack.c.h.b16 %v3603
    %v4836 = vunpack.c.l.b16 %v3604
    %v4837 = vunpack.c.l.b16 %v3605
    %v4838 = vunpack.c.h.b16 %v3605
    %v4839 = vunpack.c.l.b16 %v3606
    %v4840 = vunpack.c.h.b16 %v3606
    %v4841 = vunpack.c.l.b16 %v3607
    %v4842 = vunpack.c.h.b16 %v3607
    %v4843 = vunpack.c.l.b16 %v3608
    %v4844 = vunpack.c.l.b16 %v3609
    %v4845 = vunpack.c.h.b16 %v3609
    %v4846 = vunpack.c.l.b16 %v3610
    %v4847 = vunpack.c.h.b16 %v3610
    %v4848 = vunpack.c.l.b16 %v3611
    %v4849 = vunpack.c.h.b16 %v3611
    %v4850 = vunpack.c.l.b16 %v3612
    %v4851 = vunpack.c.l.b16 %v3613
    %v4852 = vunpack.c.h.b16 %v3613
    %v4853 = vunpack.c.l.b16 %v3614
    %v4854 = vunpack.c.h.b16 %v3614
    %v4855 = vunpack.c.l.b16 %v3615
    %v4856 = vunpack.c.h.b16 %v3615
    %v4857 = vunpack.c.l.b16 %v3616
    %v4858 = vunpack.c.l.b16 %v3617
    %v4859 = vunpack.c.h.b16 %v3617
    %v4860 = vunpack.c.l.b16 %v3618
    %v4861 = vunpack.c.h.b16 %v3618
    %v4862 = vunpack.c.l.b16 %v3619
    %v4863 = vunpack.c.h.b16 %v3619
    %v4864 = vunpack.c.l.b16 %v3620
    %v4865 = vunpack.c.l.b16 %v3621
    %v4866 = vunpack.c.h.b16 %v3621
    %v4867 = vunpack.c.l.b16 %v3622
    %v4868 = vunpack.c.h.b16 %v3622
    %v4869 = vunpack.c.l.b16 %v3623
    %v4870 = vunpack.c.h.b16 %v3623
    %v4871 = vunpack.c.l.b16 %v3624
    %v4872 = vunpack.c.l.b16 %v3625
    %v4873 = vunpack.c.h.b16 %v3625
    %v4874 = vunpack.c.l.b16 %v3626
    %v4875 = vunpack.c.h.b16 %v3626
    %v4876 = vunpack.c.l.b16 %v3627
    %v4877 = vunpack.c.h.b16 %v3627
    %v4878 = vunpack.c.l.b16 %v3628
    %v4879 = vunpack.c.l.b16 %v3629
    %v4880 = vunpack.c.h.b16 %v3629
    %v4881 = vunpack.c.l.b16 %v3630
    %v4882 = vunpack.c.h.b16 %v3630
    %v4883 = vunpack.c.l.b16 %v3631
    %v4884 = vunpack.c.h.b16 %v3631
    %v4885 = vunpack.c.l.b16 %v3632
    %v4886 = vunpack.c.l.b16 %v3633
    %v4887 = vunpack.c.h.b16 %v3633
    %v4888 = vunpack.c.l.b16 %v3634
    %v4889 = vunpack.c.h.b16 %v3634
    %v4890 = vunpack.c.l.b16 %v3635
    %v4891 = vunpack.c.h.b16 %v3635
    %v4892 = vunpack.c.l.b16 %v3636
    %v4893 = vunpack.c.l.b16 %v3637
    %v4894 = vunpack.c.h.b16 %v3637
    %v4895 = vunpack.c.l.b16 %v3638
    %v4896 = vunpack.c.h.b16 %v3638
    %v4897 = vunpack.c.l.b16 %v3639
    %v4898 = vunpack.c.h.b16 %v3639
    %v4899 = vunpack.c.l.b16 %v3640
    %v4900 = vunpack.c.l.b16 %v3641
    %v4901 = vunpack.c.h.b16 %v3641
    %v4902 = vunpack.c.l.b16 %v3642
    %v4903 = vunpack.c.h.b16 %v3642
    %v4904 = vunpack.c.l.b16 %v3643
    %v4905 = vunpack.c.h.b16 %v3643
    %v4906 = vunpack.c.l.b16 %v3644
    %v4907 = vunpack.c.l.b16 %v3645
    %v4908 = vunpack.c.h.b16 %v3645
    %v4909 = vunpack.c.l.b16 %v3646
    %v4910 = vunpack.c.h.b16 %v3646
    %v4911 = vunpack.c.l.b16 %v3647
    %v4912 = vunpack.c.h.b16 %v3647
    %v4913 = vunpack.c.l.b16 %v3648
    %v4914 = vunpack.c.l.b16 %v3649
    %v4915 = vunpack.c.h.b16 %v3649
    %v4916 = vunpack.c.l.b16 %v3650
    %v4917 = vunpack.c.h.b16 %v3650
    %v4918 = vunpack.c.l.b16 %v3651
    %v4919 = vunpack.c.h.b16 %v3651
    %v4920 = vunpack.c.l.b16 %v3652
    %v4921 = vunpack.c.l.b16 %v3653
    %v4922 = vunpack.c.h.b16 %v3653
    %v4923 = vunpack.c.l.b16 %v3654
    %v4924 = vunpack.c.h.b16 %v3654
    %v4925 = vunpack.c.l.b16 %v3655
    %v4926 = vunpack.c.h.b16 %v3655
    %v4927 = vunpack.c.l.b16 %v3656
    %v4928 = vunpack.c.l.b16 %v3657
    %v4929 = vunpack.c.h.b16 %v3657
    %v4930 = vunpack.c.l.b16 %v3658
    %v4931 = vunpack.c.h.b16 %v3658
    %v4932 = vunpack.c.l.b16 %v3659
    %v4933 = vunpack.c.h.b16 %v3659
    %v4934 = vunpack.c.l.b16 %v3660
    %v4935 = vunpack.c.l.b16 %v3661
    %v4936 = vunpack.c.h.b16 %v3661
    %v4937 = vunpack.c.l.b16 %v3662
    %v4938 = vunpack.c.h.b16 %v3662
    %v4939 = vunpack.c.l.b16 %v3663
    %v4940 = vunpack.c.h.b16 %v3663
    %v4941 = vunpack.c.l.b16 %v3664
    %v4942 = vunpack.c.l.b16 %v3665
    %v4943 = vunpack.c.h.b16 %v3665
    %v4944 = vunpack.c.l.b16 %v3666
    %v4945 = vunpack.c.h.b16 %v3666
    %v4946 = vunpack.c.l.b16 %v3667
    %v4947 = vunpack.c.h.b16 %v3667
    %v4948 = vunpack.c.l.b16 %v3668
    %v4949 = vunpack.c.l.b16 %v3669
    %v4950 = vunpack.c.h.b16 %v3669
    %v4951 = vunpack.c.l.b16 %v3670
    %v4952 = vunpack.c.h.b16 %v3670
    %v4953 = vunpack.c.l.b16 %v3671
    %v4954 = vunpack.c.h.b16 %v3671
    %v4955 = vunpack.c.l.b16 %v3672
    %v4956 = vunpack.c.l.b16 %v3673
    %v4957 = vunpack.c.h.b16 %v3673
    %v4958 = vunpack.c.l.b16 %v3674
    %v4959 = vunpack.c.h.b16 %v3674
    %v4960 = vunpack.c.l.b16 %v3675
    %v4961 = vunpack.c.h.b16 %v3675
    %v4962 = vunpack.c.l.b16 %v3676
    %v4963 = vunpack.c.l.b16 %v3677
    %v4964 = vunpack.c.h.b16 %v3677
    %v4965 = vunpack.c.l.b16 %v3678
    %v4966 = vunpack.c.h.b16 %v3678
    %v4967 = vunpack.c.l.b16 %v3679
    %v4968 = vunpack.c.h.b16 %v3679
    %v4969 = vunpack.c.l.b16 %v3680
    %v4970 = vunpack.c.l.b16 %v3681
    %v4971 = vunpack.c.h.b16 %v3681
    %v4972 = vunpack.c.l.b16 %v3682
    %v4973 = vunpack.c.h.b16 %v3682
    %v4974 = vunpack.c.l.b16 %v3683
    %v4975 = vunpack.c.h.b16 %v3683
    %v4976 = vunpack.c.l.b16 %v3684
    %v4977 = vunpack.c.l.b16 %v3685
    %v4978 = vunpack.c.h.b16 %v3685
    %v4979 = vunpack.c.l.b16 %v3686
    %v4980 = vunpack.c.h.b16 %v3686
    %v4981 = vunpack.c.l.b16 %v3687
    %v4982 = vunpack.c.h.b16 %v3687
    %v4983 = vunpack.c.l.b16 %v3688
    %v4984 = vunpack.c.l.b16 %v3689
    %v4985 = vunpack.c.h.b16 %v3689
    %v4986 = vunpack.c.l.b16 %v3690
    %v4987 = vunpack.c.h.b16 %v3690
    %v4988 = vunpack.c.l.b16 %v3691
    %v4989 = vunpack.c.h.b16 %v3691
    %v4990 = vunpack.c.l.b16 %v3692
    %v4991 = vunpack.c.l.b16 %v3693
    %v4992 = vunpack.c.h.b16 %v3693
    %v4993 = vunpack.c.l.b16 %v3694
    %v4994 = vunpack.c.h.b16 %v3694
    %v4995 = vunpack.c.l.b16 %v3695
    %v4996 = vunpack.c.h.b16 %v3695
    %v4997 = vunpack.c.l.b16 %v3696
    %v4998 = vunpack.c.l.b16 %v3697
    %v4999 = vunpack.c.h.b16 %v3697
    %v5000 = vunpack.c.l.b16 %v3698
    %v5001 = vunpack.c.h.b16 %v3698
    %v5002 = vunpack.c.l.b16 %v3699
    %v5003 = vunpack.c.h.b16 %v3699
    %v5004 = vunpack.c.l.b16 %v3700
    %v5005 = vunpack.c.l.b16 %v3701
    %v5006 = vunpack.c.h.b16 %v3701
    %v5007 = vunpack.c.l.b16 %v3702
    %v5008 = vunpack.c.h.b16 %v3702
    %v5009 = vunpack.c.l.b16 %v3703
    %v5010 = vunpack.c.h.b16 %v3703
    %v5011 = vunpack.c.l.b16 %v3704
    %v5012 = vunpack.c.l.b16 %v3705
    %v5013 = vunpack.c.h.b16 %v3705
    %v5014 = vunpack.c.l.b16 %v3706
    %v5015 = vunpack.c.h.b16 %v3706
    %v5016 = vunpack.c.l.b16 %v3707
    %v5017 = vunpack.c.h.b16 %v3707
    %v5018 = vunpack.c.l.b16 %v3708
    %v5019 = vunpack.c.l.b16 %v3709
    %v5020 = vunpack.c.h.b16 %v3709
    %v5021 = vunpack.c.l.b16 %v3710
    %v5022 = vunpack.c.h.b16 %v3710
    %v5023 = vunpack.c.l.b16 %v3711
    %v5024 = vunpack.c.h.b16 %v3711
    %v5025 = vunpack.c.l.b16 %v3712
    %v5026 = vunpack.c.l.b16 %v3713
    %v5027 = vunpack.c.h.b16 %v3713
    %v5028 = vunpack.c.l.b16 %v3714
    %v5029 = vunpack.c.h.b16 %v3714
    %v5030 = vunpack.c.l.b16 %v3715
    %v5031 = vunpack.c.h.b16 %v3715
    %v5032 = vunpack.c.l.b16 %v3716
    %v5033 = vunpack.c.l.b16 %v3717
    %v5034 = vunpack.c.h.b16 %v3717
    %v5035 = vunpack.c.l.b16 %v3718
    %v5036 = vunpack.c.h.b16 %v3718
    %v5037 = vunpack.c.l.b16 %v3719
    %v5038 = vunpack.c.h.b16 %v3719
    %v5039 = vunpack.c.l.b16 %v3720
    %v5040 = vunpack.c.l.b16 %v3721
    %v5041 = vunpack.c.h.b16 %v3721
    %v5042 = vunpack.c.l.b16 %v3722
    %v5043 = vunpack.c.h.b16 %v3722
    %v5044 = vunpack.c.l.b16 %v3723
    %v5045 = vunpack.c.h.b16 %v3723
    %v5046 = vunpack.c.l.b16 %v3724
    %v5047 = vunpack.c.l.b16 %v3725
    %v5048 = vunpack.c.h.b16 %v3725
    %v5049 = vunpack.c.l.b16 %v3726
    %v5050 = vunpack.c.h.b16 %v3726
    %v5051 = vunpack.c.l.b16 %v3727
    %v5052 = vunpack.c.h.b16 %v3727
    %v5053 = vunpack.c.l.b16 %v3728
    %v5054 = vunpack.c.l.b16 %v3729
    %v5055 = vunpack.c.h.b16 %v3729
    %v5056 = vunpack.c.l.b16 %v3730
    %v5057 = vunpack.c.h.b16 %v3730
    %v5058 = vunpack.c.l.b16 %v3731
    %v5059 = vunpack.c.h.b16 %v3731
    %v5060 = vunpack.c.l.b16 %v3732
    %v5061 = vunpack.c.l.b16 %v3733
    %v5062 = vunpack.c.h.b16 %v3733
    %v5063 = vunpack.c.l.b16 %v3734
    %v5064 = vunpack.c.h.b16 %v3734
    %v5065 = vunpack.c.l.b16 %v3735
    %v5066 = vunpack.c.h.b16 %v3735
    %v5067 = vunpack.c.l.b16 %v3736
    %v5068 = vunpack.c.l.b16 %v3737
    %v5069 = vunpack.c.h.b16 %v3737
    %v5070 = vunpack.c.l.b16 %v3738
    %v5071 = vunpack.c.h.b16 %v3738
    %v5072 = vunpack.c.l.b16 %v3739
    %v5073 = vunpack.c.h.b16 %v3739
    %v5074 = vunpack.c.l.b16 %v3740
    %v5075 = vunpack.c.l.b16 %v3741
    %v5076 = vunpack.c.h.b16 %v3741
    %v5077 = vunpack.c.l.b16 %v3742
    %v5078 = vunpack.c.h.b16 %v3742
    %v5079 = vunpack.c.l.b16 %v3743
    %v5080 = vunpack.c.h.b16 %v3743
    %v5081 = vunpack.c.l.b16 %v3744
    %v5082 = vunpack.c.l.b16 %v3745
    %v5083 = vunpack.c.h.b16 %v3745
    %v5084 = vunpack.c.l.b16 %v3746
    %v5085 = vunpack.c.h.b16 %v3746
    %v5086 = vunpack.c.l.b16 %v3747
    %v5087 = vunpack.c.h.b16 %v3747
    %v5088 = vunpack.c.l.b16 %v3748
    %v5089 = vunpack.c.l.b16 %v3749
    %v5090 = vunpack.c.h.b16 %v3749
    %v5091 = vunpack.c.l.b16 %v3750
    %v5092 = vunpack.c.h.b16 %v3750
    %v5093 = vunpack.c.l.b16 %v3751
    %v5094 = vunpack.c.h.b16 %v3751
    %v5095 = vunpack.c.l.b16 %v3752
    %v5096 = vunpack.c.l.b16 %v3753
    %v5097 = vunpack.c.h.b16 %v3753
    %v5098 = vunpack.c.l.b16 %v3754
    %v5099 = vunpack.c.h.b16 %v3754
    %v5100 = vunpack.c.l.b16 %v3755
    %v5101 = vunpack.c.h.b16 %v3755
    %v5102 = vunpack.c.l.b16 %v3756
    %v5103 = vunpack.c.l.b16 %v3757
    %v5104 = vunpack.c.h.b16 %v3757
    %v5105 = vunpack.c.l.b16 %v3758
    %v5106 = vunpack.c.h.b16 %v3758
    %v5107 = vunpack.c.l.b16 %v3759
    %v5108 = vunpack.c.h.b16 %v3759
    %v5109 = vunpack.c.l.b16 %v3760
    %v5110 = vunpack.c.l.b16 %v3761
    %v5111 = vunpack.c.h.b16 %v3761
    %v5112 = vunpack.c.l.b16 %v3762
    %v5113 = vunpack.c.h.b16 %v3762
    %v5114 = vunpack.c.l.b16 %v3763
    %v5115 = vunpack.c.h.b16 %v3763
    %v5116 = vunpack.c.l.b16 %v3764
    %v5117 = vunpack.c.l.b16 %v3765
    %v5118 = vunpack.c.h.b16 %v3765
    %v5119 = vunpack.c.l.b16 %v3766
    %v5120 = vunpack.c.h.b16 %v3766
    %v5121 = vunpack.c.l.b16 %v3767
    %v5122 = vunpack.c.h.b16 %v3767
    %v5123 = vunpack.c.l.b16 %v3768
    %v5124 = vunpack.c.l.b16 %v3769
    %v5125 = vunpack.c.h.b16 %v3769
    %v5126 = vunpack.c.l.b16 %v3770
    %v5127 = vunpack.c.h.b16 %v3770
    %v5128 = vunpack.c.l.b16 %v3771
    %v5129 = vunpack.c.h.b16 %v3771
    %v5130 = vunpack.c.l.b16 %v3772
    %v5131 = vunpack.c.l.b16 %v3773
    %v5132 = vunpack.c.h.b16 %v3773
    %v5133 = vunpack.c.l.b16 %v3774
    %v5134 = vunpack.c.h.b16 %v3774
    %v5135 = vunpack.c.l.b16 %v3775
    %v5136 = vunpack.c.h.b16 %v3775
    %v5137 = vunpack.c.l.b16 %v3776
    %v5138 = vunpack.c.l.b16 %v3777
    %v5139 = vunpack.c.h.b16 %v3777
    %v5140 = vunpack.c.l.b16 %v3778
    %v5141 = vunpack.c.h.b16 %v3778
    %v5142 = vunpack.c.l.b16 %v3779
    %v5143 = vunpack.c.h.b16 %v3779
    %v5144 = vunpack.c.l.b16 %v3780
    %v5145 = vunpack.c.l.b16 %v3781
    %v5146 = vunpack.c.h.b16 %v3781
    %v5147 = vunpack.c.l.b16 %v3782
    %v5148 = vunpack.c.h.b16 %v3782
    %v5149 = vunpack.c.l.b16 %v3783
    %v5150 = vunpack.c.h.b16 %v3783
    %v5151 = vunpack.c.l.b16 %v3784
    %v5152 = vunpack.c.l.b16 %v3785
    %v5153 = vunpack.c.h.b16 %v3785
    %v5154 = vunpack.c.l.b16 %v3786
    %v5155 = vunpack.c.h.b16 %v3786
    %v5156 = vunpack.c.l.b16 %v3787
    %v5157 = vunpack.c.h.b16 %v3787
    %v5158 = vunpack.c.l.b16 %v3788
    %v5159 = vunpack.c.l.b16 %v3789
    %v5160 = vunpack.c.h.b16 %v3789
    %v5161 = vunpack.c.l.b16 %v3790
    %v5162 = vunpack.c.h.b16 %v3790
    %v5163 = vunpack.c.l.b16 %v3791
    %v5164 = vunpack.c.h.b16 %v3791
    %v5165 = vunpack.c.l.b16 %v3792
    %v5166 = vunpack.c.l.b16 %v3793
    %v5167 = vunpack.c.h.b16 %v3793
    %v5168 = vunpack.c.l.b16 %v3794
    %v5169 = vunpack.c.h.b16 %v3794
    %v5170 = vunpack.c.l.b16 %v3795
    %v5171 = vunpack.c.h.b16 %v3795
    %v5172 = vunpack.c.l.b16 %v3796
    %v5173 = vunpack.c.l.b16 %v3797
    %v5174 = vunpack.c.h.b16 %v3797
    %v5175 = vunpack.c.l.b16 %v3798
    %v5176 = vunpack.c.h.b16 %v3798
    %v5177 = vunpack.c.l.b16 %v3799
    %v5178 = vunpack.c.h.b16 %v3799
    %v5179 = vunpack.c.l.b16 %v3800
    %v5180 = vunpack.c.l.b16 %v3801
    %v5181 = vunpack.c.h.b16 %v3801
    %v5182 = vunpack.c.l.b16 %v3802
    %v5183 = vunpack.c.h.b16 %v3802
    %v5184 = vunpack.c.l.b16 %v3803
    %v5185 = vunpack.c.h.b16 %v3803
    %v5186 = vunpack.c.l.b16 %v3804
    %v5187 = vunpack.c.l.b16 %v3805
    %v5188 = vunpack.c.h.b16 %v3805
    %v5189 = vunpack.c.l.b16 %v3806
    %v5190 = vunpack.c.h.b16 %v3806
    %v5191 = vunpack.c.l.b16 %v3807
    %v5192 = vunpack.c.h.b16 %v3807
    %v5193 = vunpack.c.l.b16 %v3808
    %v5194 = vunpack.c.l.b16 %v3809
    %v5195 = vunpack.c.h.b16 %v3809
    %v5196 = vunpack.c.l.b16 %v3810
    %v5197 = vunpack.c.h.b16 %v3810
    %v5198 = vunpack.c.l.b16 %v3811
    %v5199 = vunpack.c.h.b16 %v3811
    %v5200 = vunpack.c.l.b16 %v3812
    %v5201 = vunpack.c.l.b16 %v3813
    %v5202 = vunpack.c.h.b16 %v3813
    %v5203 = vunpack.c.l.b16 %v3814
    %v5204 = vunpack.c.h.b16 %v3814
    %v5205 = vunpack.c.l.b16 %v3815
    %v5206 = vunpack.c.h.b16 %v3815
    %v5207 = vunpack.c.l.b16 %v3816
    %v5208 = vunpack.c.l.b16 %v3817
    %v5209 = vunpack.c.h.b16 %v3817
    %v5210 = vunpack.c.l.b16 %v3818
    %v5211 = vunpack.c.h.b16 %v3818
    %v5212 = vunpack.c.l.b16 %v3819
    %v5213 = vunpack.c.h.b16 %v3819
    %v5214 = vunpack.c.l.b16 %v3820
    %v5215 = vunpack.c.l.b16 %v3821
    %v5216 = vunpack.c.h.b16 %v3821
    %v5217 = vunpack.c.l.b16 %v3822
    %v5218 = vunpack.c.h.b16 %v3822
    %v5219 = vunpack.c.l.b16 %v3823
    %v5220 = vunpack.c.h.b16 %v3823
    %v5221 = vunpack.c.l.b16 %v3824
    %v5222 = vunpack.c.l.b16 %v3825
    %v5223 = vunpack.c.h.b16 %v3825
    %v5224 = vunpack.c.l.b16 %v3826
    %v5225 = vunpack.c.h.b16 %v3826
    %v5226 = vunpack.c.l.b16 %v3827
    %v5227 = vunpack.c.h.b16 %v3827
    %v5228 = vunpack.c.l.b16 %v3828
    %v5229 = vunpack.c.l.b16 %v3829
    %v5230 = vunpack.c.h.b16 %v3829
    %v5231 = vunpack.c.l.b16 %v3830
    %v5232 = vunpack.c.h.b16 %v3830
    %v5233 = vunpack.c.l.b16 %v3831
    %v5234 = vunpack.c.h.b16 %v3831
    %v5235 = vunpack.c.l.b16 %v3832
    %v5236 = vunpack.c.l.b16 %v3833
    %v5237 = vunpack.c.h.b16 %v3833
    %v5238 = vunpack.c.l.b16 %v3834
    %v5239 = vunpack.c.h.b16 %v3834
    %v5240 = vunpack.c.l.b16 %v3835
    %v5241 = vunpack.c.h.b16 %v3835
    %v5242 = vunpack.c.l.b16 %v3836
    %v5243 = vunpack.c.l.b16 %v3837
    %v5244 = vunpack.c.h.b16 %v3837
    %v5245 = vunpack.c.l.b16 %v3838
    %v5246 = vunpack.c.h.b16 %v3838
    %v5247 = vunpack.c.l.b16 %v3839
    %v5248 = vunpack.c.h.b16 %v3839
    %v5249 = vunpack.c.l.b16 %v3840
    %v5250 = vunpack.c.l.b16 %v3841
    %v5251 = vunpack.c.h.b16 %v3841
    %v5252 = vunpack.c.l.b16 %v3842
    %v5253 = vunpack.c.h.b16 %v3842
    %v5254 = vunpack.c.l.b16 %v3843
    %v5255 = vunpack.c.h.b16 %v3843
    %v5256 = vunpack.c.l.b16 %v3844
    %v5257 = vunpack.c.l.b16 %v3845
    %v5258 = vunpack.c.h.b16 %v3845
    %v5259 = vunpack.c.l.b16 %v3846
    %v5260 = vunpack.c.h.b16 %v3846
    %v5261 = vunpack.c.l.b16 %v3847
    %v5262 = vunpack.c.h.b16 %v3847
    %v5263 = vunpack.c.l.b16 %v3848
    %v5264 = vunpack.c.l.b16 %v3849
    %v5265 = vunpack.c.h.b16 %v3849
    %v5266 = vunpack.c.l.b16 %v3850
    %v5267 = vunpack.c.h.b16 %v3850
    %v5268 = vunpack.c.l.b16 %v3851
    %v5269 = vunpack.c.h.b16 %v3851
    %v5270 = vunpack.c.l.b16 %v3852
    %v5271 = vunpack.c.l.b16 %v3853
    %v5272 = vunpack.c.h.b16 %v3853
    %v5273 = vunpack.c.l.b16 %v3854
    %v5274 = vunpack.c.h.b16 %v3854
    %v5275 = vunpack.c.l.b16 %v3855
    %v5276 = vunpack.c.h.b16 %v3855
    %v5277 = vunpack.c.l.b16 %v3856
    %v5278 = vunpack.c.l.b16 %v3857
    %v5279 = vunpack.c.h.b16 %v3857
    %v5280 = vunpack.c.l.b16 %v3858
    %v5281 = vunpack.c.h.b16 %v3858
    %v5282 = vunpack.c.l.b16 %v3859
    %v5283 = vunpack.c.h.b16 %v3859
    %v5284 = vunpack.c.l.b16 %v3860
    %v5285 = vunpack.c.l.b16 %v3861
    %v5286 = vunpack.c.h.b16 %v3861
    %v5287 = vunpack.c.l.b16 %v3862
    %v5288 = vunpack.c.h.b16 %v3862
    %v5289 = vunpack.c.l.b16 %v3863
    %v5290 = vunpack.c.h.b16 %v3863
    %v5291 = vunpack.c.l.b16 %v3864
    %v5292 = vunpack.c.l.b16 %v3865
    %v5293 = vunpack.c.h.b16 %v3865
    %v5294 = vunpack.c.l.b16 %v3866
    %v5295 = vunpack.c.h.b16 %v3866
    %v5296 = vunpack.c.l.b16 %v3867
    %v5297 = vunpack.c.h.b16 %v3867
    %v5298 = vunpack.c.l.b16 %v3868
    %v5299 = vunpack.c.l.b16 %v3869
    %v5300 = vunpack.c.h.b16 %v3869
    %v5301 = vunpack.c.l.b16 %v3870
    %v5302 = vunpack.c.h.b16 %v3870
    %v5303 = vunpack.c.l.b16 %v3871
    %v5304 = vunpack.c.h.b16 %v3871
    %v5305 = vunpack.c.l.b16 %v3872
    %v5306 = vunpack.c.l.b16 %v3873
    %v5307 = vunpack.c.h.b16 %v3873
    %v5308 = vunpack.c.l.b16 %v3874
    %v5309 = vunpack.c.h.b16 %v3874
    %v5310 = vunpack.c.l.b16 %v3875
    %v5311 = vunpack.c.h.b16 %v3875
    %v5312 = vunpack.c.l.b16 %v3876
    %v5313 = vunpack.c.l.b16 %v3877
    %v5314 = vunpack.c.h.b16 %v3877
    %v5315 = vunpack.c.l.b16 %v3878
    %v5316 = vunpack.c.h.b16 %v3878
    %v5317 = vunpack.c.l.b16 %v3879
    %v5318 = vunpack.c.h.b16 %v3879
    %v5319 = vunpack.c.l.b16 %v3880
    %v5320 = vunpack.c.l.b16 %v3881
    %v5321 = vunpack.c.h.b16 %v3881
    %v5322 = vunpack.c.l.b16 %v3882
    %v5323 = vunpack.c.h.b16 %v3882
    %v5324 = vunpack.c.l.b16 %v3883
    %v5325 = vunpack.c.h.b16 %v3883
    %v5326 = vunpack.c.l.b16 %v3884
    %v5327 = vunpack.c.l.b16 %v3885
    %v5328 = vunpack.c.h.b16 %v3885
    %v5329 = vunpack.c.l.b16 %v3886
    %v5330 = vunpack.c.h.b16 %v3886
    %v5331 = vunpack.c.l.b16 %v3887
    %v5332 = vunpack.c.h.b16 %v3887
    %v5333 = vunpack.c.l.b16 %v3888
    %v5334 = vpack.c.b16 %v4445, %v4438
    %v5335 = vpack.c.b16 %v4446, %v4439
    %v5336 = vpack.c.b16 %v4447, %v4440
    %v5337 = vpack.c.b16 %v4448, %v4441
    %v5338 = vpack.c.b16 %v4449, %v4442
    %v5339 = vpack.c.b16 %v4450, %v4443
    %v5340 = vpack.c.b16 %v4451, %v4444
    %v5341 = vpack.c.b16 %v4459, %v4452
    %v5342 = vpack.c.b16 %v4460, %v4453
    %v5343 = vpack.c.b16 %v4461, %v4454
    %v5344 = vpack.c.b16 %v4462, %v4455
    %v5345 = vpack.c.b16 %v4463, %v4456
    %v5346 = vpack.c.b16 %v4464, %v4457
    %v5347 = vpack.c.b16 %v4465, %v4458
    %v5348 = vpack.c.b16 %v4473, %v4466
    %v5349 = vpack.c.b16 %v4474, %v4467
    %v5350 = vpack.c.b16 %v4475, %v4468
    %v5351 = vpack.c.b16 %v4476, %v4469
    %v5352 = vpack.c.b16 %v4477, %v4470
    %v5353 = vpack.c.b16 %v4478, %v4471
    %v5354 = vpack.c.b16 %v4479, %v4472
    %v5355 = vpack.c.b16 %v4487, %v4480
    %v5356 = vpack.c.b16 %v4488, %v4481
    %v5357 = vpack.c.b16 %v4489, %v4482
    %v5358 = vpack.c.b16 %v4490, %v4483
    %v5359 = vpack.c.b16 %v4491, %v4484
    %v5360 = vpack.c.b16 %v4492, %v4485
    %v5361 = vpack.c.b16 %v4493, %v4486
    %v5362 = vpack.c.b16 %v4501, %v4494
    %v5363 = vpack.c.b16 %v4502, %v4495
    %v5364 = vpack.c.b16 %v4503, %v4496
    %v5365 = vpack.c.b16 %v4504, %v4497
    %v5366 = vpack.c.b16 %v4505, %v4498
    %v5367 = vpack.c.b16 %v4506, %v4499
    %v5368 = vpack.c.b16 %v4507, %v4500
    %v5369 = vpack.c.b16 %v4515, %v4508
    %v5370 = vpack.c.b16 %v4516, %v4509
    %v5371 = vpack.c.b16 %v4517, %v4510
    %v5372 = vpack.c.b16 %v4518, %v4511
    %v5373 = vpack.c.b16 %v4519, %v4512
    %v5374 = vpack.c.b16 %v4520, %v4513
    %v5375 = vpack.c.b16 %v4521, %v4514
    %v5376 = vpack.c.b16 %v4529, %v4522
    %v5377 = vpack.c.b16 %v4530, %v4523
    %v5378 = vpack.c.b16 %v4531, %v4524
    %v5379 = vpack.c.b16 %v4532, %v4525
    %v5380 = vpack.c.b16 %v4533, %v4526
    %v5381 = vpack.c.b16 %v4534, %v4527
    %v5382 = vpack.c.b16 %v4535, %v4528
    %v5383 = vpack.c.b16 %v4543, %v4536
    %v5384 = vpack.c.b16 %v4544, %v4537
    %v5385 = vpack.c.b16 %v4545, %v4538
    %v5386 = vpack.c.b16 %v4546, %v4539
    %v5387 = vpack.c.b16 %v4547, %v4540
    %v5388 = vpack.c.b16 %v4548, %v4541
    %v5389 = vpack.c.b16 %v4549, %v4542
    %v5390 = vpack.c.b16 %v4557, %v4550
    %v5391 = vpack.c.b16 %v4558, %v4551
    %v5392 = vpack.c.b16 %v4559, %v4552
    %v5393 = vpack.c.b16 %v4560, %v4553
    %v5394 = vpack.c.b16 %v4561, %v4554
    %v5395 = vpack.c.b16 %v4562, %v4555
    %v5396 = vpack.c.b16 %v4563, %v4556
    %v5397 = vpack.c.b16 %v4571, %v4564
    %v5398 = vpack.c.b16 %v4572, %v4565
    %v5399 = vpack.c.b16 %v4573, %v4566
    %v5400 = vpack.c.b16 %v4574, %v4567
    %v5401 = vpack.c.b16 %v4575, %v4568
    %v5402 = vpack.c.b16 %v4576, %v4569
    %v5403 = vpack.c.b16 %v4577, %v4570
    %v5404 = vpack.c.b16 %v4585, %v4578
    %v5405 = vpack.c.b16 %v4586, %v4579
    %v5406 = vpack.c.b16 %v4587, %v4580
    %v5407 = vpack.c.b16 %v4588, %v4581
    %v5408 = vpack.c.b16 %v4589, %v4582
    %v5409 = vpack.c.b16 %v4590, %v4583
    %v5410 = vpack.c.b16 %v4591, %v4584
    %v5411 = vpack.c.b16 %v4599, %v4592
    %v5412 = vpack.c.b16 %v4600, %v4593
    %v5413 = vpack.c.b16 %v4601, %v4594
    %v5414 = vpack.c.b16 %v4602, %v4595
    %v5415 = vpack.c.b16 %v4603, %v4596
    %v5416 = vpack.c.b16 %v4604, %v4597
    %v5417 = vpack.c.b16 %v4605, %v4598
    %v5418 = vpack.c.b16 %v4613, %v4606
    %v5419 = vpack.c.b16 %v4614, %v4607
    %v5420 = vpack.c.b16 %v4615, %v4608
    %v5421 = vpack.c.b16 %v4616, %v4609
    %v5422 = vpack.c.b16 %v4617, %v4610
    %v5423 = vpack.c.b16 %v4618, %v4611
    %v5424 = vpack.c.b16 %v4619, %v4612
    %v5425 = vpack.c.b16 %v4627, %v4620
    %v5426 = vpack.c.b16 %v4628, %v4621
    %v5427 = vpack.c.b16 %v4629, %v4622
    %v5428 = vpack.c.b16 %v4630, %v4623
    %v5429 = vpack.c.b16 %v4631, %v4624
    %v5430 = vpack.c.b16 %v4632, %v4625
    %v5431 = vpack.c.b16 %v4633, %v4626
    %v5432 = vpack.c.b16 %v4641, %v4634
    %v5433 = vpack.c.b16 %v4642, %v4635
    %v5434 = vpack.c.b16 %v4643, %v4636
    %v5435 = vpack.c.b16 %v4644, %v4637
    %v5436 = vpack.c.b16 %v4645, %v4638
    %v5437 = vpack.c.b16 %v4646, %v4639
    %v5438 = vpack.c.b16 %v4647, %v4640
    %v5439 = vpack.c.b16 %v4655, %v4648
    %v5440 = vpack.c.b16 %v4656, %v4649
    %v5441 = vpack.c.b16 %v4657, %v4650
    %v5442 = vpack.c.b16 %v4658, %v4651
    %v5443 = vpack.c.b16 %v4659, %v4652
    %v5444 = vpack.c.b16 %v4660, %v4653
    %v5445 = vpack.c.b16 %v4661, %v4654
    %v5446 = vpack.c.b16 %v4669, %v4662
    %v5447 = vpack.c.b16 %v4670, %v4663
    %v5448 = vpack.c.b16 %v4671, %v4664
    %v5449 = vpack.c.b16 %v4672, %v4665
    %v5450 = vpack.c.b16 %v4673, %v4666
    %v5451 = vpack.c.b16 %v4674, %v4667
    %v5452 = vpack.c.b16 %v4675, %v4668
    %v5453 = vpack.c.b16 %v4683, %v4676
    %v5454 = vpack.c.b16 %v4684, %v4677
    %v5455 = vpack.c.b16 %v4685, %v4678
    %v5456 = vpack.c.b16 %v4686, %v4679
    %v5457 = vpack.c.b16 %v4687, %v4680
    %v5458 = vpack.c.b16 %v4688, %v4681
    %v5459 = vpack.c.b16 %v4689, %v4682
    %v5460 = vpack.c.b16 %v4697, %v4690
    %v5461 = vpack.c.b16 %v4698, %v4691
    %v5462 = vpack.c.b16 %v4699, %v4692
    %v5463 = vpack.c.b16 %v4700, %v4693
    %v5464 = vpack.c.b16 %v4701, %v4694
    %v5465 = vpack.c.b16 %v4702, %v4695
    %v5466 = vpack.c.b16 %v4703, %v4696
    %v5467 = vpack.c.b16 %v4711, %v4704
    %v5468 = vpack.c.b16 %v4712, %v4705
    %v5469 = vpack.c.b16 %v4713, %v4706
    %v5470 = vpack.c.b16 %v4714, %v4707
    %v5471 = vpack.c.b16 %v4715, %v4708
    %v5472 = vpack.c.b16 %v4716, %v4709
    %v5473 = vpack.c.b16 %v4717, %v4710
    %v5474 = vpack.c.b16 %v4725, %v4718
    %v5475 = vpack.c.b16 %v4726, %v4719
    %v5476 = vpack.c.b16 %v4727, %v4720
    %v5477 = vpack.c.b16 %v4728, %v4721
    %v5478 = vpack.c.b16 %v4729, %v4722
    %v5479 = vpack.c.b16 %v4730, %v4723
    %v5480 = vpack.c.b16 %v4731, %v4724
    %v5481 = vpack.c.b16 %v4739, %v4732
    %v5482 = vpack.c.b16 %v4740, %v4733
    %v5483 = vpack.c.b16 %v4741, %v4734
    %v5484 = vpack.c.b16 %v4742, %v4735
    %v5485 = vpack.c.b16 %v4743, %v4736
    %v5486 = vpack.c.b16 %v4744, %v4737
    %v5487 = vpack.c.b16 %v4745, %v4738
    %v5488 = vpack.c.b16 %v4753, %v4746
    %v5489 = vpack.c.b16 %v4754, %v4747
    %v5490 = vpack.c.b16 %v4755, %v4748
    %v5491 = vpack.c.b16 %v4756, %v4749
    %v5492 = vpack.c.b16 %v4757, %v4750
    %v5493 = vpack.c.b16 %v4758, %v4751
    %v5494 = vpack.c.b16 %v4759, %v4752
    %v5495 = vpack.c.b16 %v4767, %v4760
    %v5496 = vpack.c.b16 %v4768, %v4761
    %v5497 = vpack.c.b16 %v4769, %v4762
    %v5498 = vpack.c.b16 %v4770, %v4763
    %v5499 = vpack.c.b16 %v4771, %v4764
    %v5500 = vpack.c.b16 %v4772, %v4765
    %v5501 = vpack.c.b16 %v4773, %v4766
    %v5502 = vpack.c.b16 %v4781, %v4774
    %v5503 = vpack.c.b16 %v4782, %v4775
    %v5504 = vpack.c.b16 %v4783, %v4776
    %v5505 = vpack.c.b16 %v4784, %v4777
    %v5506 = vpack.c.b16 %v4785, %v4778
    %v5507 = vpack.c.b16 %v4786, %v4779
    %v5508 = vpack.c.b16 %v4787, %v4780
    %v5509 = vpack.c.b16 %v4795, %v4788
    %v5510 = vpack.c.b16 %v4796, %v4789
    %v5511 = vpack.c.b16 %v4797, %v4790
    %v5512 = vpack.c.b16 %v4798, %v4791
    %v5513 = vpack.c.b16 %v4799, %v4792
    %v5514 = vpack.c.b16 %v4800, %v4793
    %v5515 = vpack.c.b16 %v4801, %v4794
    %v5516 = vpack.c.b16 %v4809, %v4802
    %v5517 = vpack.c.b16 %v4810, %v4803
    %v5518 = vpack.c.b16 %v4811, %v4804
    %v5519 = vpack.c.b16 %v4812, %v4805
    %v5520 = vpack.c.b16 %v4813, %v4806
    %v5521 = vpack.c.b16 %v4814, %v4807
    %v5522 = vpack.c.b16 %v4815, %v4808
    %v5523 = vpack.c.b16 %v4823, %v4816
    %v5524 = vpack.c.b16 %v4824, %v4817
    %v5525 = vpack.c.b16 %v4825, %v4818
    %v5526 = vpack.c.b16 %v4826, %v4819
    %v5527 = vpack.c.b16 %v4827, %v4820
    %v5528 = vpack.c.b16 %v4828, %v4821
    %v5529 = vpack.c.b16 %v4829, %v4822
    %v5530 = vpack.c.b16 %v4837, %v4830
    %v5531 = vpack.c.b16 %v4838, %v4831
    %v5532 = vpack.c.b16 %v4839, %v4832
    %v5533 = vpack.c.b16 %v4840, %v4833
    %v5534 = vpack.c.b16 %v4841, %v4834
    %v5535 = vpack.c.b16 %v4842, %v4835
    %v5536 = vpack.c.b16 %v4843, %v4836
    %v5537 = vpack.c.b16 %v4851, %v4844
    %v5538 = vpack.c.b16 %v4852, %v4845
    %v5539 = vpack.c.b16 %v4853, %v4846
    %v5540 = vpack.c.b16 %v4854, %v4847
    %v5541 = vpack.c.b16 %v4855, %v4848
    %v5542 = vpack.c.b16 %v4856, %v4849
    %v5543 = vpack.c.b16 %v4857, %v4850
    %v5544 = vpack.c.b16 %v4865, %v4858
    %v5545 = vpack.c.b16 %v4866, %v4859
    %v5546 = vpack.c.b16 %v4867, %v4860
    %v5547 = vpack.c.b16 %v4868, %v4861
    %v5548 = vpack.c.b16 %v4869, %v4862
    %v5549 = vpack.c.b16 %v4870, %v4863
    %v5550 = vpack.c.b16 %v4871, %v4864
    %v5551 = vpack.c.b16 %v4879, %v4872
    %v5552 = vpack.c.b16 %v4880, %v4873
    %v5553 = vpack.c.b16 %v4881, %v4874
    %v5554 = vpack.c.b16 %v4882, %v4875
    %v5555 = vpack.c.b16 %v4883, %v4876
    %v5556 = vpack.c.b16 %v4884, %v4877
    %v5557 = vpack.c.b16 %v4885, %v4878
    %v5558 = vpack.c.b16 %v4893, %v4886
    %v5559 = vpack.c.b16 %v4894, %v4887
    %v5560 = vpack.c.b16 %v4895, %v4888
    %v5561 = vpack.c.b16 %v4896, %v4889
    %v5562 = vpack.c.b16 %v4897, %v4890
    %v5563 = vpack.c.b16 %v4898, %v4891
    %v5564 = vpack.c.b16 %v4899, %v4892
    %v5565 = vpack.c.b16 %v4907, %v4900
    %v5566 = vpack.c.b16 %v4908, %v4901
    %v5567 = vpack.c.b16 %v4909, %v4902
    %v5568 = vpack.c.b16 %v4910, %v4903
    %v5569 = vpack.c.b16 %v4911, %v4904
    %v5570 = vpack.c.b16 %v4912, %v4905
    %v5571 = vpack.c.b16 %v4913, %v4906
    %v5572 = vpack.c.b16 %v4921, %v4914
    %v5573 = vpack.c.b16 %v4922, %v4915
    %v5574 = vpack.c.b16 %v4923, %v4916
    %v5575 = vpack.c.b16 %v4924, %v4917
    %v5576 = vpack.c.b16 %v4925, %v4918
    %v5577 = vpack.c.b16 %v4926, %v4919
    %v5578 = vpack.c.b16 %v4927, %v4920
    %v5579 = vpack.c.b16 %v4935, %v4928
    %v5580 = vpack.c.b16 %v4936, %v4929
    %v5581 = vpack.c.b16 %v4937, %v4930
    %v5582 = vpack.c.b16 %v4938, %v4931
    %v5583 = vpack.c.b16 %v4939, %v4932
    %v5584 = vpack.c.b16 %v4940, %v4933
    %v5585 = vpack.c.b16 %v4941, %v4934
    %v5586 = vpack.c.b16 %v4949, %v4942
    %v5587 = vpack.c.b16 %v4950, %v4943
    %v5588 = vpack.c.b16 %v4951, %v4944
    %v5589 = vpack.c.b16 %v4952, %v4945
    %v5590 = vpack.c.b16 %v4953, %v4946
    %v5591 = vpack.c.b16 %v4954, %v4947
    %v5592 = vpack.c.b16 %v4955, %v4948
    %v5593 = vpack.c.b16 %v4963, %v4956
    %v5594 = vpack.c.b16 %v4964, %v4957
    %v5595 = vpack.c.b16 %v4965, %v4958
    %v5596 = vpack.c.b16 %v4966, %v4959
    %v5597 = vpack.c.b16 %v4967, %v4960
    %v5598 = vpack.c.b16 %v4968, %v4961
    %v5599 = vpack.c.b16 %v4969, %v4962
    %v5600 = vpack.c.b16 %v4977, %v4970
    %v5601 = vpack.c.b16 %v4978, %v4971
    %v5602 = vpack.c.b16 %v4979, %v4972
    %v5603 = vpack.c.b16 %v4980, %v4973
    %v5604 = vpack.c.b16 %v4981, %v4974
    %v5605 = vpack.c.b16 %v4982, %v4975
    %v5606 = vpack.c.b16 %v4983, %v4976
    %v5607 = vpack.c.b16 %v4991, %v4984
    %v5608 = vpack.c.b16 %v4992, %v4985
    %v5609 = vpack.c.b16 %v4993, %v4986
    %v5610 = vpack.c.b16 %v4994, %v4987
    %v5611 = vpack.c.b16 %v4995, %v4988
    %v5612 = vpack.c.b16 %v4996, %v4989
    %v5613 = vpack.c.b16 %v4997, %v4990
    %v5614 = vpack.c.b16 %v5005, %v4998
    %v5615 = vpack.c.b16 %v5006, %v4999
    %v5616 = vpack.c.b16 %v5007, %v5000
    %v5617 = vpack.c.b16 %v5008, %v5001
    %v5618 = vpack.c.b16 %v5009, %v5002
    %v5619 = vpack.c.b16 %v5010, %v5003
    %v5620 = vpack.c.b16 %v5011, %v5004
    %v5621 = vpack.c.b16 %v5019, %v5012
    %v5622 = vpack.c.b16 %v5020, %v5013
    %v5623 = vpack.c.b16 %v5021, %v5014
    %v5624 = vpack.c.b16 %v5022, %v5015
    %v5625 = vpack.c.b16 %v5023, %v5016
    %v5626 = vpack.c.b16 %v5024, %v5017
    %v5627 = vpack.c.b16 %v5025, %v5018
    %v5628 = vpack.c.b16 %v5033, %v5026
    %v5629 = vpack.c.b16 %v5034, %v5027
    %v5630 = vpack.c.b16 %v5035, %v5028
    %v5631 = vpack.c.b16 %v5036, %v5029
    %v5632 = vpack.c.b16 %v5037, %v5030
    %v5633 = vpack.c.b16 %v5038, %v5031
    %v5634 = vpack.c.b16 %v5039, %v5032
    %v5635 = vpack.c.b16 %v5047, %v5040
    %v5636 = vpack.c.b16 %v5048, %v5041
    %v5637 = vpack.c.b16 %v5049, %v5042
    %v5638 = vpack.c.b16 %v5050, %v5043
    %v5639 = vpack.c.b16 %v5051, %v5044
    %v5640 = vpack.c.b16 %v5052, %v5045
    %v5641 = vpack.c.b16 %v5053, %v5046
    %v5642 = vpack.c.b16 %v5061, %v5054
    %v5643 = vpack.c.b16 %v5062, %v5055
    %v5644 = vpack.c.b16 %v5063, %v5056
    %v5645 = vpack.c.b16 %v5064, %v5057
    %v5646 = vpack.c.b16 %v5065, %v5058
    %v5647 = vpack.c.b16 %v5066, %v5059
    %v5648 = vpack.c.b16 %v5067, %v5060
    %v5649 = vpack.c.b16 %v5075, %v5068
    %v5650 = vpack.c.b16 %v5076, %v5069
    %v5651 = vpack.c.b16 %v5077, %v5070
    %v5652 = vpack.c.b16 %v5078, %v5071
    %v5653 = vpack.c.b16 %v5079, %v5072
    %v5654 = vpack.c.b16 %v5080, %v5073
    %v5655 = vpack.c.b16 %v5081, %v5074
    %v5656 = vpack.c.b16 %v5089, %v5082
    %v5657 = vpack.c.b16 %v5090, %v5083
    %v5658 = vpack.c.b16 %v5091, %v5084
    %v5659 = vpack.c.b16 %v5092, %v5085
    %v5660 = vpack.c.b16 %v5093, %v5086
    %v5661 = vpack.c.b16 %v5094, %v5087
    %v5662 = vpack.c.b16 %v5095, %v5088
    %v5663 = vpack.c.b16 %v5103, %v5096
    %v5664 = vpack.c.b16 %v5104, %v5097
    %v5665 = vpack.c.b16 %v5105, %v5098
    %v5666 = vpack.c.b16 %v5106, %v5099
    %v5667 = vpack.c.b16 %v5107, %v5100
    %v5668 = vpack.c.b16 %v5108, %v5101
    %v5669 = vpack.c.b16 %v5109, %v5102
    %v5670 = vpack.c.b16 %v5117, %v5110
    %v5671 = vpack.c.b16 %v5118, %v5111
    %v5672 = vpack.c.b16 %v5119, %v5112
    %v5673 = vpack.c.b16 %v5120, %v5113
    %v5674 = vpack.c.b16 %v5121, %v5114
    %v5675 = vpack.c.b16 %v5122, %v5115
    %v5676 = vpack.c.b16 %v5123, %v5116
    %v5677 = vpack.c.b16 %v5131, %v5124
    %v5678 = vpack.c.b16 %v5132, %v5125
    %v5679 = vpack.c.b16 %v5133, %v5126
    %v5680 = vpack.c.b16 %v5134, %v5127
    %v5681 = vpack.c.b16 %v5135, %v5128
    %v5682 = vpack.c.b16 %v5136, %v5129
    %v5683 = vpack.c.b16 %v5137, %v5130
    %v5684 = vpack.c.b16 %v5145, %v5138
    %v5685 = vpack.c.b16 %v5146, %v5139
    %v5686 = vpack.c.b16 %v5147, %v5140
    %v5687 = vpack.c.b16 %v5148, %v5141
    %v5688 = vpack.c.b16 %v5149, %v5142
    %v5689 = vpack.c.b16 %v5150, %v5143
    %v5690 = vpack.c.b16 %v5151, %v5144
    %v5691 = vpack.c.b16 %v5159, %v5152
    %v5692 = vpack.c.b16 %v5160, %v5153
    %v5693 = vpack.c.b16 %v5161, %v5154
    %v5694 = vpack.c.b16 %v5162, %v5155
    %v5695 = vpack.c.b16 %v5163, %v5156
    %v5696 = vpack.c.b16 %v5164, %v5157
    %v5697 = vpack.c.b16 %v5165, %v5158
    %v5698 = vpack.c.b16 %v5173, %v5166
    %v5699 = vpack.c.b16 %v5174, %v5167
    %v5700 = vpack.c.b16 %v5175, %v5168
    %v5701 = vpack.c.b16 %v5176, %v5169
    %v5702 = vpack.c.b16 %v5177, %v5170
    %v5703 = vpack.c.b16 %v5178, %v5171
    %v5704 = vpack.c.b16 %v5179, %v5172
    %v5705 = vpack.c.b16 %v5187, %v5180
    %v5706 = vpack.c.b16 %v5188, %v5181
    %v5707 = vpack.c.b16 %v5189, %v5182
    %v5708 = vpack.c.b16 %v5190, %v5183
    %v5709 = vpack.c.b16 %v5191, %v5184
    %v5710 = vpack.c.b16 %v5192, %v5185
    %v5711 = vpack.c.b16 %v5193, %v5186
    %v5712 = vpack.c.b16 %v5201, %v5194
    %v5713 = vpack.c.b16 %v5202, %v5195
    %v5714 = vpack.c.b16 %v5203, %v5196
    %v5715 = vpack.c.b16 %v5204, %v5197
    %v5716 = vpack.c.b16 %v5205, %v5198
    %v5717 = vpack.c.b16 %v5206, %v5199
    %v5718 = vpack.c.b16 %v5207, %v5200
    %v5719 = vpack.c.b16 %v5215, %v5208
    %v5720 = vpack.c.b16 %v5216, %v5209
    %v5721 = vpack.c.b16 %v5217, %v5210
    %v5722 = vpack.c.b16 %v5218, %v5211
    %v5723 = vpack.c.b16 %v5219, %v5212
    %v5724 = vpack.c.b16 %v5220, %v5213
    %v5725 = vpack.c.b16 %v5221, %v5214
    %v5726 = vpack.c.b16 %v5229, %v5222
    %v5727 = vpack.c.b16 %v5230, %v5223
    %v5728 = vpack.c.b16 %v5231, %v5224
    %v5729 = vpack.c.b16 %v5232, %v5225
    %v5730 = vpack.c.b16 %v5233, %v5226
    %v5731 = vpack.c.b16 %v5234, %v5227
    %v5732 = vpack.c.b16 %v5235, %v5228
    %v5733 = vpack.c.b16 %v5243, %v5236
    %v5734 = vpack.c.b16 %v5244, %v5237
    %v5735 = vpack.c.b16 %v5245, %v5238
    %v5736 = vpack.c.b16 %v5246, %v5239
    %v5737 = vpack.c.b16 %v5247, %v5240
    %v5738 = vpack.c.b16 %v5248, %v5241
    %v5739 = vpack.c.b16 %v5249, %v5242
    %v5740 = vpack.c.b16 %v5257, %v5250
    %v5741 = vpack.c.b16 %v5258, %v5251
    %v5742 = vpack.c.b16 %v5259, %v5252
    %v5743 = vpack.c.b16 %v5260, %v5253
    %v5744 = vpack.c.b16 %v5261, %v5254
    %v5745 = vpack.c.b16 %v5262, %v5255
    %v5746 = vpack.c.b16 %v5263, %v5256
    %v5747 = vpack.c.b16 %v5271, %v5264
    %v5748 = vpack.c.b16 %v5272, %v5265
    %v5749 = vpack.c.b16 %v5273, %v5266
    %v5750 = vpack.c.b16 %v5274, %v5267
    %v5751 = vpack.c.b16 %v5275, %v5268
    %v5752 = vpack.c.b16 %v5276, %v5269
    %v5753 = vpack.c.b16 %v5277, %v5270
    %v5754 = vpack.c.b16 %v5285, %v5278
    %v5755 = vpack.c.b16 %v5286, %v5279
    %v5756 = vpack.c.b16 %v5287, %v5280
    %v5757 = vpack.c.b16 %v5288, %v5281
    %v5758 = vpack.c.b16 %v5289, %v5282
    %v5759 = vpack.c.b16 %v5290, %v5283
    %v5760 = vpack.c.b16 %v5291, %v5284
    %v5761 = vpack.c.b16 %v5299, %v5292
    %v5762 = vpack.c.b16 %v5300, %v5293
    %v5763 = vpack.c.b16 %v5301, %v5294
    %v5764 = vpack.c.b16 %v5302, %v5295
    %v5765 = vpack.c.b16 %v5303, %v5296
    %v5766 = vpack.c.b16 %v5304, %v5297
    %v5767 = vpack.c.b16 %v5305, %v5298
    %v5768 = vpack.c.b16 %v5313, %v5306
    %v5769 = vpack.c.b16 %v5314, %v5307
    %v5770 = vpack.c.b16 %v5315, %v5308
    %v5771 = vpack.c.b16 %v5316, %v5309
    %v5772 = vpack.c.b16 %v5317, %v5310
    %v5773 = vpack.c.b16 %v5318, %v5311
    %v5774 = vpack.c.b16 %v5319, %v5312
    %v5775 = vpack.c.b16 %v5327, %v5320
    %v5776 = vpack.c.b16 %v5328, %v5321
    %v5777 = vpack.c.b16 %v5329, %v5322
    %v5778 = vpack.c.b16 %v5330, %v5323
    %v5779 = vpack.c.b16 %v5331, %v5324
    %v5780 = vpack.c.b16 %v5332, %v5325
    %v5781 = vpack.c.b16 %v5333, %v5326
    %6230 = vmatprep.subr.bf16.mxu0 %v5384
    %6231 = vmatpush1.bf16.msra.mxu0 %v5383
    %6232 = vmatprep.subr.bf16.mxu0 %v5377
    %6233 = vmatpush1.bf16.msra.mxu0 %v5376
    %6234 = vmatprep.subr.bf16.mxu0 %v5370
    %6235 = vmatpush1.bf16.msra.mxu0 %v5369
    %6236 = vmatprep.subr.bf16.mxu0 %v5363
    %6237 = vmatpush1.bf16.msra.mxu0 %v5362
    %6238 = vmatprep.subr.bf16.mxu0 %v5356
    %6239 = vmatpush1.bf16.msra.mxu0 %v5355
    %6240 = vmatprep.subr.bf16.mxu0 %v5349
    %6241 = vmatpush1.bf16.msra.mxu0 %v5348
    %6242 = vmatprep.subr.bf16.mxu0 %v5342
    %6243 = vmatpush1.bf16.msra.mxu0 %v5341
    %6244 = vmatprep.subr.bf16.mxu0 %v5335
    %6245 = vmatpush1.bf16.msra.mxu0 %v5334
    %6246 = vmatprep.subr.bf16.mxu0 %v5440
    %6247 = vmatpush2.bf16.msra.mxu0 %v5439
    %6248 = vmatprep.subr.bf16.mxu0 %v5433
    %6249 = vmatpush2.bf16.msra.mxu0 %v5432
    %6250 = vmatprep.subr.bf16.mxu0 %v5426
    %6251 = vmatpush2.bf16.msra.mxu0 %v5425
    %6252 = vmatprep.subr.bf16.mxu0 %v5419
    %6253 = vmatpush2.bf16.msra.mxu0 %v5418
    %6254 = vmatprep.subr.bf16.mxu0 %v5412
    %6255 = vmatpush2.bf16.msra.mxu0 %v5411
    %6256 = vmatprep.subr.bf16.mxu0 %v5405
    %6257 = vmatpush2.bf16.msra.mxu0 %v5404
    %6258 = vmatprep.subr.bf16.mxu0 %v5398
    %6259 = vmatpush2.bf16.msra.mxu0 %v5397
    %6260 = vmatprep.subr.bf16.mxu0 %v5391
    %6261 = vmatpush2.bf16.msra.mxu0 %v5390
    %6262 = vmatprep.mubr.bf16.mxu0 %v3370
    %6263 = vmatmul.mubr.bf16.gmra.mxu0 %v3369
    %v6264 = vpop.f32.mrf.mxu0
    %v6265 = vadd.f32 %v3894, %v6264
    %v6266 = vpop.f32.mrf.mxu0
    %v6267 = vadd.f32 %v3898, %v6266
    %v6268 = vpop.f32.mrf.mxu0
    %v6269 = vpop.f32.mrf.mxu0
    %6270 = vdwg.mxu0
    %6271 = vmatprep.subr.bf16.mxu0 %v5496
    %6272 = vmatpush1.bf16.msra.mxu0 %v5495
    %6273 = vmatprep.subr.bf16.mxu0 %v5489
    %6274 = vmatpush1.bf16.msra.mxu0 %v5488
    %6275 = vmatprep.subr.bf16.mxu0 %v5482
    %6276 = vmatpush1.bf16.msra.mxu0 %v5481
    %6277 = vmatprep.subr.bf16.mxu0 %v5475
    %6278 = vmatpush1.bf16.msra.mxu0 %v5474
    %6279 = vmatprep.subr.bf16.mxu0 %v5468
    %6280 = vmatpush1.bf16.msra.mxu0 %v5467
    %6281 = vmatprep.subr.bf16.mxu0 %v5461
    %6282 = vmatpush1.bf16.msra.mxu0 %v5460
    %6283 = vmatprep.subr.bf16.mxu0 %v5454
    %6284 = vmatpush1.bf16.msra.mxu0 %v5453
    %6285 = vmatprep.subr.bf16.mxu0 %v5447
    %6286 = vmatpush1.bf16.msra.mxu0 %v5446
    %6287 = vmatprep.subr.bf16.mxu0 %v5552
    %6288 = vmatpush2.bf16.msra.mxu0 %v5551
    %6289 = vmatprep.subr.bf16.mxu0 %v5545
    %6290 = vmatpush2.bf16.msra.mxu0 %v5544
    %6291 = vmatprep.subr.bf16.mxu0 %v5538
    %6292 = vmatpush2.bf16.msra.mxu0 %v5537
    %6293 = vmatprep.subr.bf16.mxu0 %v5531
    %6294 = vmatpush2.bf16.msra.mxu0 %v5530
    %6295 = vmatprep.subr.bf16.mxu0 %v5524
    %6296 = vmatpush2.bf16.msra.mxu0 %v5523
    %6297 = vmatprep.subr.bf16.mxu0 %v5517
    %6298 = vmatpush2.bf16.msra.mxu0 %v5516
    %6299 = vmatprep.subr.bf16.mxu0 %v5510
    %6300 = vmatpush2.bf16.msra.mxu0 %v5509
    %6301 = vmatprep.subr.bf16.mxu0 %v5503
    %6302 = vmatpush2.bf16.msra.mxu0 %v5502
    %6303 = vmatprep.mubr.bf16.mxu0 %v3372
    %6304 = vmatmul.mubr.bf16.gmra.mxu0 %v3371
    %v6305 = vpop.f32.mrf.mxu0
    %v6306 = vadd.f32 %v6265, %v6305
    %v6307 = vpop.f32.mrf.mxu0
    %v6308 = vadd.f32 %v6267, %v6307
    %v6309 = vpop.f32.mrf.mxu0
    %v6310 = vpop.f32.mrf.mxu0
    %6311 = vdwg.mxu0
    %6312 = vmatprep.subr.bf16.mxu0 %v5608
    %6313 = vmatpush1.bf16.msra.mxu0 %v5607
    %6314 = vmatprep.subr.bf16.mxu0 %v5601
    %6315 = vmatpush1.bf16.msra.mxu0 %v5600
    %6316 = vmatprep.subr.bf16.mxu0 %v5594
    %6317 = vmatpush1.bf16.msra.mxu0 %v5593
    %6318 = vmatprep.subr.bf16.mxu0 %v5587
    %6319 = vmatpush1.bf16.msra.mxu0 %v5586
    %6320 = vmatprep.subr.bf16.mxu0 %v5580
    %6321 = vmatpush1.bf16.msra.mxu0 %v5579
    %6322 = vmatprep.subr.bf16.mxu0 %v5573
    %6323 = vmatpush1.bf16.msra.mxu0 %v5572
    %6324 = vmatprep.subr.bf16.mxu0 %v5566
    %6325 = vmatpush1.bf16.msra.mxu0 %v5565
    %6326 = vmatprep.subr.bf16.mxu0 %v5559
    %6327 = vmatpush1.bf16.msra.mxu0 %v5558
    %6328 = vmatprep.subr.bf16.mxu0 %v5664
    %6329 = vmatpush2.bf16.msra.mxu0 %v5663
    %6330 = vmatprep.subr.bf16.mxu0 %v5657
    %6331 = vmatpush2.bf16.msra.mxu0 %v5656
    %6332 = vmatprep.subr.bf16.mxu0 %v5650
    %6333 = vmatpush2.bf16.msra.mxu0 %v5649
    %6334 = vmatprep.subr.bf16.mxu0 %v5643
    %6335 = vmatpush2.bf16.msra.mxu0 %v5642
    %6336 = vmatprep.subr.bf16.mxu0 %v5636
    %6337 = vmatpush2.bf16.msra.mxu0 %v5635
    %6338 = vmatprep.subr.bf16.mxu0 %v5629
    %6339 = vmatpush2.bf16.msra.mxu0 %v5628
    %6340 = vmatprep.subr.bf16.mxu0 %v5622
    %6341 = vmatpush2.bf16.msra.mxu0 %v5621
    %6342 = vmatprep.subr.bf16.mxu0 %v5615
    %6343 = vmatpush2.bf16.msra.mxu0 %v5614
    %6344 = vmatprep.mubr.bf16.mxu0 %v3374
    %6345 = vmatmul.mubr.bf16.gmra.mxu0 %v3373
    %v6346 = vpop.f32.mrf.mxu0
    %v6347 = vadd.f32 %v6306, %v6346
    %v6348 = vpop.f32.mrf.mxu0
    %v6349 = vadd.f32 %v6308, %v6348
    %v6350 = vpop.f32.mrf.mxu0
    %v6351 = vpop.f32.mrf.mxu0
    %6352 = vdwg.mxu0
    %6353 = vmatprep.subr.bf16.mxu0 %v5720
    %6354 = vmatpush1.bf16.msra.mxu0 %v5719
    %6355 = vmatprep.subr.bf16.mxu0 %v5713
    %6356 = vmatpush1.bf16.msra.mxu0 %v5712
    %6357 = vmatprep.subr.bf16.mxu0 %v5706
    %6358 = vmatpush1.bf16.msra.mxu0 %v5705
    %6359 = vmatprep.subr.bf16.mxu0 %v5699
    %6360 = vmatpush1.bf16.msra.mxu0 %v5698
    %6361 = vmatprep.subr.bf16.mxu0 %v5692
    %6362 = vmatpush1.bf16.msra.mxu0 %v5691
    %6363 = vmatprep.subr.bf16.mxu0 %v5685
    %6364 = vmatpush1.bf16.msra.mxu0 %v5684
    %6365 = vmatprep.subr.bf16.mxu0 %v5678
    %6366 = vmatpush1.bf16.msra.mxu0 %v5677
    %6367 = vmatprep.subr.bf16.mxu0 %v5671
    %6368 = vmatpush1.bf16.msra.mxu0 %v5670
    %6369 = vmatprep.subr.bf16.mxu0 %v5776
    %6370 = vmatpush2.bf16.msra.mxu0 %v5775
    %6371 = vmatprep.subr.bf16.mxu0 %v5769
    %6372 = vmatpush2.bf16.msra.mxu0 %v5768
    %6373 = vmatprep.subr.bf16.mxu0 %v5762
    %6374 = vmatpush2.bf16.msra.mxu0 %v5761
    %6375 = vmatprep.subr.bf16.mxu0 %v5755
    %6376 = vmatpush2.bf16.msra.mxu0 %v5754
    %6377 = vmatprep.subr.bf16.mxu0 %v5748
    %6378 = vmatpush2.bf16.msra.mxu0 %v5747
    %6379 = vmatprep.subr.bf16.mxu0 %v5741
    %6380 = vmatpush2.bf16.msra.mxu0 %v5740
    %6381 = vmatprep.subr.bf16.mxu0 %v5734
    %6382 = vmatpush2.bf16.msra.mxu0 %v5733
    %6383 = vmatprep.subr.bf16.mxu0 %v5727
    %6384 = vmatpush2.bf16.msra.mxu0 %v5726
    %6385 = vmatprep.mubr.bf16.mxu0 %v3376
    %6386 = vmatmul.mubr.bf16.gmra.mxu0 %v3375
    %v6387 = vpop.f32.mrf.mxu0
    %v6388 = vadd.f32 %v6347, %v6387
    %v6389 = vpop.f32.mrf.mxu0
    %v6390 = vadd.f32 %v6349, %v6389
    %v6391 = vpop.f32.mrf.mxu0
    %v6392 = vpop.f32.mrf.mxu0
    %6393 = vdwg.mxu0
    %6394 = vmatprep.subr.bf16.mxu0 %v5386
    %6395 = vmatpush1.bf16.msra.mxu0 %v5385
    %6396 = vmatprep.subr.bf16.mxu0 %v5379
    %6397 = vmatpush1.bf16.msra.mxu0 %v5378
    %6398 = vmatprep.subr.bf16.mxu0 %v5372
    %6399 = vmatpush1.bf16.msra.mxu0 %v5371
    %6400 = vmatprep.subr.bf16.mxu0 %v5365
    %6401 = vmatpush1.bf16.msra.mxu0 %v5364
    %6402 = vmatprep.subr.bf16.mxu0 %v5358
    %6403 = vmatpush1.bf16.msra.mxu0 %v5357
    %6404 = vmatprep.subr.bf16.mxu0 %v5351
    %6405 = vmatpush1.bf16.msra.mxu0 %v5350
    %6406 = vmatprep.subr.bf16.mxu0 %v5344
    %6407 = vmatpush1.bf16.msra.mxu0 %v5343
    %6408 = vmatprep.subr.bf16.mxu0 %v5337
    %6409 = vmatpush1.bf16.msra.mxu0 %v5336
    %6410 = vmatprep.subr.bf16.mxu0 %v5442
    %6411 = vmatpush2.bf16.msra.mxu0 %v5441
    %6412 = vmatprep.subr.bf16.mxu0 %v5435
    %6413 = vmatpush2.bf16.msra.mxu0 %v5434
    %6414 = vmatprep.subr.bf16.mxu0 %v5428
    %6415 = vmatpush2.bf16.msra.mxu0 %v5427
    %6416 = vmatprep.subr.bf16.mxu0 %v5421
    %6417 = vmatpush2.bf16.msra.mxu0 %v5420
    %6418 = vmatprep.subr.bf16.mxu0 %v5414
    %6419 = vmatpush2.bf16.msra.mxu0 %v5413
    %6420 = vmatprep.subr.bf16.mxu0 %v5407
    %6421 = vmatpush2.bf16.msra.mxu0 %v5406
    %6422 = vmatprep.subr.bf16.mxu0 %v5400
    %6423 = vmatpush2.bf16.msra.mxu0 %v5399
    %6424 = vmatprep.subr.bf16.mxu0 %v5393
    %6425 = vmatpush2.bf16.msra.mxu0 %v5392
    %6426 = vmatprep.mubr.bf16.mxu0 %v3370
    %6427 = vmatmul.mubr.bf16.gmra.mxu0 %v3369
    %v6428 = vpop.f32.mrf.mxu0
    %v6429 = vadd.f32 %v3902, %v6428
    %v6430 = vpop.f32.mrf.mxu0
    %v6431 = vadd.f32 %v3906, %v6430
    %v6432 = vpop.f32.mrf.mxu0
    %v6433 = vpop.f32.mrf.mxu0
    %6434 = vdwg.mxu0
    %6435 = vmatprep.subr.bf16.mxu0 %v5498
    %6436 = vmatpush1.bf16.msra.mxu0 %v5497
    %6437 = vmatprep.subr.bf16.mxu0 %v5491
    %6438 = vmatpush1.bf16.msra.mxu0 %v5490
    %6439 = vmatprep.subr.bf16.mxu0 %v5484
    %6440 = vmatpush1.bf16.msra.mxu0 %v5483
    %6441 = vmatprep.subr.bf16.mxu0 %v5477
    %6442 = vmatpush1.bf16.msra.mxu0 %v5476
    %6443 = vmatprep.subr.bf16.mxu0 %v5470
    %6444 = vmatpush1.bf16.msra.mxu0 %v5469
    %6445 = vmatprep.subr.bf16.mxu0 %v5463
    %6446 = vmatpush1.bf16.msra.mxu0 %v5462
    %6447 = vmatprep.subr.bf16.mxu0 %v5456
    %6448 = vmatpush1.bf16.msra.mxu0 %v5455
    %6449 = vmatprep.subr.bf16.mxu0 %v5449
    %6450 = vmatpush1.bf16.msra.mxu0 %v5448
    %6451 = vmatprep.subr.bf16.mxu0 %v5554
    %6452 = vmatpush2.bf16.msra.mxu0 %v5553
    %6453 = vmatprep.subr.bf16.mxu0 %v5547
    %6454 = vmatpush2.bf16.msra.mxu0 %v5546
    %6455 = vmatprep.subr.bf16.mxu0 %v5540
    %6456 = vmatpush2.bf16.msra.mxu0 %v5539
    %6457 = vmatprep.subr.bf16.mxu0 %v5533
    %6458 = vmatpush2.bf16.msra.mxu0 %v5532
    %6459 = vmatprep.subr.bf16.mxu0 %v5526
    %6460 = vmatpush2.bf16.msra.mxu0 %v5525
    %6461 = vmatprep.subr.bf16.mxu0 %v5519
    %6462 = vmatpush2.bf16.msra.mxu0 %v5518
    %6463 = vmatprep.subr.bf16.mxu0 %v5512
    %6464 = vmatpush2.bf16.msra.mxu0 %v5511
    %6465 = vmatprep.subr.bf16.mxu0 %v5505
    %6466 = vmatpush2.bf16.msra.mxu0 %v5504
    %6467 = vmatprep.mubr.bf16.mxu0 %v3372
    %6468 = vmatmul.mubr.bf16.gmra.mxu0 %v3371
    %v6469 = vpop.f32.mrf.mxu0
    %v6470 = vadd.f32 %v6429, %v6469
    %v6471 = vpop.f32.mrf.mxu0
    %v6472 = vadd.f32 %v6431, %v6471
    %v6473 = vpop.f32.mrf.mxu0
    %v6474 = vpop.f32.mrf.mxu0
    %6475 = vdwg.mxu0
    %6476 = vmatprep.subr.bf16.mxu0 %v5610
    %6477 = vmatpush1.bf16.msra.mxu0 %v5609
    %6478 = vmatprep.subr.bf16.mxu0 %v5603
    %6479 = vmatpush1.bf16.msra.mxu0 %v5602
    %6480 = vmatprep.subr.bf16.mxu0 %v5596
    %6481 = vmatpush1.bf16.msra.mxu0 %v5595
    %6482 = vmatprep.subr.bf16.mxu0 %v5589
    %6483 = vmatpush1.bf16.msra.mxu0 %v5588
    %6484 = vmatprep.subr.bf16.mxu0 %v5582
    %6485 = vmatpush1.bf16.msra.mxu0 %v5581
    %6486 = vmatprep.subr.bf16.mxu0 %v5575
    %6487 = vmatpush1.bf16.msra.mxu0 %v5574
    %6488 = vmatprep.subr.bf16.mxu0 %v5568
    %6489 = vmatpush1.bf16.msra.mxu0 %v5567
    %6490 = vmatprep.subr.bf16.mxu0 %v5561
    %6491 = vmatpush1.bf16.msra.mxu0 %v5560
    %6492 = vmatprep.subr.bf16.mxu0 %v5666
    %6493 = vmatpush2.bf16.msra.mxu0 %v5665
    %6494 = vmatprep.subr.bf16.mxu0 %v5659
    %6495 = vmatpush2.bf16.msra.mxu0 %v5658
    %6496 = vmatprep.subr.bf16.mxu0 %v5652
    %6497 = vmatpush2.bf16.msra.mxu0 %v5651
    %6498 = vmatprep.subr.bf16.mxu0 %v5645
    %6499 = vmatpush2.bf16.msra.mxu0 %v5644
    %6500 = vmatprep.subr.bf16.mxu0 %v5638
    %6501 = vmatpush2.bf16.msra.mxu0 %v5637
    %6502 = vmatprep.subr.bf16.mxu0 %v5631
    %6503 = vmatpush2.bf16.msra.mxu0 %v5630
    %6504 = vmatprep.subr.bf16.mxu0 %v5624
    %6505 = vmatpush2.bf16.msra.mxu0 %v5623
    %6506 = vmatprep.subr.bf16.mxu0 %v5617
    %6507 = vmatpush2.bf16.msra.mxu0 %v5616
    %6508 = vmatprep.mubr.bf16.mxu0 %v3374
    %6509 = vmatmul.mubr.bf16.gmra.mxu0 %v3373
    %v6510 = vpop.f32.mrf.mxu0
    %v6511 = vadd.f32 %v6470, %v6510
    %v6512 = vpop.f32.mrf.mxu0
    %v6513 = vadd.f32 %v6472, %v6512
    %v6514 = vpop.f32.mrf.mxu0
    %v6515 = vpop.f32.mrf.mxu0
    %6516 = vdwg.mxu0
    %6517 = vmatprep.subr.bf16.mxu0 %v5722
    %6518 = vmatpush1.bf16.msra.mxu0 %v5721
    %6519 = vmatprep.subr.bf16.mxu0 %v5715
    %6520 = vmatpush1.bf16.msra.mxu0 %v5714
    %6521 = vmatprep.subr.bf16.mxu0 %v5708
    %6522 = vmatpush1.bf16.msra.mxu0 %v5707
    %6523 = vmatprep.subr.bf16.mxu0 %v5701
    %6524 = vmatpush1.bf16.msra.mxu0 %v5700
    %6525 = vmatprep.subr.bf16.mxu0 %v5694
    %6526 = vmatpush1.bf16.msra.mxu0 %v5693
    %6527 = vmatprep.subr.bf16.mxu0 %v5687
    %6528 = vmatpush1.bf16.msra.mxu0 %v5686
    %6529 = vmatprep.subr.bf16.mxu0 %v5680
    %6530 = vmatpush1.bf16.msra.mxu0 %v5679
    %6531 = vmatprep.subr.bf16.mxu0 %v5673
    %6532 = vmatpush1.bf16.msra.mxu0 %v5672
    %6533 = vmatprep.subr.bf16.mxu0 %v5778
    %6534 = vmatpush2.bf16.msra.mxu0 %v5777
    %6535 = vmatprep.subr.bf16.mxu0 %v5771
    %6536 = vmatpush2.bf16.msra.mxu0 %v5770
    %6537 = vmatprep.subr.bf16.mxu0 %v5764
    %6538 = vmatpush2.bf16.msra.mxu0 %v5763
    %6539 = vmatprep.subr.bf16.mxu0 %v5757
    %6540 = vmatpush2.bf16.msra.mxu0 %v5756
    %6541 = vmatprep.subr.bf16.mxu0 %v5750
    %6542 = vmatpush2.bf16.msra.mxu0 %v5749
    %6543 = vmatprep.subr.bf16.mxu0 %v5743
    %6544 = vmatpush2.bf16.msra.mxu0 %v5742
    %6545 = vmatprep.subr.bf16.mxu0 %v5736
    %6546 = vmatpush2.bf16.msra.mxu0 %v5735
    %6547 = vmatprep.subr.bf16.mxu0 %v5729
    %6548 = vmatpush2.bf16.msra.mxu0 %v5728
    %6549 = vmatprep.mubr.bf16.mxu0 %v3376
    %6550 = vmatmul.mubr.bf16.gmra.mxu0 %v3375
    %v6551 = vpop.f32.mrf.mxu0
    %v6552 = vadd.f32 %v6511, %v6551
    %v6553 = vpop.f32.mrf.mxu0
    %v6554 = vadd.f32 %v6513, %v6553
    %v6555 = vpop.f32.mrf.mxu0
    %v6556 = vpop.f32.mrf.mxu0
    %6557 = vdwg.mxu0
    %6558 = vmatprep.subr.bf16.mxu0 %v5388
    %6559 = vmatpush1.bf16.msra.mxu0 %v5387
    %6560 = vmatprep.subr.bf16.mxu0 %v5381
    %6561 = vmatpush1.bf16.msra.mxu0 %v5380
    %6562 = vmatprep.subr.bf16.mxu0 %v5374
    %6563 = vmatpush1.bf16.msra.mxu0 %v5373
    %6564 = vmatprep.subr.bf16.mxu0 %v5367
    %6565 = vmatpush1.bf16.msra.mxu0 %v5366
    %6566 = vmatprep.subr.bf16.mxu0 %v5360
    %6567 = vmatpush1.bf16.msra.mxu0 %v5359
    %6568 = vmatprep.subr.bf16.mxu0 %v5353
    %6569 = vmatpush1.bf16.msra.mxu0 %v5352
    %6570 = vmatprep.subr.bf16.mxu0 %v5346
    %6571 = vmatpush1.bf16.msra.mxu0 %v5345
    %6572 = vmatprep.subr.bf16.mxu0 %v5339
    %6573 = vmatpush1.bf16.msra.mxu0 %v5338
    %6574 = vmatprep.subr.bf16.mxu0 %v5444
    %6575 = vmatpush2.bf16.msra.mxu0 %v5443
    %6576 = vmatprep.subr.bf16.mxu0 %v5437
    %6577 = vmatpush2.bf16.msra.mxu0 %v5436
    %6578 = vmatprep.subr.bf16.mxu0 %v5430
    %6579 = vmatpush2.bf16.msra.mxu0 %v5429
    %6580 = vmatprep.subr.bf16.mxu0 %v5423
    %6581 = vmatpush2.bf16.msra.mxu0 %v5422
    %6582 = vmatprep.subr.bf16.mxu0 %v5416
    %6583 = vmatpush2.bf16.msra.mxu0 %v5415
    %6584 = vmatprep.subr.bf16.mxu0 %v5409
    %6585 = vmatpush2.bf16.msra.mxu0 %v5408
    %6586 = vmatprep.subr.bf16.mxu0 %v5402
    %6587 = vmatpush2.bf16.msra.mxu0 %v5401
    %6588 = vmatprep.subr.bf16.mxu0 %v5395
    %6589 = vmatpush2.bf16.msra.mxu0 %v5394
    %6590 = vmatprep.mubr.bf16.mxu0 %v3370
    %6591 = vmatmul.mubr.bf16.gmra.mxu0 %v3369
    %v6592 = vpop.f32.mrf.mxu0
    %v6593 = vadd.f32 %v3910, %v6592
    %v6594 = vpop.f32.mrf.mxu0
    %v6595 = vadd.f32 %v3914, %v6594
    %v6596 = vpop.f32.mrf.mxu0
    %v6597 = vpop.f32.mrf.mxu0
    %6598 = vdwg.mxu0
    %6599 = vmatprep.subr.bf16.mxu0 %v5500
    %6600 = vmatpush1.bf16.msra.mxu0 %v5499
    %6601 = vmatprep.subr.bf16.mxu0 %v5493
    %6602 = vmatpush1.bf16.msra.mxu0 %v5492
    %6603 = vmatprep.subr.bf16.mxu0 %v5486
    %6604 = vmatpush1.bf16.msra.mxu0 %v5485
    %6605 = vmatprep.subr.bf16.mxu0 %v5479
    %6606 = vmatpush1.bf16.msra.mxu0 %v5478
    %6607 = vmatprep.subr.bf16.mxu0 %v5472
    %6608 = vmatpush1.bf16.msra.mxu0 %v5471
    %6609 = vmatprep.subr.bf16.mxu0 %v5465
    %6610 = vmatpush1.bf16.msra.mxu0 %v5464
    %6611 = vmatprep.subr.bf16.mxu0 %v5458
    %6612 = vmatpush1.bf16.msra.mxu0 %v5457
    %6613 = vmatprep.subr.bf16.mxu0 %v5451
    %6614 = vmatpush1.bf16.msra.mxu0 %v5450
    %6615 = vmatprep.subr.bf16.mxu0 %v5556
    %6616 = vmatpush2.bf16.msra.mxu0 %v5555
    %6617 = vmatprep.subr.bf16.mxu0 %v5549
    %6618 = vmatpush2.bf16.msra.mxu0 %v5548
    %6619 = vmatprep.subr.bf16.mxu0 %v5542
    %6620 = vmatpush2.bf16.msra.mxu0 %v5541
    %6621 = vmatprep.subr.bf16.mxu0 %v5535
    %6622 = vmatpush2.bf16.msra.mxu0 %v5534
    %6623 = vmatprep.subr.bf16.mxu0 %v5528
    %6624 = vmatpush2.bf16.msra.mxu0 %v5527
    %6625 = vmatprep.subr.bf16.mxu0 %v5521
    %6626 = vmatpush2.bf16.msra.mxu0 %v5520
    %6627 = vmatprep.subr.bf16.mxu0 %v5514
    %6628 = vmatpush2.bf16.msra.mxu0 %v5513
    %6629 = vmatprep.subr.bf16.mxu0 %v5507
    %6630 = vmatpush2.bf16.msra.mxu0 %v5506
    %6631 = vmatprep.mubr.bf16.mxu0 %v3372
    %6632 = vmatmul.mubr.bf16.gmra.mxu0 %v3371
    %v6633 = vpop.f32.mrf.mxu0
    %v6634 = vadd.f32 %v6593, %v6633
    %v6635 = vpop.f32.mrf.mxu0
    %v6636 = vadd.f32 %v6595, %v6635
    %v6637 = vpop.f32.mrf.mxu0
    %v6638 = vpop.f32.mrf.mxu0
    %6639 = vdwg.mxu0
    %6640 = vmatprep.subr.bf16.mxu0 %v5612
    %6641 = vmatpush1.bf16.msra.mxu0 %v5611
    %6642 = vmatprep.subr.bf16.mxu0 %v5605
    %6643 = vmatpush1.bf16.msra.mxu0 %v5604
    %6644 = vmatprep.subr.bf16.mxu0 %v5598
    %6645 = vmatpush1.bf16.msra.mxu0 %v5597
    %6646 = vmatprep.subr.bf16.mxu0 %v5591
    %6647 = vmatpush1.bf16.msra.mxu0 %v5590
    %6648 = vmatprep.subr.bf16.mxu0 %v5584
    %6649 = vmatpush1.bf16.msra.mxu0 %v5583
    %6650 = vmatprep.subr.bf16.mxu0 %v5577
    %6651 = vmatpush1.bf16.msra.mxu0 %v5576
    %6652 = vmatprep.subr.bf16.mxu0 %v5570
    %6653 = vmatpush1.bf16.msra.mxu0 %v5569
    %6654 = vmatprep.subr.bf16.mxu0 %v5563
    %6655 = vmatpush1.bf16.msra.mxu0 %v5562
    %6656 = vmatprep.subr.bf16.mxu0 %v5668
    %6657 = vmatpush2.bf16.msra.mxu0 %v5667
    %6658 = vmatprep.subr.bf16.mxu0 %v5661
    %6659 = vmatpush2.bf16.msra.mxu0 %v5660
    %6660 = vmatprep.subr.bf16.mxu0 %v5654
    %6661 = vmatpush2.bf16.msra.mxu0 %v5653
    %6662 = vmatprep.subr.bf16.mxu0 %v5647
    %6663 = vmatpush2.bf16.msra.mxu0 %v5646
    %6664 = vmatprep.subr.bf16.mxu0 %v5640
    %6665 = vmatpush2.bf16.msra.mxu0 %v5639
    %6666 = vmatprep.subr.bf16.mxu0 %v5633
    %6667 = vmatpush2.bf16.msra.mxu0 %v5632
    %6668 = vmatprep.subr.bf16.mxu0 %v5626
    %6669 = vmatpush2.bf16.msra.mxu0 %v5625
    %6670 = vmatprep.subr.bf16.mxu0 %v5619
    %6671 = vmatpush2.bf16.msra.mxu0 %v5618
    %6672 = vmatprep.mubr.bf16.mxu0 %v3374
    %6673 = vmatmul.mubr.bf16.gmra.mxu0 %v3373
    %v6674 = vpop.f32.mrf.mxu0
    %v6675 = vadd.f32 %v6634, %v6674
    %v6676 = vpop.f32.mrf.mxu0
    %v6677 = vadd.f32 %v6636, %v6676
    %v6678 = vpop.f32.mrf.mxu0
    %v6679 = vpop.f32.mrf.mxu0
    %6680 = vdwg.mxu0
    %6681 = vmatprep.subr.bf16.mxu0 %v5724
    %6682 = vmatpush1.bf16.msra.mxu0 %v5723
    %6683 = vmatprep.subr.bf16.mxu0 %v5717
    %6684 = vmatpush1.bf16.msra.mxu0 %v5716
    %6685 = vmatprep.subr.bf16.mxu0 %v5710
    %6686 = vmatpush1.bf16.msra.mxu0 %v5709
    %6687 = vmatprep.subr.bf16.mxu0 %v5703
    %6688 = vmatpush1.bf16.msra.mxu0 %v5702
    %6689 = vmatprep.subr.bf16.mxu0 %v5696
    %6690 = vmatpush1.bf16.msra.mxu0 %v5695
    %6691 = vmatprep.subr.bf16.mxu0 %v5689
    %6692 = vmatpush1.bf16.msra.mxu0 %v5688
    %6693 = vmatprep.subr.bf16.mxu0 %v5682
    %6694 = vmatpush1.bf16.msra.mxu0 %v5681
    %6695 = vmatprep.subr.bf16.mxu0 %v5675
    %6696 = vmatpush1.bf16.msra.mxu0 %v5674
    %6697 = vmatprep.subr.bf16.mxu0 %v5780
    %6698 = vmatpush2.bf16.msra.mxu0 %v5779
    %6699 = vmatprep.subr.bf16.mxu0 %v5773
    %6700 = vmatpush2.bf16.msra.mxu0 %v5772
    %6701 = vmatprep.subr.bf16.mxu0 %v5766
    %6702 = vmatpush2.bf16.msra.mxu0 %v5765
    %6703 = vmatprep.subr.bf16.mxu0 %v5759
    %6704 = vmatpush2.bf16.msra.mxu0 %v5758
    %6705 = vmatprep.subr.bf16.mxu0 %v5752
    %6706 = vmatpush2.bf16.msra.mxu0 %v5751
    %6707 = vmatprep.subr.bf16.mxu0 %v5745
    %6708 = vmatpush2.bf16.msra.mxu0 %v5744
    %6709 = vmatprep.subr.bf16.mxu0 %v5738
    %6710 = vmatpush2.bf16.msra.mxu0 %v5737
    %6711 = vmatprep.subr.bf16.mxu0 %v5731
    %6712 = vmatpush2.bf16.msra.mxu0 %v5730
    %6713 = vmatprep.mubr.bf16.mxu0 %v3376
    %6714 = vmatmul.mubr.bf16.gmra.mxu0 %v3375
    %v6715 = vpop.f32.mrf.mxu0
    %v6716 = vadd.f32 %v6675, %v6715
    %v6717 = vpop.f32.mrf.mxu0
    %v6718 = vadd.f32 %v6677, %v6717
    %v6719 = vpop.f32.mrf.mxu0
    %v6720 = vpop.f32.mrf.mxu0
    %6721 = vdwg.mxu0
    %6722 = vmatprep.subr.bf16.mxu0 0
    %6723 = vmatpush1.bf16.msra.mxu0 %v5389
    %6724 = vmatprep.subr.bf16.mxu0 0
    %6725 = vmatpush1.bf16.msra.mxu0 %v5382
    %6726 = vmatprep.subr.bf16.mxu0 0
    %6727 = vmatpush1.bf16.msra.mxu0 %v5375
    %6728 = vmatprep.subr.bf16.mxu0 0
    %6729 = vmatpush1.bf16.msra.mxu0 %v5368
    %6730 = vmatprep.subr.bf16.mxu0 0
    %6731 = vmatpush1.bf16.msra.mxu0 %v5361
    %6732 = vmatprep.subr.bf16.mxu0 0
    %6733 = vmatpush1.bf16.msra.mxu0 %v5354
    %6734 = vmatprep.subr.bf16.mxu0 0
    %6735 = vmatpush1.bf16.msra.mxu0 %v5347
    %6736 = vmatprep.subr.bf16.mxu0 0
    %6737 = vmatpush1.bf16.msra.mxu0 %v5340
    %6738 = vmatprep.subr.bf16.mxu0 0
    %6739 = vmatpush2.bf16.msra.mxu0 %v5445
    %6740 = vmatprep.subr.bf16.mxu0 0
    %6741 = vmatpush2.bf16.msra.mxu0 %v5438
    %6742 = vmatprep.subr.bf16.mxu0 0
    %6743 = vmatpush2.bf16.msra.mxu0 %v5431
    %6744 = vmatprep.subr.bf16.mxu0 0
    %6745 = vmatpush2.bf16.msra.mxu0 %v5424
    %6746 = vmatprep.subr.bf16.mxu0 0
    %6747 = vmatpush2.bf16.msra.mxu0 %v5417
    %6748 = vmatprep.subr.bf16.mxu0 0
    %6749 = vmatpush2.bf16.msra.mxu0 %v5410
    %6750 = vmatprep.subr.bf16.mxu0 0
    %6751 = vmatpush2.bf16.msra.mxu0 %v5403
    %6752 = vmatprep.subr.bf16.mxu0 0
    %6753 = vmatpush2.bf16.msra.mxu0 %v5396
    %6754 = vmatprep.mubr.bf16.mxu0 %v3370
    %6755 = vmatmul.mubr.bf16.gmra.mxu0 %v3369
    %v6756 = vpop.f32.mrf.mxu0
    %v6757 = vadd.f32 %v3918, %v6756
    %v6758 = vpop.f32.mrf.mxu0
    %v6759 = vpop.f32.mrf.mxu0
    %v6760 = vpop.f32.mrf.mxu0
    %6761 = vdwg.mxu0
    %6762 = vmatprep.subr.bf16.mxu0 0
    %6763 = vmatpush1.bf16.msra.mxu0 %v5501
    %6764 = vmatprep.subr.bf16.mxu0 0
    %6765 = vmatpush1.bf16.msra.mxu0 %v5494
    %6766 = vmatprep.subr.bf16.mxu0 0
    %6767 = vmatpush1.bf16.msra.mxu0 %v5487
    %6768 = vmatprep.subr.bf16.mxu0 0
    %6769 = vmatpush1.bf16.msra.mxu0 %v5480
    %6770 = vmatprep.subr.bf16.mxu0 0
    %6771 = vmatpush1.bf16.msra.mxu0 %v5473
    %6772 = vmatprep.subr.bf16.mxu0 0
    %6773 = vmatpush1.bf16.msra.mxu0 %v5466
    %6774 = vmatprep.subr.bf16.mxu0 0
    %6775 = vmatpush1.bf16.msra.mxu0 %v5459
    %6776 = vmatprep.subr.bf16.mxu0 0
    %6777 = vmatpush1.bf16.msra.mxu0 %v5452
    %6778 = vmatprep.subr.bf16.mxu0 0
    %6779 = vmatpush2.bf16.msra.mxu0 %v5557
    %6780 = vmatprep.subr.bf16.mxu0 0
    %6781 = vmatpush2.bf16.msra.mxu0 %v5550
    %6782 = vmatprep.subr.bf16.mxu0 0
    %6783 = vmatpush2.bf16.msra.mxu0 %v5543
    %6784 = vmatprep.subr.bf16.mxu0 0
    %6785 = vmatpush2.bf16.msra.mxu0 %v5536
    %6786 = vmatprep.subr.bf16.mxu0 0
    %6787 = vmatpush2.bf16.msra.mxu0 %v5529
    %6788 = vmatprep.subr.bf16.mxu0 0
    %6789 = vmatpush2.bf16.msra.mxu0 %v5522
    %6790 = vmatprep.subr.bf16.mxu0 0
    %6791 = vmatpush2.bf16.msra.mxu0 %v5515
    %6792 = vmatprep.subr.bf16.mxu0 0
    %6793 = vmatpush2.bf16.msra.mxu0 %v5508
    %6794 = vmatprep.mubr.bf16.mxu0 %v3372
    %6795 = vmatmul.mubr.bf16.gmra.mxu0 %v3371
    %v6796 = vpop.f32.mrf.mxu0
    %v6797 = vadd.f32 %v6757, %v6796
    %v6798 = vpop.f32.mrf.mxu0
    %v6799 = vpop.f32.mrf.mxu0
    %v6800 = vpop.f32.mrf.mxu0
    %6801 = vdwg.mxu0
    %6802 = vmatprep.subr.bf16.mxu0 0
    %6803 = vmatpush1.bf16.msra.mxu0 %v5613
    %6804 = vmatprep.subr.bf16.mxu0 0
    %6805 = vmatpush1.bf16.msra.mxu0 %v5606
    %6806 = vmatprep.subr.bf16.mxu0 0
    %6807 = vmatpush1.bf16.msra.mxu0 %v5599
    %6808 = vmatprep.subr.bf16.mxu0 0
    %6809 = vmatpush1.bf16.msra.mxu0 %v5592
    %6810 = vmatprep.subr.bf16.mxu0 0
    %6811 = vmatpush1.bf16.msra.mxu0 %v5585
    %6812 = vmatprep.subr.bf16.mxu0 0
    %6813 = vmatpush1.bf16.msra.mxu0 %v5578
    %6814 = vmatprep.subr.bf16.mxu0 0
    %6815 = vmatpush1.bf16.msra.mxu0 %v5571
    %6816 = vmatprep.subr.bf16.mxu0 0
    %6817 = vmatpush1.bf16.msra.mxu0 %v5564
    %6818 = vmatprep.subr.bf16.mxu0 0
    %6819 = vmatpush2.bf16.msra.mxu0 %v5669
    %6820 = vmatprep.subr.bf16.mxu0 0
    %6821 = vmatpush2.bf16.msra.mxu0 %v5662
    %6822 = vmatprep.subr.bf16.mxu0 0
    %6823 = vmatpush2.bf16.msra.mxu0 %v5655
    %6824 = vmatprep.subr.bf16.mxu0 0
    %6825 = vmatpush2.bf16.msra.mxu0 %v5648
    %6826 = vmatprep.subr.bf16.mxu0 0
    %6827 = vmatpush2.bf16.msra.mxu0 %v5641
    %6828 = vmatprep.subr.bf16.mxu0 0
    %6829 = vmatpush2.bf16.msra.mxu0 %v5634
    %6830 = vmatprep.subr.bf16.mxu0 0
    %6831 = vmatpush2.bf16.msra.mxu0 %v5627
    %6832 = vmatprep.subr.bf16.mxu0 0
    %6833 = vmatpush2.bf16.msra.mxu0 %v5620
    %6834 = vmatprep.mubr.bf16.mxu0 %v3374
    %6835 = vmatmul.mubr.bf16.gmra.mxu0 %v3373
    %v6836 = vpop.f32.mrf.mxu0
    %v6837 = vadd.f32 %v6797, %v6836
    %v6838 = vpop.f32.mrf.mxu0
    %v6839 = vpop.f32.mrf.mxu0
    %v6840 = vpop.f32.mrf.mxu0
    %6841 = vdwg.mxu0
    %6842 = vmatprep.subr.bf16.mxu0 0
    %6843 = vmatpush1.bf16.msra.mxu0 %v5725
    %6844 = vmatprep.subr.bf16.mxu0 0
    %6845 = vmatpush1.bf16.msra.mxu0 %v5718
    %6846 = vmatprep.subr.bf16.mxu0 0
    %6847 = vmatpush1.bf16.msra.mxu0 %v5711
    %6848 = vmatprep.subr.bf16.mxu0 0
    %6849 = vmatpush1.bf16.msra.mxu0 %v5704
    %6850 = vmatprep.subr.bf16.mxu0 0
    %6851 = vmatpush1.bf16.msra.mxu0 %v5697
    %6852 = vmatprep.subr.bf16.mxu0 0
    %6853 = vmatpush1.bf16.msra.mxu0 %v5690
    %6854 = vmatprep.subr.bf16.mxu0 0
    %6855 = vmatpush1.bf16.msra.mxu0 %v5683
    %6856 = vmatprep.subr.bf16.mxu0 0
    %6857 = vmatpush1.bf16.msra.mxu0 %v5676
    %6858 = vmatprep.subr.bf16.mxu0 0
    %6859 = vmatpush2.bf16.msra.mxu0 %v5781
    %6860 = vmatprep.subr.bf16.mxu0 0
    %6861 = vmatpush2.bf16.msra.mxu0 %v5774
    %6862 = vmatprep.subr.bf16.mxu0 0
    %6863 = vmatpush2.bf16.msra.mxu0 %v5767
    %6864 = vmatprep.subr.bf16.mxu0 0
    %6865 = vmatpush2.bf16.msra.mxu0 %v5760
    %6866 = vmatprep.subr.bf16.mxu0 0
    %6867 = vmatpush2.bf16.msra.mxu0 %v5753
    %6868 = vmatprep.subr.bf16.mxu0 0
    %6869 = vmatpush2.bf16.msra.mxu0 %v5746
    %6870 = vmatprep.subr.bf16.mxu0 0
    %6871 = vmatpush2.bf16.msra.mxu0 %v5739
    %6872 = vmatprep.subr.bf16.mxu0 0
    %6873 = vmatpush2.bf16.msra.mxu0 %v5732
    %6874 = vmatprep.mubr.bf16.mxu0 %v3376
    %6875 = vmatmul.mubr.bf16.gmra.mxu0 %v3375
    %v6876 = vpop.f32.mrf.mxu0
    %v6877 = vadd.f32 %v6837, %v6876
    %v6878 = vpop.f32.mrf.mxu0
    %v6879 = vpop.f32.mrf.mxu0
    %v6880 = vpop.f32.mrf.mxu0
    %6881 = vdwg.mxu0
    %v6882 = vtanh.pop %v6388
    %v6883 = vtanh.pop %v6390
    %v6884 = vtanh.pop %v6552
    %v6885 = vtanh.pop %v6554
    %v6886 = vtanh.pop %v6716
    %v6887 = vtanh.pop %v6718
    %v6888 = vtanh.pop %v6877
    %6889 = vst [vmem:[#allocation22] sm:$0xff] %v6882
    %6890 = vst [vmem:[#allocation22 + $0x8] sm:$0xff] %v6883
    %6891 = vst [vmem:[#allocation22 + $0x10] sm:$0xff] %v6884
    %6892 = vst [vmem:[#allocation22 + $0x18] sm:$0xff] %v6885
    %6893 = vst [vmem:[#allocation22 + $0x20] sm:$0xff] %v6886
    %6894 = vst [vmem:[#allocation22 + $0x28] sm:$0xff] %v6887
    %6895 = vst [vmem:[#allocation22 + $0x30] sm:$0xff] %v6888
    // Predicated region
    $region98: #{tpu_custom_call.1} parent=1 // pred_check
      _
    $region99: #{tpu_custom_call.1} parent=1 // pred_check_branch
      %6897 = sbr.rel (0) target = $region101
    $region100: #{tpu_custom_call.1} parent=1 // pred_region
      %s6899 = ssub.s32 896, 896
      %6900 = vsyncadd [#allocation4], %s6899
      %s6902 = sshll.u32 [#allocation22], 4
      %s6903 = int_to_ptr.vmem [resolvable:$true] %s6902
      %6905 = dma.vmem_to_hbm [thread:$0]  %s6903, 896, %s12, [#allocation4]
    $region101: #{tpu_custom_call.1} parent=1 // pred_fallthru
      _
    // Predicated region
    $region102: #{tpu_custom_call.1} parent=1 // pred_check
      _
    $region103: #{tpu_custom_call.1} parent=1 // pred_check_branch
      %6907 = sbr.rel (0) target = $region105
    $region104: #{tpu_custom_call.1} parent=1 // pred_region
      %6908 = dma.done [#allocation4], 896
    $region105: #{tpu_custom_call.1} parent=1 // pred_fallthru
      _
    %6909 = vsyncpa [#allocation3], 1
    %6910 = vsyncpa [#allocation6], 1
    %6911 = vsyncpa [#allocation9], 1
    %6912 = vsyncpa [#allocation12], 1
    %6913 = vsyncpa [#allocation15], 1
    %6914 = vsyncpa [#allocation18], 1
    %6915 = vsyncpa [#allocation21], 1
    %6916 = vsyncpa [#allocation4], 1

</llo_original>
